<compile_context>
chip_gen: v5e
topology: v5e:2x2
jax: 0.10.0
libtpu: 0.0.40
codegen_flags: <defaults>
</compile_context>

<pallas_src>
import functools
import math

import jax
import jax.numpy as jnp
import numpy as np
from jax import lax
from jax.experimental import pallas as pl
from jax.experimental.pallas import tpu as pltpu


def _is_pow2(v):
    return v > 0 and (v & (v - 1)) == 0


def _basic_block_3d_kernel(x_ref, w1_ref, b1_ref, w2_ref, b2_ref, out_ref,
                           y_ref, patch_ref, *, D, H, W, Cpad):
    """One grid step = one batch element n.

    x_ref     : (1, Cpad, D*H*W)    channel-padded input, depth flattened to lanes
    w1_ref    : (Cpad, 27*Cpad)     BN-folded conv1 weights, cols = (kd, kh, kw, ci)
    b1_ref    : (Cpad, 1)           BN-folded conv1 bias (f32)
    w2_ref    : (Cpad, 27*Cpad)     BN-folded conv2 weights
    b2_ref    : (Cpad, 1)           BN-folded conv2 bias (f32)
    out_ref   : (1, Cpad, D*H*W)    lane- and sublane-dense output slab
    y_ref     : (Cpad, D*H*W)       conv1 activation scratch
    patch_ref : (27*Cpad, D*H*W)    shared im2col patch scratch
    """
    HW = H * W
    DHW = D * HW

    # Position indices / boundary masks (computed once per batch element;
    # grid=(N,) so this is not in any hot per-depth loop anymore).
    pcol = lax.broadcasted_iota(jnp.int32, (Cpad, DHW), 1)
    if _is_pow2(W) and _is_pow2(H):
        lw = int(math.log2(W))
        lh = int(math.log2(H))
        dpos = pcol >> (lw + lh)
        hpos = (pcol >> lw) & (H - 1)
        wpos = pcol & (W - 1)
    else:
        # TODO(synk): vector int div/mod fallback for non-power-of-two H/W.
        dpos = pcol // HW
        hpos = (pcol % HW) // W
        wpos = pcol % W

    # Only the 6 non-trivial masks; the k==1 taps are always valid.
    dmask = {0: dpos >= 1, 2: dpos < (D - 1)}
    hmask = {0: hpos >= 1, 2: hpos < (H - 1)}
    wmask = {0: wpos >= 1, 2: wpos < (W - 1)}

    def fill_patch(src):
        """im2col of all 27 taps of `src` (Cpad, D*H*W) into patch_ref.

        Each tap is ONE lane roll by the combined (depth, height, width) offset,
        masked with the product of at most three boundary masks.
        """
        for kd in range(3):
            for kh in range(3):
                for kw in range(3):
                    off = (kd - 1) * HW + (kh - 1) * W + (kw - 1)
                    tap = src if off == 0 else jnp.roll(src, shift=-off, axis=-1)
                    m = None
                    for k, table in ((kd, dmask), (kh, hmask), (kw, wmask)):
                        if k != 1:
                            m = table[k] if m is None else jnp.logical_and(m, table[k])
                    if m is not None:
                        tap = jnp.where(m, tap, 0)
                    row = (kd * 9 + kh * 3 + kw) * Cpad   # full-sublane store
                    patch_ref[pl.ds(row, Cpad), :] = tap

    # Single cast of the input for all 27 conv1 taps (review: avoid per-tap casts).
    x_c = x_ref[0].astype(patch_ref.dtype)

    # ---- conv1 (+folded BN) + ReLU ------------------------------------------
    fill_patch(x_c)
    y = jnp.dot(w1_ref[...], patch_ref[...], preferred_element_type=jnp.float32)
    y = jnp.maximum(y + b1_ref[...], 0.0)
    y_ref[...] = y.astype(y_ref.dtype)

    # ---- conv2 (+folded BN) + residual + ReLU --------------------------------
    fill_patch(y_ref[...])
    out = jnp.dot(w2_ref[...], patch_ref[...], preferred_element_type=jnp.float32)
    out = out + b2_ref[...]
    out = jnp.maximum(out + x_ref[0].astype(jnp.float32), 0.0)
    out_ref[...] = out.reshape(1, Cpad, DHW).astype(out_ref.dtype)


def fold_bn_matrix(w_oidhw, gamma, beta, mean, var, eps=1e-5):
    """Fold eval-mode BatchNorm3d into the conv.

    w_oidhw: (Cout, Cin, 3, 3, 3) PyTorch layout.
    Returns (Cout, 27*Cin) matmul weights with columns ordered (kd, kh, kw, ci),
    plus the folded bias (Cout,).
    """
    cout, cin = w_oidhw.shape[0], w_oidhw.shape[1]
    scale = gamma / jnp.sqrt(var + eps)                       # (Cout,)
    w = w_oidhw * scale[:, None, None, None, None]
    w_mat = jnp.transpose(w, (0, 2, 3, 4, 1)).reshape(cout, 27 * cin)
    bias = beta - mean * scale
    return w_mat, bias


def _pad_channels(w_mat, bias, C, Cpad):
    """Zero-pad a (C, 27*C) folded weight / (C,) bias to (Cpad, 27*Cpad)/(Cpad,)."""
    if Cpad == C:
        return w_mat, bias
    w3 = w_mat.reshape(C, 27, C)
    w3 = jnp.pad(w3, ((0, Cpad - C), (0, 0), (0, Cpad - C)))
    return w3.reshape(Cpad, 27 * Cpad), jnp.pad(bias, (0, Cpad - C))


def basic_block_3d_forward(x_ncdhw, att, params, *, compute_dtype=jnp.float32):
    """BasicBlock_3D.forward for stride=1, downsample=None.  Input/Output NCDHW.

    compute_dtype: MXU operand / patch dtype.  Keep float32 on v5e (no bf16 VPU);
    bf16 is only worthwhile on v6e/v7x and compounds error through the conv1
    activation (use the loose tolerance path).
    """
    N, C, D, H, W = x_ncdhw.shape
    HW = H * W
    DHW = D * HW
    Cpad = int(-(-C // 8) * 8)                  # sublane-align channels

    w1_mat, b1 = fold_bn_matrix(params["w1"], *params["bn1"])
    w2_mat, b2 = fold_bn_matrix(params["w2"], *params["bn2"])
    assert w1_mat.shape == (C, 27 * C) and w2_mat.shape == (C, 27 * C), \
        "stride=1 / downsample=None requires inplanes == planes"
    w1_mat, b1 = _pad_channels(w1_mat, b1, C, Cpad)
    w2_mat, b2 = _pad_channels(w2_mat, b2, C, Cpad)

    # NCDHW -> (N, Cpad, D*H*W): pure reshape plus (only if C % 8 != 0) a small
    # zero channel pad.  No NCDHW<->NDCHW transpose round-trip through HBM.
    x_flat = x_ncdhw.reshape(N, C, DHW)
    if Cpad != C:
        x_flat = jnp.pad(x_flat, ((0, 0), (0, Cpad - C), (0, 0)))

    kernel = functools.partial(_basic_block_3d_kernel, D=D, H=H, W=W, Cpad=Cpad)

    ibytes = x_flat.dtype.itemsize
    obytes = jnp.dtype(x_ncdhw.dtype).itemsize
    cbytes = jnp.dtype(compute_dtype).itemsize
    vmem_needed = (2 * Cpad * DHW * ibytes                        # input block (double-buffered)
                   + 2 * Cpad * DHW * obytes                      # output block (double-buffered)
                   + 2 * 2 * (27 * Cpad * Cpad + Cpad) * cbytes   # weights + bias blocks
                   + Cpad * DHW * cbytes                          # conv1 activation scratch
                   + 27 * Cpad * DHW * cbytes)                    # im2col patch scratch
    # Cap at 56 MiB so the same kernel stays inside v7x's 64 MiB VMEM.
    vmem_limit = int(min(max(2 * vmem_needed, 16 << 20), 56 << 20))
    vmem_limit = int(max(vmem_limit, vmem_needed + (2 << 20)))

    flops = 2 * 2 * Cpad * (27 * Cpad) * DHW * N                  # two convs
    bytes_accessed = (x_flat.size * ibytes + N * Cpad * DHW * obytes
                      + 2 * (27 * Cpad * Cpad + Cpad) * cbytes)

    out_flat = pl.pallas_call(
        kernel,
        out_shape=jax.ShapeDtypeStruct((N, Cpad, DHW), x_ncdhw.dtype),
        grid=(N,),
        in_specs=[
            pl.BlockSpec((1, Cpad, DHW), lambda n: (n, 0, 0)),
            pl.BlockSpec((Cpad, 27 * Cpad), lambda n: (0, 0)),
            pl.BlockSpec((Cpad, 1), lambda n: (0, 0)),
            pl.BlockSpec((Cpad, 27 * Cpad), lambda n: (0, 0)),
            pl.BlockSpec((Cpad, 1), lambda n: (0, 0)),
        ],
        out_specs=pl.BlockSpec((1, Cpad, DHW), lambda n: (n, 0, 0)),
        scratch_shapes=[
            pltpu.VMEM((Cpad, DHW), compute_dtype),        # conv1 activation
            pltpu.VMEM((27 * Cpad, DHW), compute_dtype),   # shared im2col patch
        ],
        compiler_params=pltpu.CompilerParams(
            # Batch elements are independent -> megacore-parallel.  With N == 1
            # on v7x, split the DHW axis instead (see TODO at top of file).
            dimension_semantics=("parallel",),
            vmem_limit_bytes=vmem_limit,
        ),
        cost_estimate=pl.CostEstimate(flops=int(flops), transcendentals=0,
                                      bytes_accessed=int(bytes_accessed)),
    )(
        x_flat,
        w1_mat.astype(compute_dtype),
        b1.reshape(Cpad, 1).astype(jnp.float32),
        w2_mat.astype(compute_dtype),
        b2.reshape(Cpad, 1).astype(jnp.float32),
    )

    out = out_flat[:, :C, :].reshape(N, C, D, H, W)
    return out, att


def reference_forward(x, params, eps=1e-5):
    """Plain-JAX reference (lax.conv) for correctness checking, NCDHW."""
    def conv(y, w):
        return lax.conv_general_dilated(
            y, w, window_strides=(1, 1, 1),
            padding=((1, 1), (1, 1), (1, 1)),
            dimension_numbers=("NCDHW", "OIDHW", "NCDHW"))

    def bn(y, bn_params):
        gamma, beta, mean, var = bn_params
        s = gamma / jnp.sqrt(var + eps)
        return y * s[None, :, None, None, None] + (beta - mean * s)[None, :, None, None, None]

    out = jax.nn.relu(bn(conv(x, params["w1"]), params["bn1"]))
    out = bn(conv(out, params["w2"]), params["bn2"])
    return jax.nn.relu(out + x)


if __name__ == "__main__":
    key = jax.random.PRNGKey(0)
    k_x, k_att, k_w1, k_w2 = jax.random.split(key, 4)

    N, C, D, H, W = 2, 4, 4, 16, 16   # inplanes = planes = 4, stride = 1
    inplanes = planes = C

    x = jax.random.normal(k_x, (N, C, D, H, W), dtype=jnp.float32)   # NCDHW (PyTorch)
    att = jax.random.normal(k_att, (N, C), dtype=jnp.float32)

    # Deterministic conv weights (kaiming-ish scale), PyTorch (Cout, Cin, 3, 3, 3).
    w1 = jax.random.normal(k_w1, (planes, inplanes, 3, 3, 3), jnp.float32) / np.sqrt(inplanes * 27)
    w2 = jax.random.normal(k_w2, (planes, planes, 3, 3, 3), jnp.float32) / np.sqrt(planes * 27)

    # Eval-mode BN params: (gamma, beta, running_mean, running_var)
    bn_init = (jnp.ones((planes,), jnp.float32), jnp.zeros((planes,), jnp.float32),
               jnp.zeros((planes,), jnp.float32), jnp.ones((planes,), jnp.float32))
    params = {"w1": w1, "w2": w2, "bn1": bn_init, "bn2": bn_init}

    ref = jax.block_until_ready(reference_forward(x, params))

    # f32 MXU-operand path: tight correctness check.
    fwd_f32 = jax.jit(functools.partial(basic_block_3d_forward, compute_dtype=jnp.float32))
    out, att_out = fwd_f32(x, att, params)
    out = jax.block_until_ready(out)
    np.testing.assert_allclose(np.asarray(out), np.asarray(ref), rtol=1e-4, atol=1e-4)
    assert att_out.shape == att.shape

    # bf16 MXU-operand path (v6e/v7x fast path); f32 accumulation.  Tolerance is
    # precision-limited (bf16 operands + bf16 conv1 activation), not a bug.
    fwd_bf16 = jax.jit(functools.partial(basic_block_3d_forward, compute_dtype=jnp.bfloat16))
    out_bf16, _ = fwd_bf16(x, att, params)
    out_bf16 = jax.block_until_ready(out_bf16)
    np.testing.assert_allclose(np.asarray(out_bf16), np.asarray(ref), rtol=1e-1, atol=1e-1)

    print("KERNEL_OK")
</pallas_src>

<mosaic_0001>
module attributes {stable_mosaic.version = 11 : i64} {
  func.func @_basic_block_3d_kernel(%arg0: i32, %arg1: memref<1x8x1024xf32, #tpu.memory_space<vmem>>, %arg2: memref<8x216xf32, #tpu.memory_space<vmem>>, %arg3: memref<8x1xf32, #tpu.memory_space<vmem>>, %arg4: memref<8x216xf32, #tpu.memory_space<vmem>>, %arg5: memref<8x1xf32, #tpu.memory_space<vmem>>, %arg6: memref<1x8x1024xf32, #tpu.memory_space<vmem>>, %arg7: memref<8x1024xf32, #tpu.memory_space<vmem>>, %arg8: memref<216x1024xf32, #tpu.memory_space<vmem>>) attributes {dimension_semantics = [#tpu.dimension_semantics<parallel>], iteration_bounds = array<i64: 2>, scalar_prefetch = 0 : i64, scratch_operands = 2 : i64, tpu.core_type = #tpu.core_type<tc>, window_params = [{transform_indices = @transform_0, window_bounds = array<i64: 1, 8, 1024>}, {pipeline_mode = #tpu.pipeline_mode<synchronous>, transform_indices = @transform_1, window_bounds = array<i64: 8, 216>}, {pipeline_mode = #tpu.pipeline_mode<synchronous>, transform_indices = @transform_2, window_bounds = array<i64: 8, 1>}, {pipeline_mode = #tpu.pipeline_mode<synchronous>, transform_indices = @transform_3, window_bounds = array<i64: 8, 216>}, {pipeline_mode = #tpu.pipeline_mode<synchronous>, transform_indices = @transform_4, window_bounds = array<i64: 8, 1>}, {transform_indices = @transform_5, window_bounds = array<i64: 1, 8, 1024>}]} {
    %0 = tpu.iota {dimensions = array<i32: 1>} : vector<8x1024xi32>
    %c8_i32 = arith.constant 8 : i32
    %1 = vector.broadcast %c8_i32 : i32 to vector<8x1024xi32>
    %2 = arith.shrsi %0, %1 : vector<8x1024xi32>
    %c4_i32 = arith.constant 4 : i32
    %3 = vector.broadcast %c4_i32 : i32 to vector<8x1024xi32>
    %4 = arith.shrsi %0, %3 : vector<8x1024xi32>
    %c15_i32 = arith.constant 15 : i32
    %5 = vector.broadcast %c15_i32 : i32 to vector<8x1024xi32>
    %6 = arith.andi %4, %5 : vector<8x1024xi32>
    %c15_i32_0 = arith.constant 15 : i32
    %7 = vector.broadcast %c15_i32_0 : i32 to vector<8x1024xi32>
    %8 = arith.andi %0, %7 : vector<8x1024xi32>
    %c1_i32 = arith.constant 1 : i32
    %9 = vector.broadcast %c1_i32 : i32 to vector<8x1024xi32>
    %10 = arith.cmpi sge, %2, %9 : vector<8x1024xi32>
    %c3_i32 = arith.constant 3 : i32
    %11 = vector.broadcast %c3_i32 : i32 to vector<8x1024xi32>
    %12 = arith.cmpi slt, %2, %11 : vector<8x1024xi32>
    %c1_i32_1 = arith.constant 1 : i32
    %13 = vector.broadcast %c1_i32_1 : i32 to vector<8x1024xi32>
    %14 = arith.cmpi sge, %6, %13 : vector<8x1024xi32>
    %c15_i32_2 = arith.constant 15 : i32
    %15 = vector.broadcast %c15_i32_2 : i32 to vector<8x1024xi32>
    %16 = arith.cmpi slt, %6, %15 : vector<8x1024xi32>
    %c1_i32_3 = arith.constant 1 : i32
    %17 = vector.broadcast %c1_i32_3 : i32 to vector<8x1024xi32>
    %18 = arith.cmpi sge, %8, %17 : vector<8x1024xi32>
    %c15_i32_4 = arith.constant 15 : i32
    %19 = vector.broadcast %c15_i32_4 : i32 to vector<8x1024xi32>
    %20 = arith.cmpi slt, %8, %19 : vector<8x1024xi32>
    %c0 = arith.constant 0 : index
    %c0_5 = arith.constant 0 : index
    %c0_6 = arith.constant 0 : index
    %21 = vector.load %arg1[%c0, %c0_5, %c0_6] : memref<1x8x1024xf32, #tpu.memory_space<vmem>>, vector<1x8x1024xf32>
    %22 = vector.shape_cast %21 : vector<1x8x1024xf32> to vector<8x1024xf32>
    %23 = vector.extract_strided_slice %22 {offsets = [0, 751], sizes = [8, 273], strides = [1, 1]} : vector<8x1024xf32> to vector<8x273xf32>
    %24 = vector.extract_strided_slice %22 {offsets = [0, 0], sizes = [8, 751], strides = [1, 1]} : vector<8x1024xf32> to vector<8x751xf32>
    %25 = tpu.concatenate %23, %24 in 1 : vector<8x273xf32>, vector<8x751xf32> -> vector<8x1024xf32>
    %26 = arith.andi %10, %14 : vector<8x1024xi1>
    %27 = arith.andi %26, %18 : vector<8x1024xi1>
    %c0_i32 = arith.constant 0 : i32
    %28 = arith.sitofp %c0_i32 : i32 to f32
    %29 = vector.broadcast %28 : f32 to vector<8x1024xf32>
    %30 = arith.select %27, %25, %29 : vector<8x1024xi1>, vector<8x1024xf32>
    %c0_7 = arith.constant 0 : index
    %c0_8 = arith.constant 0 : index
    %31 = vector.load %arg8[%c0_7, %c0_8] : memref<216x1024xf32, #tpu.memory_space<vmem>>, vector<8x1024xf32>
    tpu.vector_store %arg8[%c0_7, %c0_8], %30 {strides = array<i32>} : memref<216x1024xf32, #tpu.memory_space<vmem>>, vector<8x1024xf32>,
    %32 = vector.extract_strided_slice %22 {offsets = [0, 752], sizes = [8, 272], strides = [1, 1]} : vector<8x1024xf32> to vector<8x272xf32>
    %33 = vector.extract_strided_slice %22 {offsets = [0, 0], sizes = [8, 752], strides = [1, 1]} : vector<8x1024xf32> to vector<8x752xf32>
    %34 = tpu.concatenate %32, %33 in 1 : vector<8x272xf32>, vector<8x752xf32> -> vector<8x1024xf32>
    %35 = arith.andi %10, %14 : vector<8x1024xi1>
    %c0_i32_9 = arith.constant 0 : i32
    %36 = arith.sitofp %c0_i32_9 : i32 to f32
    %37 = vector.broadcast %36 : f32 to vector<8x1024xf32>
    %38 = arith.select %35, %34, %37 : vector<8x1024xi1>, vector<8x1024xf32>
    %c8 = arith.constant 8 : index
    %c0_10 = arith.constant 0 : index
    %39 = vector.load %arg8[%c8, %c0_10] : memref<216x1024xf32, #tpu.memory_space<vmem>>, vector<8x1024xf32>
    tpu.vector_store %arg8[%c8, %c0_10], %38 {strides = array<i32>} : memref<216x1024xf32, #tpu.memory_space<vmem>>, vector<8x1024xf32>,
    %40 = vector.extract_strided_slice %22 {offsets = [0, 753], sizes = [8, 271], strides = [1, 1]} : vector<8x1024xf32> to vector<8x271xf32>
    %41 = vector.extract_strided_slice %22 {offsets = [0, 0], sizes = [8, 753], strides = [1, 1]} : vector<8x1024xf32> to vector<8x753xf32>
    %42 = tpu.concatenate %40, %41 in 1 : vector<8x271xf32>, vector<8x753xf32> -> vector<8x1024xf32>
    %43 = arith.andi %10, %14 : vector<8x1024xi1>
    %44 = arith.andi %43, %20 : vector<8x1024xi1>
    %c0_i32_11 = arith.constant 0 : i32
    %45 = arith.sitofp %c0_i32_11 : i32 to f32
    %46 = vector.broadcast %45 : f32 to vector<8x1024xf32>
    %47 = arith.select %44, %42, %46 : vector<8x1024xi1>, vector<8x1024xf32>
    %c16 = arith.constant 16 : index
    %c0_12 = arith.constant 0 : index
    %48 = vector.load %arg8[%c16, %c0_12] : memref<216x1024xf32, #tpu.memory_space<vmem>>, vector<8x1024xf32>
    tpu.vector_store %arg8[%c16, %c0_12], %47 {strides = array<i32>} : memref<216x1024xf32, #tpu.memory_space<vmem>>, vector<8x1024xf32>,
    %49 = vector.extract_strided_slice %22 {offsets = [0, 767], sizes = [8, 257], strides = [1, 1]} : vector<8x1024xf32> to vector<8x257xf32>
    %50 = vector.extract_strided_slice %22 {offsets = [0, 0], sizes = [8, 767], strides = [1, 1]} : vector<8x1024xf32> to vector<8x767xf32>
    %51 = tpu.concatenate %49, %50 in 1 : vector<8x257xf32>, vector<8x767xf32> -> vector<8x1024xf32>
    %52 = arith.andi %10, %18 : vector<8x1024xi1>
    %c0_i32_13 = arith.constant 0 : i32
    %53 = arith.sitofp %c0_i32_13 : i32 to f32
    %54 = vector.broadcast %53 : f32 to vector<8x1024xf32>
    %55 = arith.select %52, %51, %54 : vector<8x1024xi1>, vector<8x1024xf32>
    %c24 = arith.constant 24 : index
    %c0_14 = arith.constant 0 : index
    %56 = vector.load %arg8[%c24, %c0_14] : memref<216x1024xf32, #tpu.memory_space<vmem>>, vector<8x1024xf32>
    tpu.vector_store %arg8[%c24, %c0_14], %55 {strides = array<i32>} : memref<216x1024xf32, #tpu.memory_space<vmem>>, vector<8x1024xf32>,
    %57 = vector.extract_strided_slice %22 {offsets = [0, 768], sizes = [8, 256], strides = [1, 1]} : vector<8x1024xf32> to vector<8x256xf32>
    %58 = vector.extract_strided_slice %22 {offsets = [0, 0], sizes = [8, 768], strides = [1, 1]} : vector<8x1024xf32> to vector<8x768xf32>
    %59 = tpu.concatenate %57, %58 in 1 : vector<8x256xf32>, vector<8x768xf32> -> vector<8x1024xf32>
    %c0_i32_15 = arith.constant 0 : i32
    %60 = arith.sitofp %c0_i32_15 : i32 to f32
    %61 = vector.broadcast %60 : f32 to vector<8x1024xf32>
    %62 = arith.select %10, %59, %61 : vector<8x1024xi1>, vector<8x1024xf32>
    %c32 = arith.constant 32 : index
    %c0_16 = arith.constant 0 : index
    %63 = vector.load %arg8[%c32, %c0_16] : memref<216x1024xf32, #tpu.memory_space<vmem>>, vector<8x1024xf32>
    tpu.vector_store %arg8[%c32, %c0_16], %62 {strides = array<i32>} : memref<216x1024xf32, #tpu.memory_space<vmem>>, vector<8x1024xf32>,
    %64 = vector.extract_strided_slice %22 {offsets = [0, 769], sizes = [8, 255], strides = [1, 1]} : vector<8x1024xf32> to vector<8x255xf32>
    %65 = vector.extract_strided_slice %22 {offsets = [0, 0], sizes = [8, 769], strides = [1, 1]} : vector<8x1024xf32> to vector<8x769xf32>
    %66 = tpu.concatenate %64, %65 in 1 : vector<8x255xf32>, vector<8x769xf32> -> vector<8x1024xf32>
    %67 = arith.andi %10, %20 : vector<8x1024xi1>
    %c0_i32_17 = arith.constant 0 : i32
    %68 = arith.sitofp %c0_i32_17 : i32 to f32
    %69 = vector.broadcast %68 : f32 to vector<8x1024xf32>
    %70 = arith.select %67, %66, %69 : vector<8x1024xi1>, vector<8x1024xf32>
    %c40 = arith.constant 40 : index
    %c0_18 = arith.constant 0 : index
    %71 = vector.load %arg8[%c40, %c0_18] : memref<216x1024xf32, #tpu.memory_space<vmem>>, vector<8x1024xf32>
    tpu.vector_store %arg8[%c40, %c0_18], %70 {strides = array<i32>} : memref<216x1024xf32, #tpu.memory_space<vmem>>, vector<8x1024xf32>,
    %72 = vector.extract_strided_slice %22 {offsets = [0, 783], sizes = [8, 241], strides = [1, 1]} : vector<8x1024xf32> to vector<8x241xf32>
    %73 = vector.extract_strided_slice %22 {offsets = [0, 0], sizes = [8, 783], strides = [1, 1]} : vector<8x1024xf32> to vector<8x783xf32>
    %74 = tpu.concatenate %72, %73 in 1 : vector<8x241xf32>, vector<8x783xf32> -> vector<8x1024xf32>
    %75 = arith.andi %10, %16 : vector<8x1024xi1>
    %76 = arith.andi %75, %18 : vector<8x1024xi1>
    %c0_i32_19 = arith.constant 0 : i32
    %77 = arith.sitofp %c0_i32_19 : i32 to f32
    %78 = vector.broadcast %77 : f32 to vector<8x1024xf32>
    %79 = arith.select %76, %74, %78 : vector<8x1024xi1>, vector<8x1024xf32>
    %c48 = arith.constant 48 : index
    %c0_20 = arith.constant 0 : index
    %80 = vector.load %arg8[%c48, %c0_20] : memref<216x1024xf32, #tpu.memory_space<vmem>>, vector<8x1024xf32>
    tpu.vector_store %arg8[%c48, %c0_20], %79 {strides = array<i32>} : memref<216x1024xf32, #tpu.memory_space<vmem>>, vector<8x1024xf32>,
    %81 = vector.extract_strided_slice %22 {offsets = [0, 784], sizes = [8, 240], strides = [1, 1]} : vector<8x1024xf32> to vector<8x240xf32>
    %82 = vector.extract_strided_slice %22 {offsets = [0, 0], sizes = [8, 784], strides = [1, 1]} : vector<8x1024xf32> to vector<8x784xf32>
    %83 = tpu.concatenate %81, %82 in 1 : vector<8x240xf32>, vector<8x784xf32> -> vector<8x1024xf32>
    %84 = arith.andi %10, %16 : vector<8x1024xi1>
    %c0_i32_21 = arith.constant 0 : i32
    %85 = arith.sitofp %c0_i32_21 : i32 to f32
    %86 = vector.broadcast %85 : f32 to vector<8x1024xf32>
    %87 = arith.select %84, %83, %86 : vector<8x1024xi1>, vector<8x1024xf32>
    %c56 = arith.constant 56 : index
    %c0_22 = arith.constant 0 : index
    %88 = vector.load %arg8[%c56, %c0_22] : memref<216x1024xf32, #tpu.memory_space<vmem>>, vector<8x1024xf32>
    tpu.vector_store %arg8[%c56, %c0_22], %87 {strides = array<i32>} : memref<216x1024xf32, #tpu.memory_space<vmem>>, vector<8x1024xf32>,
    %89 = vector.extract_strided_slice %22 {offsets = [0, 785], sizes = [8, 239], strides = [1, 1]} : vector<8x1024xf32> to vector<8x239xf32>
    %90 = vector.extract_strided_slice %22 {offsets = [0, 0], sizes = [8, 785], strides = [1, 1]} : vector<8x1024xf32> to vector<8x785xf32>
    %91 = tpu.concatenate %89, %90 in 1 : vector<8x239xf32>, vector<8x785xf32> -> vector<8x1024xf32>
    %92 = arith.andi %10, %16 : vector<8x1024xi1>
    %93 = arith.andi %92, %20 : vector<8x1024xi1>
    %c0_i32_23 = arith.constant 0 : i32
    %94 = arith.sitofp %c0_i32_23 : i32 to f32
    %95 = vector.broadcast %94 : f32 to vector<8x1024xf32>
    %96 = arith.select %93, %91, %95 : vector<8x1024xi1>, vector<8x1024xf32>
    %c64 = arith.constant 64 : index
    %c0_24 = arith.constant 0 : index
    %97 = vector.load %arg8[%c64, %c0_24] : memref<216x1024xf32, #tpu.memory_space<vmem>>, vector<8x1024xf32>
    tpu.vector_store %arg8[%c64, %c0_24], %96 {strides = array<i32>} : memref<216x1024xf32, #tpu.memory_space<vmem>>, vector<8x1024xf32>,
    %98 = vector.extract_strided_slice %22 {offsets = [0, 1007], sizes = [8, 17], strides = [1, 1]} : vector<8x1024xf32> to vector<8x17xf32>
    %99 = vector.extract_strided_slice %22 {offsets = [0, 0], sizes = [8, 1007], strides = [1, 1]} : vector<8x1024xf32> to vector<8x1007xf32>
    %100 = tpu.concatenate %98, %99 in 1 : vector<8x17xf32>, vector<8x1007xf32> -> vector<8x1024xf32>
    %101 = arith.andi %14, %18 : vector<8x1024xi1>
    %c0_i32_25 = arith.constant 0 : i32
    %102 = arith.sitofp %c0_i32_25 : i32 to f32
    %103 = vector.broadcast %102 : f32 to vector<8x1024xf32>
    %104 = arith.select %101, %100, %103 : vector<8x1024xi1>, vector<8x1024xf32>
    %c72 = arith.constant 72 : index
    %c0_26 = arith.constant 0 : index
    %105 = vector.load %arg8[%c72, %c0_26] : memref<216x1024xf32, #tpu.memory_space<vmem>>, vector<8x1024xf32>
    tpu.vector_store %arg8[%c72, %c0_26], %104 {strides = array<i32>} : memref<216x1024xf32, #tpu.memory_space<vmem>>, vector<8x1024xf32>,
    %106 = vector.extract_strided_slice %22 {offsets = [0, 1008], sizes = [8, 16], strides = [1, 1]} : vector<8x1024xf32> to vector<8x16xf32>
    %107 = vector.extract_strided_slice %22 {offsets = [0, 0], sizes = [8, 1008], strides = [1, 1]} : vector<8x1024xf32> to vector<8x1008xf32>
    %108 = tpu.concatenate %106, %107 in 1 : vector<8x16xf32>, vector<8x1008xf32> -> vector<8x1024xf32>
    %c0_i32_27 = arith.constant 0 : i32
    %109 = arith.sitofp %c0_i32_27 : i32 to f32
    %110 = vector.broadcast %109 : f32 to vector<8x1024xf32>
    %111 = arith.select %14, %108, %110 : vector<8x1024xi1>, vector<8x1024xf32>
    %c80 = arith.constant 80 : index
    %c0_28 = arith.constant 0 : index
    %112 = vector.load %arg8[%c80, %c0_28] : memref<216x1024xf32, #tpu.memory_space<vmem>>, vector<8x1024xf32>
    tpu.vector_store %arg8[%c80, %c0_28], %111 {strides = array<i32>} : memref<216x1024xf32, #tpu.memory_space<vmem>>, vector<8x1024xf32>,
    %113 = vector.extract_strided_slice %22 {offsets = [0, 1009], sizes = [8, 15], strides = [1, 1]} : vector<8x1024xf32> to vector<8x15xf32>
    %114 = vector.extract_strided_slice %22 {offsets = [0, 0], sizes = [8, 1009], strides = [1, 1]} : vector<8x1024xf32> to vector<8x1009xf32>
    %115 = tpu.concatenate %113, %114 in 1 : vector<8x15xf32>, vector<8x1009xf32> -> vector<8x1024xf32>
    %116 = arith.andi %14, %20 : vector<8x1024xi1>
    %c0_i32_29 = arith.constant 0 : i32
    %117 = arith.sitofp %c0_i32_29 : i32 to f32
    %118 = vector.broadcast %117 : f32 to vector<8x1024xf32>
    %119 = arith.select %116, %115, %118 : vector<8x1024xi1>, vector<8x1024xf32>
    %c88 = arith.constant 88 : index
    %c0_30 = arith.constant 0 : index
    %120 = vector.load %arg8[%c88, %c0_30] : memref<216x1024xf32, #tpu.memory_space<vmem>>, vector<8x1024xf32>
    tpu.vector_store %arg8[%c88, %c0_30], %119 {strides = array<i32>} : memref<216x1024xf32, #tpu.memory_space<vmem>>, vector<8x1024xf32>,
    %121 = vector.extract_strided_slice %22 {offsets = [0, 1023], sizes = [8, 1], strides = [1, 1]} : vector<8x1024xf32> to vector<8x1xf32>
    %122 = vector.extract_strided_slice %22 {offsets = [0, 0], sizes = [8, 1023], strides = [1, 1]} : vector<8x1024xf32> to vector<8x1023xf32>
    %123 = tpu.concatenate %121, %122 in 1 : vector<8x1xf32>, vector<8x1023xf32> -> vector<8x1024xf32>
    %c0_i32_31 = arith.constant 0 : i32
    %124 = arith.sitofp %c0_i32_31 : i32 to f32
    %125 = vector.broadcast %124 : f32 to vector<8x1024xf32>
    %126 = arith.select %18, %123, %125 : vector<8x1024xi1>, vector<8x1024xf32>
    %c96 = arith.constant 96 : index
    %c0_32 = arith.constant 0 : index
    %127 = vector.load %arg8[%c96, %c0_32] : memref<216x1024xf32, #tpu.memory_space<vmem>>, vector<8x1024xf32>
    tpu.vector_store %arg8[%c96, %c0_32], %126 {strides = array<i32>} : memref<216x1024xf32, #tpu.memory_space<vmem>>, vector<8x1024xf32>,
    %c104 = arith.constant 104 : index
    %c0_33 = arith.constant 0 : index
    %128 = vector.load %arg8[%c104, %c0_33] : memref<216x1024xf32, #tpu.memory_space<vmem>>, vector<8x1024xf32>
    tpu.vector_store %arg8[%c104, %c0_33], %22 {strides = array<i32>} : memref<216x1024xf32, #tpu.memory_space<vmem>>, vector<8x1024xf32>,
    %129 = vector.extract_strided_slice %22 {offsets = [0, 1], sizes = [8, 1023], strides = [1, 1]} : vector<8x1024xf32> to vector<8x1023xf32>
    %130 = vector.extract_strided_slice %22 {offsets = [0, 0], sizes = [8, 1], strides = [1, 1]} : vector<8x1024xf32> to vector<8x1xf32>
    %131 = tpu.concatenate %129, %130 in 1 : vector<8x1023xf32>, vector<8x1xf32> -> vector<8x1024xf32>
    %c0_i32_34 = arith.constant 0 : i32
    %132 = arith.sitofp %c0_i32_34 : i32 to f32
    %133 = vector.broadcast %132 : f32 to vector<8x1024xf32>
    %134 = arith.select %20, %131, %133 : vector<8x1024xi1>, vector<8x1024xf32>
    %c112 = arith.constant 112 : index
    %c0_35 = arith.constant 0 : index
    %135 = vector.load %arg8[%c112, %c0_35] : memref<216x1024xf32, #tpu.memory_space<vmem>>, vector<8x1024xf32>
    tpu.vector_store %arg8[%c112, %c0_35], %134 {strides = array<i32>} : memref<216x1024xf32, #tpu.memory_space<vmem>>, vector<8x1024xf32>,
    %136 = vector.extract_strided_slice %22 {offsets = [0, 15], sizes = [8, 1009], strides = [1, 1]} : vector<8x1024xf32> to vector<8x1009xf32>
    %137 = vector.extract_strided_slice %22 {offsets = [0, 0], sizes = [8, 15], strides = [1, 1]} : vector<8x1024xf32> to vector<8x15xf32>
    %138 = tpu.concatenate %136, %137 in 1 : vector<8x1009xf32>, vector<8x15xf32> -> vector<8x1024xf32>
    %139 = arith.andi %16, %18 : vector<8x1024xi1>
    %c0_i32_36 = arith.constant 0 : i32
    %140 = arith.sitofp %c0_i32_36 : i32 to f32
    %141 = vector.broadcast %140 : f32 to vector<8x1024xf32>
    %142 = arith.select %139, %138, %141 : vector<8x1024xi1>, vector<8x1024xf32>
    %c120 = arith.constant 120 : index
    %c0_37 = arith.constant 0 : index
    %143 = vector.load %arg8[%c120, %c0_37] : memref<216x1024xf32, #tpu.memory_space<vmem>>, vector<8x1024xf32>
    tpu.vector_store %arg8[%c120, %c0_37], %142 {strides = array<i32>} : memref<216x1024xf32, #tpu.memory_space<vmem>>, vector<8x1024xf32>,
    %144 = vector.extract_strided_slice %22 {offsets = [0, 16], sizes = [8, 1008], strides = [1, 1]} : vector<8x1024xf32> to vector<8x1008xf32>
    %145 = vector.extract_strided_slice %22 {offsets = [0, 0], sizes = [8, 16], strides = [1, 1]} : vector<8x1024xf32> to vector<8x16xf32>
    %146 = tpu.concatenate %144, %145 in 1 : vector<8x1008xf32>, vector<8x16xf32> -> vector<8x1024xf32>
    %c0_i32_38 = arith.constant 0 : i32
    %147 = arith.sitofp %c0_i32_38 : i32 to f32
    %148 = vector.broadcast %147 : f32 to vector<8x1024xf32>
    %149 = arith.select %16, %146, %148 : vector<8x1024xi1>, vector<8x1024xf32>
    %c128 = arith.constant 128 : index
    %c0_39 = arith.constant 0 : index
    %150 = vector.load %arg8[%c128, %c0_39] : memref<216x1024xf32, #tpu.memory_space<vmem>>, vector<8x1024xf32>
    tpu.vector_store %arg8[%c128, %c0_39], %149 {strides = array<i32>} : memref<216x1024xf32, #tpu.memory_space<vmem>>, vector<8x1024xf32>,
    %151 = vector.extract_strided_slice %22 {offsets = [0, 17], sizes = [8, 1007], strides = [1, 1]} : vector<8x1024xf32> to vector<8x1007xf32>
    %152 = vector.extract_strided_slice %22 {offsets = [0, 0], sizes = [8, 17], strides = [1, 1]} : vector<8x1024xf32> to vector<8x17xf32>
    %153 = tpu.concatenate %151, %152 in 1 : vector<8x1007xf32>, vector<8x17xf32> -> vector<8x1024xf32>
    %154 = arith.andi %16, %20 : vector<8x1024xi1>
    %c0_i32_40 = arith.constant 0 : i32
    %155 = arith.sitofp %c0_i32_40 : i32 to f32
    %156 = vector.broadcast %155 : f32 to vector<8x1024xf32>
    %157 = arith.select %154, %153, %156 : vector<8x1024xi1>, vector<8x1024xf32>
    %c136 = arith.constant 136 : index
    %c0_41 = arith.constant 0 : index
    %158 = vector.load %arg8[%c136, %c0_41] : memref<216x1024xf32, #tpu.memory_space<vmem>>, vector<8x1024xf32>
    tpu.vector_store %arg8[%c136, %c0_41], %157 {strides = array<i32>} : memref<216x1024xf32, #tpu.memory_space<vmem>>, vector<8x1024xf32>,
    %159 = vector.extract_strided_slice %22 {offsets = [0, 239], sizes = [8, 785], strides = [1, 1]} : vector<8x1024xf32> to vector<8x785xf32>
    %160 = vector.extract_strided_slice %22 {offsets = [0, 0], sizes = [8, 239], strides = [1, 1]} : vector<8x1024xf32> to vector<8x239xf32>
    %161 = tpu.concatenate %159, %160 in 1 : vector<8x785xf32>, vector<8x239xf32> -> vector<8x1024xf32>
    %162 = arith.andi %12, %14 : vector<8x1024xi1>
    %163 = arith.andi %162, %18 : vector<8x1024xi1>
    %c0_i32_42 = arith.constant 0 : i32
    %164 = arith.sitofp %c0_i32_42 : i32 to f32
    %165 = vector.broadcast %164 : f32 to vector<8x1024xf32>
    %166 = arith.select %163, %161, %165 : vector<8x1024xi1>, vector<8x1024xf32>
    %c144 = arith.constant 144 : index
    %c0_43 = arith.constant 0 : index
    %167 = vector.load %arg8[%c144, %c0_43] : memref<216x1024xf32, #tpu.memory_space<vmem>>, vector<8x1024xf32>
    tpu.vector_store %arg8[%c144, %c0_43], %166 {strides = array<i32>} : memref<216x1024xf32, #tpu.memory_space<vmem>>, vector<8x1024xf32>,
    %168 = vector.extract_strided_slice %22 {offsets = [0, 240], sizes = [8, 784], strides = [1, 1]} : vector<8x1024xf32> to vector<8x784xf32>
    %169 = vector.extract_strided_slice %22 {offsets = [0, 0], sizes = [8, 240], strides = [1, 1]} : vector<8x1024xf32> to vector<8x240xf32>
    %170 = tpu.concatenate %168, %169 in 1 : vector<8x784xf32>, vector<8x240xf32> -> vector<8x1024xf32>
    %171 = arith.andi %12, %14 : vector<8x1024xi1>
    %c0_i32_44 = arith.constant 0 : i32
    %172 = arith.sitofp %c0_i32_44 : i32 to f32
    %173 = vector.broadcast %172 : f32 to vector<8x1024xf32>
    %174 = arith.select %171, %170, %173 : vector<8x1024xi1>, vector<8x1024xf32>
    %c152 = arith.constant 152 : index
    %c0_45 = arith.constant 0 : index
    %175 = vector.load %arg8[%c152, %c0_45] : memref<216x1024xf32, #tpu.memory_space<vmem>>, vector<8x1024xf32>
    tpu.vector_store %arg8[%c152, %c0_45], %174 {strides = array<i32>} : memref<216x1024xf32, #tpu.memory_space<vmem>>, vector<8x1024xf32>,
    %176 = vector.extract_strided_slice %22 {offsets = [0, 241], sizes = [8, 783], strides = [1, 1]} : vector<8x1024xf32> to vector<8x783xf32>
    %177 = vector.extract_strided_slice %22 {offsets = [0, 0], sizes = [8, 241], strides = [1, 1]} : vector<8x1024xf32> to vector<8x241xf32>
    %178 = tpu.concatenate %176, %177 in 1 : vector<8x783xf32>, vector<8x241xf32> -> vector<8x1024xf32>
    %179 = arith.andi %12, %14 : vector<8x1024xi1>
    %180 = arith.andi %179, %20 : vector<8x1024xi1>
    %c0_i32_46 = arith.constant 0 : i32
    %181 = arith.sitofp %c0_i32_46 : i32 to f32
    %182 = vector.broadcast %181 : f32 to vector<8x1024xf32>
    %183 = arith.select %180, %178, %182 : vector<8x1024xi1>, vector<8x1024xf32>
    %c160 = arith.constant 160 : index
    %c0_47 = arith.constant 0 : index
    %184 = vector.load %arg8[%c160, %c0_47] : memref<216x1024xf32, #tpu.memory_space<vmem>>, vector<8x1024xf32>
    tpu.vector_store %arg8[%c160, %c0_47], %183 {strides = array<i32>} : memref<216x1024xf32, #tpu.memory_space<vmem>>, vector<8x1024xf32>,
    %185 = vector.extract_strided_slice %22 {offsets = [0, 255], sizes = [8, 769], strides = [1, 1]} : vector<8x1024xf32> to vector<8x769xf32>
    %186 = vector.extract_strided_slice %22 {offsets = [0, 0], sizes = [8, 255], strides = [1, 1]} : vector<8x1024xf32> to vector<8x255xf32>
    %187 = tpu.concatenate %185, %186 in 1 : vector<8x769xf32>, vector<8x255xf32> -> vector<8x1024xf32>
    %188 = arith.andi %12, %18 : vector<8x1024xi1>
    %c0_i32_48 = arith.constant 0 : i32
    %189 = arith.sitofp %c0_i32_48 : i32 to f32
    %190 = vector.broadcast %189 : f32 to vector<8x1024xf32>
    %191 = arith.select %188, %187, %190 : vector<8x1024xi1>, vector<8x1024xf32>
    %c168 = arith.constant 168 : index
    %c0_49 = arith.constant 0 : index
    %192 = vector.load %arg8[%c168, %c0_49] : memref<216x1024xf32, #tpu.memory_space<vmem>>, vector<8x1024xf32>
    tpu.vector_store %arg8[%c168, %c0_49], %191 {strides = array<i32>} : memref<216x1024xf32, #tpu.memory_space<vmem>>, vector<8x1024xf32>,
    %193 = vector.extract_strided_slice %22 {offsets = [0, 256], sizes = [8, 768], strides = [1, 1]} : vector<8x1024xf32> to vector<8x768xf32>
    %194 = vector.extract_strided_slice %22 {offsets = [0, 0], sizes = [8, 256], strides = [1, 1]} : vector<8x1024xf32> to vector<8x256xf32>
    %195 = tpu.concatenate %193, %194 in 1 : vector<8x768xf32>, vector<8x256xf32> -> vector<8x1024xf32>
    %c0_i32_50 = arith.constant 0 : i32
    %196 = arith.sitofp %c0_i32_50 : i32 to f32
    %197 = vector.broadcast %196 : f32 to vector<8x1024xf32>
    %198 = arith.select %12, %195, %197 : vector<8x1024xi1>, vector<8x1024xf32>
    %c176 = arith.constant 176 : index
    %c0_51 = arith.constant 0 : index
    %199 = vector.load %arg8[%c176, %c0_51] : memref<216x1024xf32, #tpu.memory_space<vmem>>, vector<8x1024xf32>
    tpu.vector_store %arg8[%c176, %c0_51], %198 {strides = array<i32>} : memref<216x1024xf32, #tpu.memory_space<vmem>>, vector<8x1024xf32>,
    %200 = vector.extract_strided_slice %22 {offsets = [0, 257], sizes = [8, 767], strides = [1, 1]} : vector<8x1024xf32> to vector<8x767xf32>
    %201 = vector.extract_strided_slice %22 {offsets = [0, 0], sizes = [8, 257], strides = [1, 1]} : vector<8x1024xf32> to vector<8x257xf32>
    %202 = tpu.concatenate %200, %201 in 1 : vector<8x767xf32>, vector<8x257xf32> -> vector<8x1024xf32>
    %203 = arith.andi %12, %20 : vector<8x1024xi1>
    %c0_i32_52 = arith.constant 0 : i32
    %204 = arith.sitofp %c0_i32_52 : i32 to f32
    %205 = vector.broadcast %204 : f32 to vector<8x1024xf32>
    %206 = arith.select %203, %202, %205 : vector<8x1024xi1>, vector<8x1024xf32>
    %c184 = arith.constant 184 : index
    %c0_53 = arith.constant 0 : index
    %207 = vector.load %arg8[%c184, %c0_53] : memref<216x1024xf32, #tpu.memory_space<vmem>>, vector<8x1024xf32>
    tpu.vector_store %arg8[%c184, %c0_53], %206 {strides = array<i32>} : memref<216x1024xf32, #tpu.memory_space<vmem>>, vector<8x1024xf32>,
    %208 = vector.extract_strided_slice %22 {offsets = [0, 271], sizes = [8, 753], strides = [1, 1]} : vector<8x1024xf32> to vector<8x753xf32>
    %209 = vector.extract_strided_slice %22 {offsets = [0, 0], sizes = [8, 271], strides = [1, 1]} : vector<8x1024xf32> to vector<8x271xf32>
    %210 = tpu.concatenate %208, %209 in 1 : vector<8x753xf32>, vector<8x271xf32> -> vector<8x1024xf32>
    %211 = arith.andi %12, %16 : vector<8x1024xi1>
    %212 = arith.andi %211, %18 : vector<8x1024xi1>
    %c0_i32_54 = arith.constant 0 : i32
    %213 = arith.sitofp %c0_i32_54 : i32 to f32
    %214 = vector.broadcast %213 : f32 to vector<8x1024xf32>
    %215 = arith.select %212, %210, %214 : vector<8x1024xi1>, vector<8x1024xf32>
    %c192 = arith.constant 192 : index
    %c0_55 = arith.constant 0 : index
    %216 = vector.load %arg8[%c192, %c0_55] : memref<216x1024xf32, #tpu.memory_space<vmem>>, vector<8x1024xf32>
    tpu.vector_store %arg8[%c192, %c0_55], %215 {strides = array<i32>} : memref<216x1024xf32, #tpu.memory_space<vmem>>, vector<8x1024xf32>,
    %217 = vector.extract_strided_slice %22 {offsets = [0, 272], sizes = [8, 752], strides = [1, 1]} : vector<8x1024xf32> to vector<8x752xf32>
    %218 = vector.extract_strided_slice %22 {offsets = [0, 0], sizes = [8, 272], strides = [1, 1]} : vector<8x1024xf32> to vector<8x272xf32>
    %219 = tpu.concatenate %217, %218 in 1 : vector<8x752xf32>, vector<8x272xf32> -> vector<8x1024xf32>
    %220 = arith.andi %12, %16 : vector<8x1024xi1>
    %c0_i32_56 = arith.constant 0 : i32
    %221 = arith.sitofp %c0_i32_56 : i32 to f32
    %222 = vector.broadcast %221 : f32 to vector<8x1024xf32>
    %223 = arith.select %220, %219, %222 : vector<8x1024xi1>, vector<8x1024xf32>
    %c200 = arith.constant 200 : index
    %c0_57 = arith.constant 0 : index
    %224 = vector.load %arg8[%c200, %c0_57] : memref<216x1024xf32, #tpu.memory_space<vmem>>, vector<8x1024xf32>
    tpu.vector_store %arg8[%c200, %c0_57], %223 {strides = array<i32>} : memref<216x1024xf32, #tpu.memory_space<vmem>>, vector<8x1024xf32>,
    %225 = vector.extract_strided_slice %22 {offsets = [0, 273], sizes = [8, 751], strides = [1, 1]} : vector<8x1024xf32> to vector<8x751xf32>
    %226 = vector.extract_strided_slice %22 {offsets = [0, 0], sizes = [8, 273], strides = [1, 1]} : vector<8x1024xf32> to vector<8x273xf32>
    %227 = tpu.concatenate %225, %226 in 1 : vector<8x751xf32>, vector<8x273xf32> -> vector<8x1024xf32>
    %228 = arith.andi %12, %16 : vector<8x1024xi1>
    %229 = arith.andi %228, %20 : vector<8x1024xi1>
    %c0_i32_58 = arith.constant 0 : i32
    %230 = arith.sitofp %c0_i32_58 : i32 to f32
    %231 = vector.broadcast %230 : f32 to vector<8x1024xf32>
    %232 = arith.select %229, %227, %231 : vector<8x1024xi1>, vector<8x1024xf32>
    %c208 = arith.constant 208 : index
    %c0_59 = arith.constant 0 : index
    %233 = vector.load %arg8[%c208, %c0_59] : memref<216x1024xf32, #tpu.memory_space<vmem>>, vector<8x1024xf32>
    tpu.vector_store %arg8[%c208, %c0_59], %232 {strides = array<i32>} : memref<216x1024xf32, #tpu.memory_space<vmem>>, vector<8x1024xf32>,
    %c0_60 = arith.constant 0 : index
    %c0_61 = arith.constant 0 : index
    %234 = vector.load %arg2[%c0_60, %c0_61] : memref<8x216xf32, #tpu.memory_space<vmem>>, vector<8x216xf32>
    %c0_62 = arith.constant 0 : index
    %c0_63 = arith.constant 0 : index
    %235 = vector.load %arg8[%c0_62, %c0_63] : memref<216x1024xf32, #tpu.memory_space<vmem>>, vector<216x1024xf32>
    %cst = arith.constant dense<0.000000e+00> : vector<8x1024xf32>
    %236 = tpu.matmul %234, %235, %cst {dimension_numbers = #tpu.dot_dimension_numbers<[1], [0], [0], [1], [0, 0, 1, 1], [], []>} : vector<8x216xf32>, vector<216x1024xf32>, vector<8x1024xf32> -> vector<8x1024xf32>
    %c0_64 = arith.constant 0 : index
    %c0_65 = arith.constant 0 : index
    %237 = vector.load %arg3[%c0_64, %c0_65] : memref<8x1xf32, #tpu.memory_space<vmem>>, vector<8x1xf32>
    %238 = vector.broadcast %237 : vector<8x1xf32> to vector<8x1024xf32>
    %239 = arith.addf %236, %238 : vector<8x1024xf32>
    %cst_66 = arith.constant 0.000000e+00 : f32
    %240 = vector.broadcast %cst_66 : f32 to vector<8x1024xf32>
    %241 = arith.maximumf %239, %240 : vector<8x1024xf32>
    %c0_67 = arith.constant 0 : index
    %c0_68 = arith.constant 0 : index
    %242 = vector.load %arg7[%c0_67, %c0_68] : memref<8x1024xf32, #tpu.memory_space<vmem>>, vector<8x1024xf32>
    tpu.vector_store %arg7[%c0_67, %c0_68], %241 {strides = array<i32>} : memref<8x1024xf32, #tpu.memory_space<vmem>>, vector<8x1024xf32>,
    %c0_69 = arith.constant 0 : index
    %c0_70 = arith.constant 0 : index
    %243 = vector.load %arg7[%c0_69, %c0_70] : memref<8x1024xf32, #tpu.memory_space<vmem>>, vector<8x1024xf32>
    %244 = vector.extract_strided_slice %243 {offsets = [0, 751], sizes = [8, 273], strides = [1, 1]} : vector<8x1024xf32> to vector<8x273xf32>
    %245 = vector.extract_strided_slice %243 {offsets = [0, 0], sizes = [8, 751], strides = [1, 1]} : vector<8x1024xf32> to vector<8x751xf32>
    %246 = tpu.concatenate %244, %245 in 1 : vector<8x273xf32>, vector<8x751xf32> -> vector<8x1024xf32>
    %247 = arith.andi %10, %14 : vector<8x1024xi1>
    %248 = arith.andi %247, %18 : vector<8x1024xi1>
    %c0_i32_71 = arith.constant 0 : i32
    %249 = arith.sitofp %c0_i32_71 : i32 to f32
    %250 = vector.broadcast %249 : f32 to vector<8x1024xf32>
    %251 = arith.select %248, %246, %250 : vector<8x1024xi1>, vector<8x1024xf32>
    %c0_72 = arith.constant 0 : index
    %c0_73 = arith.constant 0 : index
    %252 = vector.load %arg8[%c0_72, %c0_73] : memref<216x1024xf32, #tpu.memory_space<vmem>>, vector<8x1024xf32>
    tpu.vector_store %arg8[%c0_72, %c0_73], %251 {strides = array<i32>} : memref<216x1024xf32, #tpu.memory_space<vmem>>, vector<8x1024xf32>,
    %253 = vector.extract_strided_slice %243 {offsets = [0, 752], sizes = [8, 272], strides = [1, 1]} : vector<8x1024xf32> to vector<8x272xf32>
    %254 = vector.extract_strided_slice %243 {offsets = [0, 0], sizes = [8, 752], strides = [1, 1]} : vector<8x1024xf32> to vector<8x752xf32>
    %255 = tpu.concatenate %253, %254 in 1 : vector<8x272xf32>, vector<8x752xf32> -> vector<8x1024xf32>
    %256 = arith.andi %10, %14 : vector<8x1024xi1>
    %c0_i32_74 = arith.constant 0 : i32
    %257 = arith.sitofp %c0_i32_74 : i32 to f32
    %258 = vector.broadcast %257 : f32 to vector<8x1024xf32>
    %259 = arith.select %256, %255, %258 : vector<8x1024xi1>, vector<8x1024xf32>
    %c8_75 = arith.constant 8 : index
    %c0_76 = arith.constant 0 : index
    %260 = vector.load %arg8[%c8_75, %c0_76] : memref<216x1024xf32, #tpu.memory_space<vmem>>, vector<8x1024xf32>
    tpu.vector_store %arg8[%c8_75, %c0_76], %259 {strides = array<i32>} : memref<216x1024xf32, #tpu.memory_space<vmem>>, vector<8x1024xf32>,
    %261 = vector.extract_strided_slice %243 {offsets = [0, 753], sizes = [8, 271], strides = [1, 1]} : vector<8x1024xf32> to vector<8x271xf32>
    %262 = vector.extract_strided_slice %243 {offsets = [0, 0], sizes = [8, 753], strides = [1, 1]} : vector<8x1024xf32> to vector<8x753xf32>
    %263 = tpu.concatenate %261, %262 in 1 : vector<8x271xf32>, vector<8x753xf32> -> vector<8x1024xf32>
    %264 = arith.andi %10, %14 : vector<8x1024xi1>
    %265 = arith.andi %264, %20 : vector<8x1024xi1>
    %c0_i32_77 = arith.constant 0 : i32
    %266 = arith.sitofp %c0_i32_77 : i32 to f32
    %267 = vector.broadcast %266 : f32 to vector<8x1024xf32>
    %268 = arith.select %265, %263, %267 : vector<8x1024xi1>, vector<8x1024xf32>
    %c16_78 = arith.constant 16 : index
    %c0_79 = arith.constant 0 : index
    %269 = vector.load %arg8[%c16_78, %c0_79] : memref<216x1024xf32, #tpu.memory_space<vmem>>, vector<8x1024xf32>
    tpu.vector_store %arg8[%c16_78, %c0_79], %268 {strides = array<i32>} : memref<216x1024xf32, #tpu.memory_space<vmem>>, vector<8x1024xf32>,
    %270 = vector.extract_strided_slice %243 {offsets = [0, 767], sizes = [8, 257], strides = [1, 1]} : vector<8x1024xf32> to vector<8x257xf32>
    %271 = vector.extract_strided_slice %243 {offsets = [0, 0], sizes = [8, 767], strides = [1, 1]} : vector<8x1024xf32> to vector<8x767xf32>
    %272 = tpu.concatenate %270, %271 in 1 : vector<8x257xf32>, vector<8x767xf32> -> vector<8x1024xf32>
    %273 = arith.andi %10, %18 : vector<8x1024xi1>
    %c0_i32_80 = arith.constant 0 : i32
    %274 = arith.sitofp %c0_i32_80 : i32 to f32
    %275 = vector.broadcast %274 : f32 to vector<8x1024xf32>
    %276 = arith.select %273, %272, %275 : vector<8x1024xi1>, vector<8x1024xf32>
    %c24_81 = arith.constant 24 : index
    %c0_82 = arith.constant 0 : index
    %277 = vector.load %arg8[%c24_81, %c0_82] : memref<216x1024xf32, #tpu.memory_space<vmem>>, vector<8x1024xf32>
    tpu.vector_store %arg8[%c24_81, %c0_82], %276 {strides = array<i32>} : memref<216x1024xf32, #tpu.memory_space<vmem>>, vector<8x1024xf32>,
    %278 = vector.extract_strided_slice %243 {offsets = [0, 768], sizes = [8, 256], strides = [1, 1]} : vector<8x1024xf32> to vector<8x256xf32>
    %279 = vector.extract_strided_slice %243 {offsets = [0, 0], sizes = [8, 768], strides = [1, 1]} : vector<8x1024xf32> to vector<8x768xf32>
    %280 = tpu.concatenate %278, %279 in 1 : vector<8x256xf32>, vector<8x768xf32> -> vector<8x1024xf32>
    %c0_i32_83 = arith.constant 0 : i32
    %281 = arith.sitofp %c0_i32_83 : i32 to f32
    %282 = vector.broadcast %281 : f32 to vector<8x1024xf32>
    %283 = arith.select %10, %280, %282 : vector<8x1024xi1>, vector<8x1024xf32>
    %c32_84 = arith.constant 32 : index
    %c0_85 = arith.constant 0 : index
    %284 = vector.load %arg8[%c32_84, %c0_85] : memref<216x1024xf32, #tpu.memory_space<vmem>>, vector<8x1024xf32>
    tpu.vector_store %arg8[%c32_84, %c0_85], %283 {strides = array<i32>} : memref<216x1024xf32, #tpu.memory_space<vmem>>, vector<8x1024xf32>,
    %285 = vector.extract_strided_slice %243 {offsets = [0, 769], sizes = [8, 255], strides = [1, 1]} : vector<8x1024xf32> to vector<8x255xf32>
    %286 = vector.extract_strided_slice %243 {offsets = [0, 0], sizes = [8, 769], strides = [1, 1]} : vector<8x1024xf32> to vector<8x769xf32>
    %287 = tpu.concatenate %285, %286 in 1 : vector<8x255xf32>, vector<8x769xf32> -> vector<8x1024xf32>
    %288 = arith.andi %10, %20 : vector<8x1024xi1>
    %c0_i32_86 = arith.constant 0 : i32
    %289 = arith.sitofp %c0_i32_86 : i32 to f32
    %290 = vector.broadcast %289 : f32 to vector<8x1024xf32>
    %291 = arith.select %288, %287, %290 : vector<8x1024xi1>, vector<8x1024xf32>
    %c40_87 = arith.constant 40 : index
    %c0_88 = arith.constant 0 : index
    %292 = vector.load %arg8[%c40_87, %c0_88] : memref<216x1024xf32, #tpu.memory_space<vmem>>, vector<8x1024xf32>
    tpu.vector_store %arg8[%c40_87, %c0_88], %291 {strides = array<i32>} : memref<216x1024xf32, #tpu.memory_space<vmem>>, vector<8x1024xf32>,
    %293 = vector.extract_strided_slice %243 {offsets = [0, 783], sizes = [8, 241], strides = [1, 1]} : vector<8x1024xf32> to vector<8x241xf32>
    %294 = vector.extract_strided_slice %243 {offsets = [0, 0], sizes = [8, 783], strides = [1, 1]} : vector<8x1024xf32> to vector<8x783xf32>
    %295 = tpu.concatenate %293, %294 in 1 : vector<8x241xf32>, vector<8x783xf32> -> vector<8x1024xf32>
    %296 = arith.andi %10, %16 : vector<8x1024xi1>
    %297 = arith.andi %296, %18 : vector<8x1024xi1>
    %c0_i32_89 = arith.constant 0 : i32
    %298 = arith.sitofp %c0_i32_89 : i32 to f32
    %299 = vector.broadcast %298 : f32 to vector<8x1024xf32>
    %300 = arith.select %297, %295, %299 : vector<8x1024xi1>, vector<8x1024xf32>
    %c48_90 = arith.constant 48 : index
    %c0_91 = arith.constant 0 : index
    %301 = vector.load %arg8[%c48_90, %c0_91] : memref<216x1024xf32, #tpu.memory_space<vmem>>, vector<8x1024xf32>
    tpu.vector_store %arg8[%c48_90, %c0_91], %300 {strides = array<i32>} : memref<216x1024xf32, #tpu.memory_space<vmem>>, vector<8x1024xf32>,
    %302 = vector.extract_strided_slice %243 {offsets = [0, 784], sizes = [8, 240], strides = [1, 1]} : vector<8x1024xf32> to vector<8x240xf32>
    %303 = vector.extract_strided_slice %243 {offsets = [0, 0], sizes = [8, 784], strides = [1, 1]} : vector<8x1024xf32> to vector<8x784xf32>
    %304 = tpu.concatenate %302, %303 in 1 : vector<8x240xf32>, vector<8x784xf32> -> vector<8x1024xf32>
    %305 = arith.andi %10, %16 : vector<8x1024xi1>
    %c0_i32_92 = arith.constant 0 : i32
    %306 = arith.sitofp %c0_i32_92 : i32 to f32
    %307 = vector.broadcast %306 : f32 to vector<8x1024xf32>
    %308 = arith.select %305, %304, %307 : vector<8x1024xi1>, vector<8x1024xf32>
    %c56_93 = arith.constant 56 : index
    %c0_94 = arith.constant 0 : index
    %309 = vector.load %arg8[%c56_93, %c0_94] : memref<216x1024xf32, #tpu.memory_space<vmem>>, vector<8x1024xf32>
    tpu.vector_store %arg8[%c56_93, %c0_94], %308 {strides = array<i32>} : memref<216x1024xf32, #tpu.memory_space<vmem>>, vector<8x1024xf32>,
    %310 = vector.extract_strided_slice %243 {offsets = [0, 785], sizes = [8, 239], strides = [1, 1]} : vector<8x1024xf32> to vector<8x239xf32>
    %311 = vector.extract_strided_slice %243 {offsets = [0, 0], sizes = [8, 785], strides = [1, 1]} : vector<8x1024xf32> to vector<8x785xf32>
    %312 = tpu.concatenate %310, %311 in 1 : vector<8x239xf32>, vector<8x785xf32> -> vector<8x1024xf32>
    %313 = arith.andi %10, %16 : vector<8x1024xi1>
    %314 = arith.andi %313, %20 : vector<8x1024xi1>
    %c0_i32_95 = arith.constant 0 : i32
    %315 = arith.sitofp %c0_i32_95 : i32 to f32
    %316 = vector.broadcast %315 : f32 to vector<8x1024xf32>
    %317 = arith.select %314, %312, %316 : vector<8x1024xi1>, vector<8x1024xf32>
    %c64_96 = arith.constant 64 : index
    %c0_97 = arith.constant 0 : index
    %318 = vector.load %arg8[%c64_96, %c0_97] : memref<216x1024xf32, #tpu.memory_space<vmem>>, vector<8x1024xf32>
    tpu.vector_store %arg8[%c64_96, %c0_97], %317 {strides = array<i32>} : memref<216x1024xf32, #tpu.memory_space<vmem>>, vector<8x1024xf32>,
    %319 = vector.extract_strided_slice %243 {offsets = [0, 1007], sizes = [8, 17], strides = [1, 1]} : vector<8x1024xf32> to vector<8x17xf32>
    %320 = vector.extract_strided_slice %243 {offsets = [0, 0], sizes = [8, 1007], strides = [1, 1]} : vector<8x1024xf32> to vector<8x1007xf32>
    %321 = tpu.concatenate %319, %320 in 1 : vector<8x17xf32>, vector<8x1007xf32> -> vector<8x1024xf32>
    %322 = arith.andi %14, %18 : vector<8x1024xi1>
    %c0_i32_98 = arith.constant 0 : i32
    %323 = arith.sitofp %c0_i32_98 : i32 to f32
    %324 = vector.broadcast %323 : f32 to vector<8x1024xf32>
    %325 = arith.select %322, %321, %324 : vector<8x1024xi1>, vector<8x1024xf32>
    %c72_99 = arith.constant 72 : index
    %c0_100 = arith.constant 0 : index
    %326 = vector.load %arg8[%c72_99, %c0_100] : memref<216x1024xf32, #tpu.memory_space<vmem>>, vector<8x1024xf32>
    tpu.vector_store %arg8[%c72_99, %c0_100], %325 {strides = array<i32>} : memref<216x1024xf32, #tpu.memory_space<vmem>>, vector<8x1024xf32>,
    %327 = vector.extract_strided_slice %243 {offsets = [0, 1008], sizes = [8, 16], strides = [1, 1]} : vector<8x1024xf32> to vector<8x16xf32>
    %328 = vector.extract_strided_slice %243 {offsets = [0, 0], sizes = [8, 1008], strides = [1, 1]} : vector<8x1024xf32> to vector<8x1008xf32>
    %329 = tpu.concatenate %327, %328 in 1 : vector<8x16xf32>, vector<8x1008xf32> -> vector<8x1024xf32>
    %c0_i32_101 = arith.constant 0 : i32
    %330 = arith.sitofp %c0_i32_101 : i32 to f32
    %331 = vector.broadcast %330 : f32 to vector<8x1024xf32>
    %332 = arith.select %14, %329, %331 : vector<8x1024xi1>, vector<8x1024xf32>
    %c80_102 = arith.constant 80 : index
    %c0_103 = arith.constant 0 : index
    %333 = vector.load %arg8[%c80_102, %c0_103] : memref<216x1024xf32, #tpu.memory_space<vmem>>, vector<8x1024xf32>
    tpu.vector_store %arg8[%c80_102, %c0_103], %332 {strides = array<i32>} : memref<216x1024xf32, #tpu.memory_space<vmem>>, vector<8x1024xf32>,
    %334 = vector.extract_strided_slice %243 {offsets = [0, 1009], sizes = [8, 15], strides = [1, 1]} : vector<8x1024xf32> to vector<8x15xf32>
    %335 = vector.extract_strided_slice %243 {offsets = [0, 0], sizes = [8, 1009], strides = [1, 1]} : vector<8x1024xf32> to vector<8x1009xf32>
    %336 = tpu.concatenate %334, %335 in 1 : vector<8x15xf32>, vector<8x1009xf32> -> vector<8x1024xf32>
    %337 = arith.andi %14, %20 : vector<8x1024xi1>
    %c0_i32_104 = arith.constant 0 : i32
    %338 = arith.sitofp %c0_i32_104 : i32 to f32
    %339 = vector.broadcast %338 : f32 to vector<8x1024xf32>
    %340 = arith.select %337, %336, %339 : vector<8x1024xi1>, vector<8x1024xf32>
    %c88_105 = arith.constant 88 : index
    %c0_106 = arith.constant 0 : index
    %341 = vector.load %arg8[%c88_105, %c0_106] : memref<216x1024xf32, #tpu.memory_space<vmem>>, vector<8x1024xf32>
    tpu.vector_store %arg8[%c88_105, %c0_106], %340 {strides = array<i32>} : memref<216x1024xf32, #tpu.memory_space<vmem>>, vector<8x1024xf32>,
    %342 = vector.extract_strided_slice %243 {offsets = [0, 1023], sizes = [8, 1], strides = [1, 1]} : vector<8x1024xf32> to vector<8x1xf32>
    %343 = vector.extract_strided_slice %243 {offsets = [0, 0], sizes = [8, 1023], strides = [1, 1]} : vector<8x1024xf32> to vector<8x1023xf32>
    %344 = tpu.concatenate %342, %343 in 1 : vector<8x1xf32>, vector<8x1023xf32> -> vector<8x1024xf32>
    %c0_i32_107 = arith.constant 0 : i32
    %345 = arith.sitofp %c0_i32_107 : i32 to f32
    %346 = vector.broadcast %345 : f32 to vector<8x1024xf32>
    %347 = arith.select %18, %344, %346 : vector<8x1024xi1>, vector<8x1024xf32>
    %c96_108 = arith.constant 96 : index
    %c0_109 = arith.constant 0 : index
    %348 = vector.load %arg8[%c96_108, %c0_109] : memref<216x1024xf32, #tpu.memory_space<vmem>>, vector<8x1024xf32>
    tpu.vector_store %arg8[%c96_108, %c0_109], %347 {strides = array<i32>} : memref<216x1024xf32, #tpu.memory_space<vmem>>, vector<8x1024xf32>,
    %c104_110 = arith.constant 104 : index
    %c0_111 = arith.constant 0 : index
    %349 = vector.load %arg8[%c104_110, %c0_111] : memref<216x1024xf32, #tpu.memory_space<vmem>>, vector<8x1024xf32>
    tpu.vector_store %arg8[%c104_110, %c0_111], %243 {strides = array<i32>} : memref<216x1024xf32, #tpu.memory_space<vmem>>, vector<8x1024xf32>,
    %350 = vector.extract_strided_slice %243 {offsets = [0, 1], sizes = [8, 1023], strides = [1, 1]} : vector<8x1024xf32> to vector<8x1023xf32>
    %351 = vector.extract_strided_slice %243 {offsets = [0, 0], sizes = [8, 1], strides = [1, 1]} : vector<8x1024xf32> to vector<8x1xf32>
    %352 = tpu.concatenate %350, %351 in 1 : vector<8x1023xf32>, vector<8x1xf32> -> vector<8x1024xf32>
    %c0_i32_112 = arith.constant 0 : i32
    %353 = arith.sitofp %c0_i32_112 : i32 to f32
    %354 = vector.broadcast %353 : f32 to vector<8x1024xf32>
    %355 = arith.select %20, %352, %354 : vector<8x1024xi1>, vector<8x1024xf32>
    %c112_113 = arith.constant 112 : index
    %c0_114 = arith.constant 0 : index
    %356 = vector.load %arg8[%c112_113, %c0_114] : memref<216x1024xf32, #tpu.memory_space<vmem>>, vector<8x1024xf32>
    tpu.vector_store %arg8[%c112_113, %c0_114], %355 {strides = array<i32>} : memref<216x1024xf32, #tpu.memory_space<vmem>>, vector<8x1024xf32>,
    %357 = vector.extract_strided_slice %243 {offsets = [0, 15], sizes = [8, 1009], strides = [1, 1]} : vector<8x1024xf32> to vector<8x1009xf32>
    %358 = vector.extract_strided_slice %243 {offsets = [0, 0], sizes = [8, 15], strides = [1, 1]} : vector<8x1024xf32> to vector<8x15xf32>
    %359 = tpu.concatenate %357, %358 in 1 : vector<8x1009xf32>, vector<8x15xf32> -> vector<8x1024xf32>
    %360 = arith.andi %16, %18 : vector<8x1024xi1>
    %c0_i32_115 = arith.constant 0 : i32
    %361 = arith.sitofp %c0_i32_115 : i32 to f32
    %362 = vector.broadcast %361 : f32 to vector<8x1024xf32>
    %363 = arith.select %360, %359, %362 : vector<8x1024xi1>, vector<8x1024xf32>
    %c120_116 = arith.constant 120 : index
    %c0_117 = arith.constant 0 : index
    %364 = vector.load %arg8[%c120_116, %c0_117] : memref<216x1024xf32, #tpu.memory_space<vmem>>, vector<8x1024xf32>
    tpu.vector_store %arg8[%c120_116, %c0_117], %363 {strides = array<i32>} : memref<216x1024xf32, #tpu.memory_space<vmem>>, vector<8x1024xf32>,
    %365 = vector.extract_strided_slice %243 {offsets = [0, 16], sizes = [8, 1008], strides = [1, 1]} : vector<8x1024xf32> to vector<8x1008xf32>
    %366 = vector.extract_strided_slice %243 {offsets = [0, 0], sizes = [8, 16], strides = [1, 1]} : vector<8x1024xf32> to vector<8x16xf32>
    %367 = tpu.concatenate %365, %366 in 1 : vector<8x1008xf32>, vector<8x16xf32> -> vector<8x1024xf32>
    %c0_i32_118 = arith.constant 0 : i32
    %368 = arith.sitofp %c0_i32_118 : i32 to f32
    %369 = vector.broadcast %368 : f32 to vector<8x1024xf32>
    %370 = arith.select %16, %367, %369 : vector<8x1024xi1>, vector<8x1024xf32>
    %c128_119 = arith.constant 128 : index
    %c0_120 = arith.constant 0 : index
    %371 = vector.load %arg8[%c128_119, %c0_120] : memref<216x1024xf32, #tpu.memory_space<vmem>>, vector<8x1024xf32>
    tpu.vector_store %arg8[%c128_119, %c0_120], %370 {strides = array<i32>} : memref<216x1024xf32, #tpu.memory_space<vmem>>, vector<8x1024xf32>,
    %372 = vector.extract_strided_slice %243 {offsets = [0, 17], sizes = [8, 1007], strides = [1, 1]} : vector<8x1024xf32> to vector<8x1007xf32>
    %373 = vector.extract_strided_slice %243 {offsets = [0, 0], sizes = [8, 17], strides = [1, 1]} : vector<8x1024xf32> to vector<8x17xf32>
    %374 = tpu.concatenate %372, %373 in 1 : vector<8x1007xf32>, vector<8x17xf32> -> vector<8x1024xf32>
    %375 = arith.andi %16, %20 : vector<8x1024xi1>
    %c0_i32_121 = arith.constant 0 : i32
    %376 = arith.sitofp %c0_i32_121 : i32 to f32
    %377 = vector.broadcast %376 : f32 to vector<8x1024xf32>
    %378 = arith.select %375, %374, %377 : vector<8x1024xi1>, vector<8x1024xf32>
    %c136_122 = arith.constant 136 : index
    %c0_123 = arith.constant 0 : index
    %379 = vector.load %arg8[%c136_122, %c0_123] : memref<216x1024xf32, #tpu.memory_space<vmem>>, vector<8x1024xf32>
    tpu.vector_store %arg8[%c136_122, %c0_123], %378 {strides = array<i32>} : memref<216x1024xf32, #tpu.memory_space<vmem>>, vector<8x1024xf32>,
    %380 = vector.extract_strided_slice %243 {offsets = [0, 239], sizes = [8, 785], strides = [1, 1]} : vector<8x1024xf32> to vector<8x785xf32>
    %381 = vector.extract_strided_slice %243 {offsets = [0, 0], sizes = [8, 239], strides = [1, 1]} : vector<8x1024xf32> to vector<8x239xf32>
    %382 = tpu.concatenate %380, %381 in 1 : vector<8x785xf32>, vector<8x239xf32> -> vector<8x1024xf32>
    %383 = arith.andi %12, %14 : vector<8x1024xi1>
    %384 = arith.andi %383, %18 : vector<8x1024xi1>
    %c0_i32_124 = arith.constant 0 : i32
    %385 = arith.sitofp %c0_i32_124 : i32 to f32
    %386 = vector.broadcast %385 : f32 to vector<8x1024xf32>
    %387 = arith.select %384, %382, %386 : vector<8x1024xi1>, vector<8x1024xf32>
    %c144_125 = arith.constant 144 : index
    %c0_126 = arith.constant 0 : index
    %388 = vector.load %arg8[%c144_125, %c0_126] : memref<216x1024xf32, #tpu.memory_space<vmem>>, vector<8x1024xf32>
    tpu.vector_store %arg8[%c144_125, %c0_126], %387 {strides = array<i32>} : memref<216x1024xf32, #tpu.memory_space<vmem>>, vector<8x1024xf32>,
    %389 = vector.extract_strided_slice %243 {offsets = [0, 240], sizes = [8, 784], strides = [1, 1]} : vector<8x1024xf32> to vector<8x784xf32>
    %390 = vector.extract_strided_slice %243 {offsets = [0, 0], sizes = [8, 240], strides = [1, 1]} : vector<8x1024xf32> to vector<8x240xf32>
    %391 = tpu.concatenate %389, %390 in 1 : vector<8x784xf32>, vector<8x240xf32> -> vector<8x1024xf32>
    %392 = arith.andi %12, %14 : vector<8x1024xi1>
    %c0_i32_127 = arith.constant 0 : i32
    %393 = arith.sitofp %c0_i32_127 : i32 to f32
    %394 = vector.broadcast %393 : f32 to vector<8x1024xf32>
    %395 = arith.select %392, %391, %394 : vector<8x1024xi1>, vector<8x1024xf32>
    %c152_128 = arith.constant 152 : index
    %c0_129 = arith.constant 0 : index
    %396 = vector.load %arg8[%c152_128, %c0_129] : memref<216x1024xf32, #tpu.memory_space<vmem>>, vector<8x1024xf32>
    tpu.vector_store %arg8[%c152_128, %c0_129], %395 {strides = array<i32>} : memref<216x1024xf32, #tpu.memory_space<vmem>>, vector<8x1024xf32>,
    %397 = vector.extract_strided_slice %243 {offsets = [0, 241], sizes = [8, 783], strides = [1, 1]} : vector<8x1024xf32> to vector<8x783xf32>
    %398 = vector.extract_strided_slice %243 {offsets = [0, 0], sizes = [8, 241], strides = [1, 1]} : vector<8x1024xf32> to vector<8x241xf32>
    %399 = tpu.concatenate %397, %398 in 1 : vector<8x783xf32>, vector<8x241xf32> -> vector<8x1024xf32>
    %400 = arith.andi %12, %14 : vector<8x1024xi1>
    %401 = arith.andi %400, %20 : vector<8x1024xi1>
    %c0_i32_130 = arith.constant 0 : i32
    %402 = arith.sitofp %c0_i32_130 : i32 to f32
    %403 = vector.broadcast %402 : f32 to vector<8x1024xf32>
    %404 = arith.select %401, %399, %403 : vector<8x1024xi1>, vector<8x1024xf32>
    %c160_131 = arith.constant 160 : index
    %c0_132 = arith.constant 0 : index
    %405 = vector.load %arg8[%c160_131, %c0_132] : memref<216x1024xf32, #tpu.memory_space<vmem>>, vector<8x1024xf32>
    tpu.vector_store %arg8[%c160_131, %c0_132], %404 {strides = array<i32>} : memref<216x1024xf32, #tpu.memory_space<vmem>>, vector<8x1024xf32>,
    %406 = vector.extract_strided_slice %243 {offsets = [0, 255], sizes = [8, 769], strides = [1, 1]} : vector<8x1024xf32> to vector<8x769xf32>
    %407 = vector.extract_strided_slice %243 {offsets = [0, 0], sizes = [8, 255], strides = [1, 1]} : vector<8x1024xf32> to vector<8x255xf32>
    %408 = tpu.concatenate %406, %407 in 1 : vector<8x769xf32>, vector<8x255xf32> -> vector<8x1024xf32>
    %409 = arith.andi %12, %18 : vector<8x1024xi1>
    %c0_i32_133 = arith.constant 0 : i32
    %410 = arith.sitofp %c0_i32_133 : i32 to f32
    %411 = vector.broadcast %410 : f32 to vector<8x1024xf32>
    %412 = arith.select %409, %408, %411 : vector<8x1024xi1>, vector<8x1024xf32>
    %c168_134 = arith.constant 168 : index
    %c0_135 = arith.constant 0 : index
    %413 = vector.load %arg8[%c168_134, %c0_135] : memref<216x1024xf32, #tpu.memory_space<vmem>>, vector<8x1024xf32>
    tpu.vector_store %arg8[%c168_134, %c0_135], %412 {strides = array<i32>} : memref<216x1024xf32, #tpu.memory_space<vmem>>, vector<8x1024xf32>,
    %414 = vector.extract_strided_slice %243 {offsets = [0, 256], sizes = [8, 768], strides = [1, 1]} : vector<8x1024xf32> to vector<8x768xf32>
    %415 = vector.extract_strided_slice %243 {offsets = [0, 0], sizes = [8, 256], strides = [1, 1]} : vector<8x1024xf32> to vector<8x256xf32>
    %416 = tpu.concatenate %414, %415 in 1 : vector<8x768xf32>, vector<8x256xf32> -> vector<8x1024xf32>
    %c0_i32_136 = arith.constant 0 : i32
    %417 = arith.sitofp %c0_i32_136 : i32 to f32
    %418 = vector.broadcast %417 : f32 to vector<8x1024xf32>
    %419 = arith.select %12, %416, %418 : vector<8x1024xi1>, vector<8x1024xf32>
    %c176_137 = arith.constant 176 : index
    %c0_138 = arith.constant 0 : index
    %420 = vector.load %arg8[%c176_137, %c0_138] : memref<216x1024xf32, #tpu.memory_space<vmem>>, vector<8x1024xf32>
    tpu.vector_store %arg8[%c176_137, %c0_138], %419 {strides = array<i32>} : memref<216x1024xf32, #tpu.memory_space<vmem>>, vector<8x1024xf32>,
    %421 = vector.extract_strided_slice %243 {offsets = [0, 257], sizes = [8, 767], strides = [1, 1]} : vector<8x1024xf32> to vector<8x767xf32>
    %422 = vector.extract_strided_slice %243 {offsets = [0, 0], sizes = [8, 257], strides = [1, 1]} : vector<8x1024xf32> to vector<8x257xf32>
    %423 = tpu.concatenate %421, %422 in 1 : vector<8x767xf32>, vector<8x257xf32> -> vector<8x1024xf32>
    %424 = arith.andi %12, %20 : vector<8x1024xi1>
    %c0_i32_139 = arith.constant 0 : i32
    %425 = arith.sitofp %c0_i32_139 : i32 to f32
    %426 = vector.broadcast %425 : f32 to vector<8x1024xf32>
    %427 = arith.select %424, %423, %426 : vector<8x1024xi1>, vector<8x1024xf32>
    %c184_140 = arith.constant 184 : index
    %c0_141 = arith.constant 0 : index
    %428 = vector.load %arg8[%c184_140, %c0_141] : memref<216x1024xf32, #tpu.memory_space<vmem>>, vector<8x1024xf32>
    tpu.vector_store %arg8[%c184_140, %c0_141], %427 {strides = array<i32>} : memref<216x1024xf32, #tpu.memory_space<vmem>>, vector<8x1024xf32>,
    %429 = vector.extract_strided_slice %243 {offsets = [0, 271], sizes = [8, 753], strides = [1, 1]} : vector<8x1024xf32> to vector<8x753xf32>
    %430 = vector.extract_strided_slice %243 {offsets = [0, 0], sizes = [8, 271], strides = [1, 1]} : vector<8x1024xf32> to vector<8x271xf32>
    %431 = tpu.concatenate %429, %430 in 1 : vector<8x753xf32>, vector<8x271xf32> -> vector<8x1024xf32>
    %432 = arith.andi %12, %16 : vector<8x1024xi1>
    %433 = arith.andi %432, %18 : vector<8x1024xi1>
    %c0_i32_142 = arith.constant 0 : i32
    %434 = arith.sitofp %c0_i32_142 : i32 to f32
    %435 = vector.broadcast %434 : f32 to vector<8x1024xf32>
    %436 = arith.select %433, %431, %435 : vector<8x1024xi1>, vector<8x1024xf32>
    %c192_143 = arith.constant 192 : index
    %c0_144 = arith.constant 0 : index
    %437 = vector.load %arg8[%c192_143, %c0_144] : memref<216x1024xf32, #tpu.memory_space<vmem>>, vector<8x1024xf32>
    tpu.vector_store %arg8[%c192_143, %c0_144], %436 {strides = array<i32>} : memref<216x1024xf32, #tpu.memory_space<vmem>>, vector<8x1024xf32>,
    %438 = vector.extract_strided_slice %243 {offsets = [0, 272], sizes = [8, 752], strides = [1, 1]} : vector<8x1024xf32> to vector<8x752xf32>
    %439 = vector.extract_strided_slice %243 {offsets = [0, 0], sizes = [8, 272], strides = [1, 1]} : vector<8x1024xf32> to vector<8x272xf32>
    %440 = tpu.concatenate %438, %439 in 1 : vector<8x752xf32>, vector<8x272xf32> -> vector<8x1024xf32>
    %441 = arith.andi %12, %16 : vector<8x1024xi1>
    %c0_i32_145 = arith.constant 0 : i32
    %442 = arith.sitofp %c0_i32_145 : i32 to f32
    %443 = vector.broadcast %442 : f32 to vector<8x1024xf32>
    %444 = arith.select %441, %440, %443 : vector<8x1024xi1>, vector<8x1024xf32>
    %c200_146 = arith.constant 200 : index
    %c0_147 = arith.constant 0 : index
    %445 = vector.load %arg8[%c200_146, %c0_147] : memref<216x1024xf32, #tpu.memory_space<vmem>>, vector<8x1024xf32>
    tpu.vector_store %arg8[%c200_146, %c0_147], %444 {strides = array<i32>} : memref<216x1024xf32, #tpu.memory_space<vmem>>, vector<8x1024xf32>,
    %446 = vector.extract_strided_slice %243 {offsets = [0, 273], sizes = [8, 751], strides = [1, 1]} : vector<8x1024xf32> to vector<8x751xf32>
    %447 = vector.extract_strided_slice %243 {offsets = [0, 0], sizes = [8, 273], strides = [1, 1]} : vector<8x1024xf32> to vector<8x273xf32>
    %448 = tpu.concatenate %446, %447 in 1 : vector<8x751xf32>, vector<8x273xf32> -> vector<8x1024xf32>
    %449 = arith.andi %12, %16 : vector<8x1024xi1>
    %450 = arith.andi %449, %20 : vector<8x1024xi1>
    %c0_i32_148 = arith.constant 0 : i32
    %451 = arith.sitofp %c0_i32_148 : i32 to f32
    %452 = vector.broadcast %451 : f32 to vector<8x1024xf32>
    %453 = arith.select %450, %448, %452 : vector<8x1024xi1>, vector<8x1024xf32>
    %c208_149 = arith.constant 208 : index
    %c0_150 = arith.constant 0 : index
    %454 = vector.load %arg8[%c208_149, %c0_150] : memref<216x1024xf32, #tpu.memory_space<vmem>>, vector<8x1024xf32>
    tpu.vector_store %arg8[%c208_149, %c0_150], %453 {strides = array<i32>} : memref<216x1024xf32, #tpu.memory_space<vmem>>, vector<8x1024xf32>,
    %c0_151 = arith.constant 0 : index
    %c0_152 = arith.constant 0 : index
    %455 = vector.load %arg4[%c0_151, %c0_152] : memref<8x216xf32, #tpu.memory_space<vmem>>, vector<8x216xf32>
    %c0_153 = arith.constant 0 : index
    %c0_154 = arith.constant 0 : index
    %456 = vector.load %arg8[%c0_153, %c0_154] : memref<216x1024xf32, #tpu.memory_space<vmem>>, vector<216x1024xf32>
    %cst_155 = arith.constant dense<0.000000e+00> : vector<8x1024xf32>
    %457 = tpu.matmul %455, %456, %cst_155 {dimension_numbers = #tpu.dot_dimension_numbers<[1], [0], [0], [1], [0, 0, 1, 1], [], []>} : vector<8x216xf32>, vector<216x1024xf32>, vector<8x1024xf32> -> vector<8x1024xf32>
    %c0_156 = arith.constant 0 : index
    %c0_157 = arith.constant 0 : index
    %458 = vector.load %arg5[%c0_156, %c0_157] : memref<8x1xf32, #tpu.memory_space<vmem>>, vector<8x1xf32>
    %459 = vector.broadcast %458 : vector<8x1xf32> to vector<8x1024xf32>
    %460 = arith.addf %457, %459 : vector<8x1024xf32>
    %c0_158 = arith.constant 0 : index
    %c0_159 = arith.constant 0 : index
    %c0_160 = arith.constant 0 : index
    %461 = vector.load %arg1[%c0_158, %c0_159, %c0_160] : memref<1x8x1024xf32, #tpu.memory_space<vmem>>, vector<1x8x1024xf32>
    %462 = vector.shape_cast %461 : vector<1x8x1024xf32> to vector<8x1024xf32>
    %463 = arith.addf %460, %462 : vector<8x1024xf32>
    %cst_161 = arith.constant 0.000000e+00 : f32
    %464 = vector.broadcast %cst_161 : f32 to vector<8x1024xf32>
    %465 = arith.maximumf %463, %464 : vector<8x1024xf32>
    %466 = vector.shape_cast %465 : vector<8x1024xf32> to vector<1x8x1024xf32>
    %c0_162 = arith.constant 0 : index
    %c0_163 = arith.constant 0 : index
    %c0_164 = arith.constant 0 : index
    %467 = vector.load %arg6[%c0_162, %c0_163, %c0_164] : memref<1x8x1024xf32, #tpu.memory_space<vmem>>, vector<1x8x1024xf32>
    tpu.vector_store %arg6[%c0_162, %c0_163, %c0_164], %466 {strides = array<i32>} : memref<1x8x1024xf32, #tpu.memory_space<vmem>>, vector<1x8x1024xf32>,
    return
  }
  func.func @transform_0(%arg0: i32) -> (i32, i32, i32) {
    %c0_i32 = arith.constant 0 : i32
    %c0_i32_0 = arith.constant 0 : i32
    %c0_i32_1 = arith.constant 0 : i32
    return %arg0, %c0_i32, %c0_i32_0 : i32, i32, i32
  }
  func.func @transform_1(%arg0: i32) -> (i32, i32) {
    %c0_i32 = arith.constant 0 : i32
    %c0_i32_0 = arith.constant 0 : i32
    %c0_i32_1 = arith.constant 0 : i32
    return %c0_i32, %c0_i32_0 : i32, i32
  }
  func.func @transform_2(%arg0: i32) -> (i32, i32) {
    %c0_i32 = arith.constant 0 : i32
    %c0_i32_0 = arith.constant 0 : i32
    %c0_i32_1 = arith.constant 0 : i32
    return %c0_i32, %c0_i32_0 : i32, i32
  }
  func.func @transform_3(%arg0: i32) -> (i32, i32) {
    %c0_i32 = arith.constant 0 : i32
    %c0_i32_0 = arith.constant 0 : i32
    %c0_i32_1 = arith.constant 0 : i32
    return %c0_i32, %c0_i32_0 : i32, i32
  }
  func.func @transform_4(%arg0: i32) -> (i32, i32) {
    %c0_i32 = arith.constant 0 : i32
    %c0_i32_0 = arith.constant 0 : i32
    %c0_i32_1 = arith.constant 0 : i32
    return %c0_i32, %c0_i32_0 : i32, i32
  }
  func.func @transform_5(%arg0: i32) -> (i32, i32, i32) {
    %c0_i32 = arith.constant 0 : i32
    %c0_i32_0 = arith.constant 0 : i32
    %c0_i32_1 = arith.constant 0 : i32
    return %arg0, %c0_i32, %c0_i32_0 : i32, i32, i32
  }
}

</mosaic_0001>

<llo_original>
// kernel: basic_block_3d_forward.1
$region0: #{basic_block_3d_forward.1}
  #allocation0 [shape = 'u32[]', space=smem, size = 0x4, offset = 0x4, fixed_abs, tag = 'smem constant byte address 0x4 - core index']
  #allocation1 [shape = 'u32[72,128]{1,0:T(1,128)}', space=vmem, size = 0x9000, scoped, tag = 'internal scratch']
  #allocation2 [shape = 'f32[8,1024]{1,0:T(8,128)}', space=vmem, size = 0x8000, scoped, tag = 'scratch operand']
  #allocation3 [shape = 'f32[216,1024]{1,0:T(8,128)}', space=vmem, size = 0xd8000, scoped, tag = 'scratch operand']
  %s0 = inlined_call_operand.vmem [shape: f32[2,8,1024], index: 0, kind: input, shape index: {}]
  %s1 = inlined_call_operand.vmem [shape: f32[8,216], index: 1, kind: input, shape index: {}]
  %s2 = inlined_call_operand.vmem [shape: f32[8,1], index: 2, kind: input, shape index: {}]
  %s3 = inlined_call_operand.vmem [shape: f32[8,216], index: 3, kind: input, shape index: {}]
  %s4 = inlined_call_operand.vmem [shape: f32[8,1], index: 4, kind: input, shape index: {}]
  %s5 = inlined_call_operand.vmem [shape: f32[2,8,1024], index: 5, kind: output, shape index: {}]
  %s6 = sld [smem:[#allocation0]]
  $region53: #{basic_block_3d_forward.1} parent=0
    _
  %s8 = ssub.s32 1, %s6
  %s9 = scalar_select 0, %s8, %s6
  loop: start=0, step=1, limit=4
  $region2: #{basic_block_3d_forward.1} parent=0 // loop_pre_header
    _
  $region3: #{basic_block_3d_forward.1} parent=0 // loop_header
    %s11 = sphi 0, %s15
    %p12 = scmp.ge.s32.totalorder %s11, 4
    %s21 = sphi 0, %s23
    %s24 = sphi 0, %s21
    %s25 = sphi 0, %s24
    %s41 = sphi 0, %s25
    %s45 = sphi 0, %s45
    %s47 = sphi 0, %s45
    %s48 = sphi 0, %s47
    %s62 = sphi 0, %s48
    %s66 = sphi 0, %s66
    %s68 = sphi 0, %s66
    %s69 = sphi 0, %s68
    %s83 = sphi 0, %s69
    %s87 = sphi 0, %s87
    %s89 = sphi 0, %s87
    %s90 = sphi 0, %s89
    %s104 = sphi 0, %s90
    %s108 = sphi 0, %s108
    %s110 = sphi 0, %s108
    %s111 = sphi 0, %s110
    %s125 = sphi 0, %s111
    %s131 = sphi 0, %s133
    %s134 = sphi 0, %s131
    %s135 = sphi 0, %s134
    %s151 = sphi 0, %s135
  $region4: #{basic_block_3d_forward.1} parent=0 // loop_header_branch
    %14 = sbr.rel (%p12) target = $region8
  $region5: #{basic_block_3d_forward.1} parent=0 // loop_body
    %s16 = ssub.s32 %s11, 1
    %s17 = ssub.s32 %s11, 2
    %s18 = sadd.s32 %s11, 1
    %s19 = ssub.s32 %s11, %s18
    %p20 = scmp.eq.s32.totalorder %s19, 0
    %s22 = sadd.s32 %s21, 1
    %s23 = scalar_select %p20, %s21, %s22
    %p26 = pneg %p20
    %p27 = scmp.eq.s32.totalorder %s11, 1
    %p28 = por %p26, %p27
    %p29 = scmp.ne.s32.totalorder %s21, %s24
    %p30 = scmp.eq.s32.totalorder %s11, 0
    %p31 = por %p29, %p30
    %p32 = scmp.ne.s32.totalorder %s21, %s24
    %p33 = scmp.eq.s32.totalorder %s16, 1
    %p34 = por %p32, %p33
    %p35 = scmp.ne.s32.totalorder %s24, %s25
    %p36 = scmp.eq.s32.totalorder %s16, 0
    %p37 = por %p35, %p36
    %p38 = scmp.ne.s32.totalorder %s24, %s25
    %p39 = scmp.eq.s32.totalorder %s17, 1
    %p40 = por %p38, %p39
    %p42 = scmp.ne.s32.totalorder %s25, %s41
    %p43 = scmp.eq.s32.totalorder %s17, 0
    %p44 = por %p42, %p43
    %s46 = sadd.s32 %s45, 1
    %p49 = scmp.eq.s32.totalorder %s11, 1
    %p50 = scmp.ne.s32.totalorder %s45, %s47
    %p51 = scmp.eq.s32.totalorder %s11, 0
    %p52 = por %p50, %p51
    %p53 = scmp.ne.s32.totalorder %s45, %s47
    %p54 = scmp.eq.s32.totalorder %s16, 1
    %p55 = por %p53, %p54
    %p56 = scmp.ne.s32.totalorder %s47, %s48
    %p57 = scmp.eq.s32.totalorder %s16, 0
    %p58 = por %p56, %p57
    %p59 = scmp.ne.s32.totalorder %s47, %s48
    %p60 = scmp.eq.s32.totalorder %s17, 1
    %p61 = por %p59, %p60
    %p63 = scmp.ne.s32.totalorder %s48, %s62
    %p64 = scmp.eq.s32.totalorder %s17, 0
    %p65 = por %p63, %p64
    %s67 = sadd.s32 %s66, 1
    %p70 = scmp.eq.s32.totalorder %s11, 1
    %p71 = scmp.ne.s32.totalorder %s66, %s68
    %p72 = scmp.eq.s32.totalorder %s11, 0
    %p73 = por %p71, %p72
    %p74 = scmp.ne.s32.totalorder %s66, %s68
    %p75 = scmp.eq.s32.totalorder %s16, 1
    %p76 = por %p74, %p75
    %p77 = scmp.ne.s32.totalorder %s68, %s69
    %p78 = scmp.eq.s32.totalorder %s16, 0
    %p79 = por %p77, %p78
    %p80 = scmp.ne.s32.totalorder %s68, %s69
    %p81 = scmp.eq.s32.totalorder %s17, 1
    %p82 = por %p80, %p81
    %p84 = scmp.ne.s32.totalorder %s69, %s83
    %p85 = scmp.eq.s32.totalorder %s17, 0
    %p86 = por %p84, %p85
    %s88 = sadd.s32 %s87, 1
    %p91 = scmp.eq.s32.totalorder %s11, 1
    %p92 = scmp.ne.s32.totalorder %s87, %s89
    %p93 = scmp.eq.s32.totalorder %s11, 0
    %p94 = por %p92, %p93
    %p95 = scmp.ne.s32.totalorder %s87, %s89
    %p96 = scmp.eq.s32.totalorder %s16, 1
    %p97 = por %p95, %p96
    %p98 = scmp.ne.s32.totalorder %s89, %s90
    %p99 = scmp.eq.s32.totalorder %s16, 0
    %p100 = por %p98, %p99
    %p101 = scmp.ne.s32.totalorder %s89, %s90
    %p102 = scmp.eq.s32.totalorder %s17, 1
    %p103 = por %p101, %p102
    %p105 = scmp.ne.s32.totalorder %s90, %s104
    %p106 = scmp.eq.s32.totalorder %s17, 0
    %p107 = por %p105, %p106
    %s109 = sadd.s32 %s108, 1
    %p112 = scmp.eq.s32.totalorder %s11, 1
    %p113 = scmp.ne.s32.totalorder %s108, %s110
    %p114 = scmp.eq.s32.totalorder %s11, 0
    %p115 = por %p113, %p114
    %p116 = scmp.ne.s32.totalorder %s108, %s110
    %p117 = scmp.eq.s32.totalorder %s16, 1
    %p118 = por %p116, %p117
    %p119 = scmp.ne.s32.totalorder %s110, %s111
    %p120 = scmp.eq.s32.totalorder %s16, 0
    %p121 = por %p119, %p120
    %p122 = scmp.ne.s32.totalorder %s110, %s111
    %p123 = scmp.eq.s32.totalorder %s17, 1
    %p124 = por %p122, %p123
    %p126 = scmp.ne.s32.totalorder %s111, %s125
    %p127 = scmp.eq.s32.totalorder %s17, 0
    %p128 = por %p126, %p127
    %s129 = ssub.s32 %s11, %s18
    %p130 = scmp.eq.s32.totalorder %s129, 0
    %s132 = sadd.s32 %s131, 1
    %s133 = scalar_select %p130, %s131, %s132
    %p136 = pneg %p130
    %p137 = scmp.eq.s32.totalorder %s11, 1
    %p138 = por %p136, %p137
    %p139 = scmp.ne.s32.totalorder %s131, %s134
    %p140 = scmp.eq.s32.totalorder %s11, 0
    %p141 = por %p139, %p140
    %p142 = scmp.ne.s32.totalorder %s131, %s134
    %p143 = scmp.eq.s32.totalorder %s16, 1
    %p144 = por %p142, %p143
    %p145 = scmp.ne.s32.totalorder %s134, %s135
    %p146 = scmp.eq.s32.totalorder %s16, 0
    %p147 = por %p145, %p146
    %p148 = scmp.ne.s32.totalorder %s134, %s135
    %p149 = scmp.eq.s32.totalorder %s17, 1
    %p150 = por %p148, %p149
    %p152 = scmp.ne.s32.totalorder %s135, %s151
    %p153 = scmp.eq.s32.totalorder %s17, 0
    %p154 = por %p152, %p153
    %p155 = scmp.le.s32.totalorder 1, %s11
    %p156 = scmp.lt.s32.totalorder %s11, 3
    %p157 = pnand %p155, %p156
    %p158 = pneg %p157
    // Predicated region
    $region9: #{basic_block_3d_forward.1} parent=5 // pred_check
      _
    $region10: #{basic_block_3d_forward.1} parent=5 // pred_check_branch
      %160 = sbr.rel (%p157) target = $region12
    $region11: #{basic_block_3d_forward.1} parent=5 // pred_region
      %s161 = ssub.s32 %s11, 1
      // Predicated region
      $region13: #{basic_block_3d_forward.1} parent=11 // pred_check
        %p162 = pneg %p58
      $region14: #{basic_block_3d_forward.1} parent=11 // pred_check_branch
        %164 = sbr.rel (%p162) target = $region16
      $region15: #{basic_block_3d_forward.1} parent=11 // pred_region
        _
      $region16: #{basic_block_3d_forward.1} parent=11 // pred_fallthru
        _
      // Predicated region
      $region17: #{basic_block_3d_forward.1} parent=11 // pred_check
        %p165 = pneg %p79
      $region18: #{basic_block_3d_forward.1} parent=11 // pred_check_branch
        %167 = sbr.rel (%p165) target = $region20
      $region19: #{basic_block_3d_forward.1} parent=11 // pred_region
        _
      $region20: #{basic_block_3d_forward.1} parent=11 // pred_fallthru
        _
      // Predicated region
      $region21: #{basic_block_3d_forward.1} parent=11 // pred_check
        %p168 = pneg %p100
      $region22: #{basic_block_3d_forward.1} parent=11 // pred_check_branch
        %170 = sbr.rel (%p168) target = $region24
      $region23: #{basic_block_3d_forward.1} parent=11 // pred_region
        _
      $region24: #{basic_block_3d_forward.1} parent=11 // pred_fallthru
        _
      // Predicated region
      $region25: #{basic_block_3d_forward.1} parent=11 // pred_check
        %p171 = pneg %p121
      $region26: #{basic_block_3d_forward.1} parent=11 // pred_check_branch
        %173 = sbr.rel (%p171) target = $region28
      $region27: #{basic_block_3d_forward.1} parent=11 // pred_region
        _
      $region28: #{basic_block_3d_forward.1} parent=11 // pred_fallthru
        _
    $region12: #{basic_block_3d_forward.1} parent=5 // pred_fallthru
      _
    %p174 = scmp.lt.s32.totalorder %s11, 2
    // Predicated region
    $region29: #{basic_block_3d_forward.1} parent=5 // pred_check
      %p175 = pneg %p174
    $region30: #{basic_block_3d_forward.1} parent=5 // pred_check_branch
      %177 = sbr.rel (%p175) target = $region32
    $region31: #{basic_block_3d_forward.1} parent=5 // pred_region
      // Predicated region
      $region33: #{basic_block_3d_forward.1} parent=31 // pred_check
        %p178 = pneg %p31
      $region34: #{basic_block_3d_forward.1} parent=31 // pred_check_branch
        %180 = sbr.rel (%p178) target = $region36
      $region35: #{basic_block_3d_forward.1} parent=31 // pred_region
        %p181 = scmp.lt.s32.totalorder %s11, 1
        %s182 = scalar_select %p181, %s11, 1
        %s183 = smul.addr %s182, 8
        %s184 = smul.addr %s183, 8
        %s185 = scalar_lea.vmem %s0, %s184
      $region36: #{basic_block_3d_forward.1} parent=31 // pred_fallthru
        _
    $region32: #{basic_block_3d_forward.1} parent=5 // pred_fallthru
      _
    %p186 = scmp.le.s32.totalorder 1, %s11
    %p187 = scmp.lt.s32.totalorder %s11, 3
    %p188 = pnand %p186, %p187
    %p189 = pneg %p188
    // Predicated region
    $region37: #{basic_block_3d_forward.1} parent=5 // pred_check
      _
    $region38: #{basic_block_3d_forward.1} parent=5 // pred_check_branch
      %191 = sbr.rel (%p188) target = $region40
    $region39: #{basic_block_3d_forward.1} parent=5 // pred_region
      %s192 = ssub.s32 %s11, 1
      %p193 = scmp.lt.s32.totalorder %s16, 1
      %s194 = scalar_select %p193, %s16, 1
      %s195 = smul.addr %s194, 8
      %s196 = smul.addr %s195, 8
      %s197 = scalar_lea.vmem %s0, %s196
      %p198 = pneg %p37
      %p199 = pneg %p34
      %p200 = pneg %p58
      %p201 = pneg %p55
      %p202 = pneg %p79
      %p203 = pneg %p76
      %p204 = pneg %p100
      %p205 = pneg %p97
      %p206 = pneg %p121
      %p207 = pneg %p118
      %p208 = pneg %p147
      %p209 = pneg %p144
      %p210 = scmp.lt.s32.totalorder %s16, 1
      %s211 = scalar_select %p210, %s16, 1
      %s212 = smul.addr %s211, 8
      %s213 = smul.addr %s212, 8
      %s214 = scalar_lea.vmem %s5, %s213
      %p215 = scmp.lt.s32.totalorder %s16, 1
      %s216 = scalar_select %p215, %s16, 1
      %s217 = smul.addr %s216, 8
      %s218 = smul.addr %s217, 8
      %s219 = scalar_lea.vmem %s0, %s218
      %p220 = scmp.lt.s32.totalorder %s16, 1
      %s221 = scalar_select %p220, %s16, 1
      %s222 = smul.addr %s221, 8
      %s223 = smul.addr %s222, 8
      %s224 = scalar_lea.vmem %s5, %s223
      %v225 = vlaneseq
      %v226 = vand.u32 %v225, 127
      %v227 = vadd.s32 %v226, 128
      %v228 = vadd.s32 %v226, 256
      %v229 = vadd.s32 %v226, 384
      %v230 = vadd.s32 %v226, 512
      %v231 = vadd.s32 %v226, 640
      %v232 = vadd.s32 %v226, 768
      %v233 = vadd.s32 %v226, 896
      %v234 = vshra.s32 %v226, 8
      %v235 = vshra.s32 %v227, 8
      %v236 = vshra.s32 %v228, 8
      %v237 = vshra.s32 %v229, 8
      %v238 = vshra.s32 %v230, 8
      %v239 = vshra.s32 %v231, 8
      %v240 = vshra.s32 %v232, 8
      %v241 = vshra.s32 %v233, 8
      %v242 = vshra.s32 %v226, 4
      %v243 = vshra.s32 %v227, 4
      %v244 = vshra.s32 %v228, 4
      %v245 = vshra.s32 %v229, 4
      %v246 = vshra.s32 %v230, 4
      %v247 = vshra.s32 %v231, 4
      %v248 = vshra.s32 %v232, 4
      %v249 = vshra.s32 %v233, 4
      %v250 = vand.u32 %v242, 15
      %v251 = vand.u32 %v243, 15
      %v252 = vand.u32 %v244, 15
      %v253 = vand.u32 %v245, 15
      %v254 = vand.u32 %v246, 15
      %v255 = vand.u32 %v247, 15
      %v256 = vand.u32 %v248, 15
      %v257 = vand.u32 %v249, 15
      %v258 = vand.u32 %v226, 15
      %v259 = vand.u32 %v227, 15
      %v260 = vand.u32 %v228, 15
      %v261 = vand.u32 %v229, 15
      %v262 = vand.u32 %v230, 15
      %v263 = vand.u32 %v231, 15
      %v264 = vand.u32 %v232, 15
      %v265 = vand.u32 %v233, 15
      %vm266 = vcmp.ge.s32.totalorder %v234, 1
      %vm267 = vcmp.ge.s32.totalorder %v235, 1
      %vm268 = vcmp.ge.s32.totalorder %v236, 1
      %vm269 = vcmp.ge.s32.totalorder %v237, 1
      %vm270 = vcmp.ge.s32.totalorder %v238, 1
      %vm271 = vcmp.ge.s32.totalorder %v239, 1
      %vm272 = vcmp.ge.s32.totalorder %v240, 1
      %vm273 = vcmp.ge.s32.totalorder %v241, 1
      %vm274 = vcmp.lt.s32.totalorder %v234, 3
      %vm275 = vcmp.lt.s32.totalorder %v235, 3
      %vm276 = vcmp.lt.s32.totalorder %v236, 3
      %vm277 = vcmp.lt.s32.totalorder %v237, 3
      %vm278 = vcmp.lt.s32.totalorder %v238, 3
      %vm279 = vcmp.lt.s32.totalorder %v239, 3
      %vm280 = vcmp.lt.s32.totalorder %v240, 3
      %vm281 = vcmp.lt.s32.totalorder %v241, 3
      %vm282 = vcmp.ge.s32.totalorder %v250, 1
      %vm283 = vcmp.ge.s32.totalorder %v251, 1
      %vm284 = vcmp.ge.s32.totalorder %v252, 1
      %vm285 = vcmp.ge.s32.totalorder %v253, 1
      %vm286 = vcmp.ge.s32.totalorder %v254, 1
      %vm287 = vcmp.ge.s32.totalorder %v255, 1
      %vm288 = vcmp.ge.s32.totalorder %v256, 1
      %vm289 = vcmp.ge.s32.totalorder %v257, 1
      %vm290 = vcmp.lt.s32.totalorder %v250, 15
      %vm291 = vcmp.lt.s32.totalorder %v251, 15
      %vm292 = vcmp.lt.s32.totalorder %v252, 15
      %vm293 = vcmp.lt.s32.totalorder %v253, 15
      %vm294 = vcmp.lt.s32.totalorder %v254, 15
      %vm295 = vcmp.lt.s32.totalorder %v255, 15
      %vm296 = vcmp.lt.s32.totalorder %v256, 15
      %vm297 = vcmp.lt.s32.totalorder %v257, 15
      %vm298 = vcmp.ge.s32.totalorder %v258, 1
      %vm299 = vcmp.ge.s32.totalorder %v259, 1
      %vm300 = vcmp.ge.s32.totalorder %v260, 1
      %vm301 = vcmp.ge.s32.totalorder %v261, 1
      %vm302 = vcmp.ge.s32.totalorder %v262, 1
      %vm303 = vcmp.ge.s32.totalorder %v263, 1
      %vm304 = vcmp.ge.s32.totalorder %v264, 1
      %vm305 = vcmp.ge.s32.totalorder %v265, 1
      %vm306 = vcmp.lt.s32.totalorder %v258, 15
      %vm307 = vcmp.lt.s32.totalorder %v259, 15
      %vm308 = vcmp.lt.s32.totalorder %v260, 15
      %vm309 = vcmp.lt.s32.totalorder %v261, 15
      %vm310 = vcmp.lt.s32.totalorder %v262, 15
      %vm311 = vcmp.lt.s32.totalorder %v263, 15
      %vm312 = vcmp.lt.s32.totalorder %v264, 15
      %vm313 = vcmp.lt.s32.totalorder %v265, 15
      %v314 = vld [vmem:[%s219] sm:$0xff]
      %v315 = vld [vmem:[%s219 + $0x8] sm:$0xff]
      %v316 = vld [vmem:[%s219 + $0x10] sm:$0xff]
      %v317 = vld [vmem:[%s219 + $0x18] sm:$0xff]
      %v318 = vld [vmem:[%s219 + $0x20] sm:$0xff]
      %v319 = vld [vmem:[%s219 + $0x28] sm:$0xff]
      %v320 = vld [vmem:[%s219 + $0x30] sm:$0xff]
      %v321 = vld [vmem:[%s219 + $0x38] sm:$0xff]
      %325 = vrot.lane.b32.xlu0 %v319, 17
      %v326 = vpop.permute.xlu0 %325
      %327 = vrot.lane.b32.xlu0 %v320, 17
      %v328 = vpop.permute.xlu0 %327
      %329 = vrot.lane.b32.xlu0 %v321, 17
      %v330 = vpop.permute.xlu0 %329
      %vm331 = vcmask 138240
      %v332 = vsel %vm331, %v326, %v328
      %v333 = vsel %vm331, %v328, %v330
      %342 = vrot.lane.b32.xlu0 %v314, 17
      %v343 = vpop.permute.xlu0 %342
      %344 = vrot.lane.b32.xlu0 %v315, 17
      %v345 = vpop.permute.xlu0 %344
      %346 = vrot.lane.b32.xlu0 %v316, 17
      %v347 = vpop.permute.xlu0 %346
      %348 = vrot.lane.b32.xlu0 %v317, 17
      %v349 = vpop.permute.xlu0 %348
      %350 = vrot.lane.b32.xlu0 %v318, 17
      %v351 = vpop.permute.xlu0 %350
      %v352 = vsel %vm331, %v343, %v345
      %v353 = vsel %vm331, %v345, %v347
      %v354 = vsel %vm331, %v347, %v349
      %v355 = vsel %vm331, %v349, %v351
      %v356 = vsel %vm331, %v351, %v326
      %v363 = vsel %vm331, %v330, %v343
      %vm364 = vmand %vm266, %vm282
      %vm365 = vmand %vm267, %vm283
      %vm366 = vmand %vm268, %vm284
      %vm367 = vmand %vm269, %vm285
      %vm368 = vmand %vm270, %vm286
      %vm369 = vmand %vm271, %vm287
      %vm370 = vmand %vm272, %vm288
      %vm371 = vmand %vm273, %vm289
      %vm372 = vmand %vm364, %vm298
      %vm373 = vmand %vm365, %vm299
      %vm374 = vmand %vm366, %vm300
      %vm375 = vmand %vm367, %vm301
      %vm376 = vmand %vm368, %vm302
      %vm377 = vmand %vm369, %vm303
      %vm378 = vmand %vm370, %vm304
      %vm379 = vmand %vm371, %vm305
      %v380 = vsel %vm372, %v332, 0.0
      %v381 = vsel %vm373, %v333, 0.0
      %v382 = vsel %vm374, %v363, 0.0
      %v383 = vsel %vm375, %v352, 0.0
      %v384 = vsel %vm376, %v353, 0.0
      %v385 = vsel %vm377, %v354, 0.0
      %v386 = vsel %vm378, %v355, 0.0
      %v387 = vsel %vm379, %v356, 0.0
      %388 = vst [vmem:[#allocation3] sm:$0xff] %v380
      %389 = vst [vmem:[#allocation3 + $0x8] sm:$0xff] %v381
      %390 = vst [vmem:[#allocation3 + $0x10] sm:$0xff] %v382
      %391 = vst [vmem:[#allocation3 + $0x18] sm:$0xff] %v383
      %392 = vst [vmem:[#allocation3 + $0x20] sm:$0xff] %v384
      %393 = vst [vmem:[#allocation3 + $0x28] sm:$0xff] %v385
      %394 = vst [vmem:[#allocation3 + $0x30] sm:$0xff] %v386
      %395 = vst [vmem:[#allocation3 + $0x38] sm:$0xff] %v387
      %396 = vrot.lane.b32.xlu0 %v319, 16
      %v397 = vpop.permute.xlu0 %396
      %398 = vrot.lane.b32.xlu0 %v320, 16
      %v399 = vpop.permute.xlu0 %398
      %400 = vrot.lane.b32.xlu0 %v321, 16
      %v401 = vpop.permute.xlu0 %400
      %vm402 = vcmask 130048
      %v403 = vsel %vm402, %v397, %v399
      %v404 = vsel %vm402, %v399, %v401
      %408 = vrot.lane.b32.xlu0 %v314, 16
      %v409 = vpop.permute.xlu0 %408
      %410 = vrot.lane.b32.xlu0 %v315, 16
      %v411 = vpop.permute.xlu0 %410
      %412 = vrot.lane.b32.xlu0 %v316, 16
      %v413 = vpop.permute.xlu0 %412
      %414 = vrot.lane.b32.xlu0 %v317, 16
      %v415 = vpop.permute.xlu0 %414
      %416 = vrot.lane.b32.xlu0 %v318, 16
      %v417 = vpop.permute.xlu0 %416
      %v418 = vsel %vm402, %v409, %v411
      %v419 = vsel %vm402, %v411, %v413
      %v420 = vsel %vm402, %v413, %v415
      %v421 = vsel %vm402, %v415, %v417
      %v422 = vsel %vm402, %v417, %v397
      %v429 = vsel %vm402, %v401, %v409
      %v430 = vsel %vm364, %v403, 0.0
      %v431 = vsel %vm365, %v404, 0.0
      %v432 = vsel %vm366, %v429, 0.0
      %v433 = vsel %vm367, %v418, 0.0
      %v434 = vsel %vm368, %v419, 0.0
      %v435 = vsel %vm369, %v420, 0.0
      %v436 = vsel %vm370, %v421, 0.0
      %v437 = vsel %vm371, %v422, 0.0
      %438 = vst [vmem:[#allocation3 + $0x40] sm:$0xff] %v430
      %439 = vst [vmem:[#allocation3 + $0x48] sm:$0xff] %v431
      %440 = vst [vmem:[#allocation3 + $0x50] sm:$0xff] %v432
      %441 = vst [vmem:[#allocation3 + $0x58] sm:$0xff] %v433
      %442 = vst [vmem:[#allocation3 + $0x60] sm:$0xff] %v434
      %443 = vst [vmem:[#allocation3 + $0x68] sm:$0xff] %v435
      %444 = vst [vmem:[#allocation3 + $0x70] sm:$0xff] %v436
      %445 = vst [vmem:[#allocation3 + $0x78] sm:$0xff] %v437
      %446 = vrot.lane.b32.xlu0 %v319, 15
      %v447 = vpop.permute.xlu0 %446
      %448 = vrot.lane.b32.xlu0 %v320, 15
      %v449 = vpop.permute.xlu0 %448
      %450 = vrot.lane.b32.xlu0 %v321, 15
      %v451 = vpop.permute.xlu0 %450
      %vm452 = vcmask 121856
      %v453 = vsel %vm452, %v447, %v449
      %v454 = vsel %vm452, %v449, %v451
      %458 = vrot.lane.b32.xlu0 %v314, 15
      %v459 = vpop.permute.xlu0 %458
      %460 = vrot.lane.b32.xlu0 %v315, 15
      %v461 = vpop.permute.xlu0 %460
      %462 = vrot.lane.b32.xlu0 %v316, 15
      %v463 = vpop.permute.xlu0 %462
      %464 = vrot.lane.b32.xlu0 %v317, 15
      %v465 = vpop.permute.xlu0 %464
      %466 = vrot.lane.b32.xlu0 %v318, 15
      %v467 = vpop.permute.xlu0 %466
      %v468 = vsel %vm452, %v459, %v461
      %v469 = vsel %vm452, %v461, %v463
      %v470 = vsel %vm452, %v463, %v465
      %v471 = vsel %vm452, %v465, %v467
      %v472 = vsel %vm452, %v467, %v447
      %v479 = vsel %vm452, %v451, %v459
      %vm480 = vmand %vm364, %vm306
      %vm481 = vmand %vm365, %vm307
      %vm482 = vmand %vm366, %vm308
      %vm483 = vmand %vm367, %vm309
      %vm484 = vmand %vm368, %vm310
      %vm485 = vmand %vm369, %vm311
      %vm486 = vmand %vm370, %vm312
      %vm487 = vmand %vm371, %vm313
      %v488 = vsel %vm480, %v453, 0.0
      %v489 = vsel %vm481, %v454, 0.0
      %v490 = vsel %vm482, %v479, 0.0
      %v491 = vsel %vm483, %v468, 0.0
      %v492 = vsel %vm484, %v469, 0.0
      %v493 = vsel %vm485, %v470, 0.0
      %v494 = vsel %vm486, %v471, 0.0
      %v495 = vsel %vm487, %v472, 0.0
      %496 = vst [vmem:[#allocation3 + $0x80] sm:$0xff] %v488
      %497 = vst [vmem:[#allocation3 + $0x88] sm:$0xff] %v489
      %498 = vst [vmem:[#allocation3 + $0x90] sm:$0xff] %v490
      %499 = vst [vmem:[#allocation3 + $0x98] sm:$0xff] %v491
      %500 = vst [vmem:[#allocation3 + $0xa0] sm:$0xff] %v492
      %501 = vst [vmem:[#allocation3 + $0xa8] sm:$0xff] %v493
      %502 = vst [vmem:[#allocation3 + $0xb0] sm:$0xff] %v494
      %503 = vst [vmem:[#allocation3 + $0xb8] sm:$0xff] %v495
      %504 = vrot.lane.b32.xlu0 %v319, 1
      %v505 = vpop.permute.xlu0 %504
      %506 = vrot.lane.b32.xlu0 %v320, 1
      %v507 = vpop.permute.xlu0 %506
      %508 = vrot.lane.b32.xlu0 %v321, 1
      %v509 = vpop.permute.xlu0 %508
      %vm510 = vcmask 7168
      %v511 = vsel %vm510, %v505, %v507
      %v512 = vsel %vm510, %v507, %v509
      %516 = vrot.lane.b32.xlu0 %v314, 1
      %v517 = vpop.permute.xlu0 %516
      %518 = vrot.lane.b32.xlu0 %v315, 1
      %v519 = vpop.permute.xlu0 %518
      %520 = vrot.lane.b32.xlu0 %v316, 1
      %v521 = vpop.permute.xlu0 %520
      %522 = vrot.lane.b32.xlu0 %v317, 1
      %v523 = vpop.permute.xlu0 %522
      %524 = vrot.lane.b32.xlu0 %v318, 1
      %v525 = vpop.permute.xlu0 %524
      %v526 = vsel %vm510, %v517, %v519
      %v527 = vsel %vm510, %v519, %v521
      %v528 = vsel %vm510, %v521, %v523
      %v529 = vsel %vm510, %v523, %v525
      %v530 = vsel %vm510, %v525, %v505
      %v537 = vsel %vm510, %v509, %v517
      %vm538 = vmand %vm266, %vm298
      %vm539 = vmand %vm267, %vm299
      %vm540 = vmand %vm268, %vm300
      %vm541 = vmand %vm269, %vm301
      %vm542 = vmand %vm270, %vm302
      %vm543 = vmand %vm271, %vm303
      %vm544 = vmand %vm272, %vm304
      %vm545 = vmand %vm273, %vm305
      %v546 = vsel %vm538, %v511, 0.0
      %v547 = vsel %vm539, %v512, 0.0
      %v548 = vsel %vm540, %v537, 0.0
      %v549 = vsel %vm541, %v526, 0.0
      %v550 = vsel %vm542, %v527, 0.0
      %v551 = vsel %vm543, %v528, 0.0
      %v552 = vsel %vm544, %v529, 0.0
      %v553 = vsel %vm545, %v530, 0.0
      %554 = vst [vmem:[#allocation3 + $0xc0] sm:$0xff] %v546
      %555 = vst [vmem:[#allocation3 + $0xc8] sm:$0xff] %v547
      %556 = vst [vmem:[#allocation3 + $0xd0] sm:$0xff] %v548
      %557 = vst [vmem:[#allocation3 + $0xd8] sm:$0xff] %v549
      %558 = vst [vmem:[#allocation3 + $0xe0] sm:$0xff] %v550
      %559 = vst [vmem:[#allocation3 + $0xe8] sm:$0xff] %v551
      %560 = vst [vmem:[#allocation3 + $0xf0] sm:$0xff] %v552
      %561 = vst [vmem:[#allocation3 + $0xf8] sm:$0xff] %v553
      %v562 = vsel %vm266, %v320, 0.0
      %v563 = vsel %vm267, %v321, 0.0
      %v564 = vsel %vm268, %v314, 0.0
      %v565 = vsel %vm269, %v315, 0.0
      %v566 = vsel %vm270, %v316, 0.0
      %v567 = vsel %vm271, %v317, 0.0
      %v568 = vsel %vm272, %v318, 0.0
      %v569 = vsel %vm273, %v319, 0.0
      %570 = vst [vmem:[#allocation3 + $0x100] sm:$0xff] %v562
      %571 = vst [vmem:[#allocation3 + $0x108] sm:$0xff] %v563
      %572 = vst [vmem:[#allocation3 + $0x110] sm:$0xff] %v564
      %573 = vst [vmem:[#allocation3 + $0x118] sm:$0xff] %v565
      %574 = vst [vmem:[#allocation3 + $0x120] sm:$0xff] %v566
      %575 = vst [vmem:[#allocation3 + $0x128] sm:$0xff] %v567
      %576 = vst [vmem:[#allocation3 + $0x130] sm:$0xff] %v568
      %577 = vst [vmem:[#allocation3 + $0x138] sm:$0xff] %v569
      %578 = vrot.lane.b32.xlu0 %v320, 127
      %v579 = vpop.permute.xlu0 %578
      %580 = vrot.lane.b32.xlu0 %v321, 127
      %v581 = vpop.permute.xlu0 %580
      %vm582 = vcmask 1039360
      %v583 = vsel %vm582, %v579, %v581
      %586 = vrot.lane.b32.xlu0 %v314, 127
      %v587 = vpop.permute.xlu0 %586
      %588 = vrot.lane.b32.xlu0 %v315, 127
      %v589 = vpop.permute.xlu0 %588
      %590 = vrot.lane.b32.xlu0 %v316, 127
      %v591 = vpop.permute.xlu0 %590
      %592 = vrot.lane.b32.xlu0 %v317, 127
      %v593 = vpop.permute.xlu0 %592
      %594 = vrot.lane.b32.xlu0 %v318, 127
      %v595 = vpop.permute.xlu0 %594
      %596 = vrot.lane.b32.xlu0 %v319, 127
      %v597 = vpop.permute.xlu0 %596
      %v598 = vsel %vm582, %v587, %v589
      %v599 = vsel %vm582, %v589, %v591
      %v600 = vsel %vm582, %v591, %v593
      %v601 = vsel %vm582, %v593, %v595
      %v602 = vsel %vm582, %v595, %v597
      %v603 = vsel %vm582, %v597, %v579
      %v611 = vsel %vm582, %v581, %v587
      %vm612 = vmand %vm266, %vm306
      %vm613 = vmand %vm267, %vm307
      %vm614 = vmand %vm268, %vm308
      %vm615 = vmand %vm269, %vm309
      %vm616 = vmand %vm270, %vm310
      %vm617 = vmand %vm271, %vm311
      %vm618 = vmand %vm272, %vm312
      %vm619 = vmand %vm273, %vm313
      %v620 = vsel %vm612, %v583, 0.0
      %v621 = vsel %vm613, %v611, 0.0
      %v622 = vsel %vm614, %v598, 0.0
      %v623 = vsel %vm615, %v599, 0.0
      %v624 = vsel %vm616, %v600, 0.0
      %v625 = vsel %vm617, %v601, 0.0
      %v626 = vsel %vm618, %v602, 0.0
      %v627 = vsel %vm619, %v603, 0.0
      %628 = vst [vmem:[#allocation3 + $0x140] sm:$0xff] %v620
      %629 = vst [vmem:[#allocation3 + $0x148] sm:$0xff] %v621
      %630 = vst [vmem:[#allocation3 + $0x150] sm:$0xff] %v622
      %631 = vst [vmem:[#allocation3 + $0x158] sm:$0xff] %v623
      %632 = vst [vmem:[#allocation3 + $0x160] sm:$0xff] %v624
      %633 = vst [vmem:[#allocation3 + $0x168] sm:$0xff] %v625
      %634 = vst [vmem:[#allocation3 + $0x170] sm:$0xff] %v626
      %635 = vst [vmem:[#allocation3 + $0x178] sm:$0xff] %v627
      %636 = vrot.lane.b32.xlu0 %v320, 113
      %v637 = vpop.permute.xlu0 %636
      %638 = vrot.lane.b32.xlu0 %v321, 113
      %v639 = vpop.permute.xlu0 %638
      %vm640 = vcmask 924672
      %v641 = vsel %vm640, %v637, %v639
      %644 = vrot.lane.b32.xlu0 %v314, 113
      %v645 = vpop.permute.xlu0 %644
      %646 = vrot.lane.b32.xlu0 %v315, 113
      %v647 = vpop.permute.xlu0 %646
      %648 = vrot.lane.b32.xlu0 %v316, 113
      %v649 = vpop.permute.xlu0 %648
      %650 = vrot.lane.b32.xlu0 %v317, 113
      %v651 = vpop.permute.xlu0 %650
      %652 = vrot.lane.b32.xlu0 %v318, 113
      %v653 = vpop.permute.xlu0 %652
      %654 = vrot.lane.b32.xlu0 %v319, 113
      %v655 = vpop.permute.xlu0 %654
      %v656 = vsel %vm640, %v645, %v647
      %v657 = vsel %vm640, %v647, %v649
      %v658 = vsel %vm640, %v649, %v651
      %v659 = vsel %vm640, %v651, %v653
      %v660 = vsel %vm640, %v653, %v655
      %v661 = vsel %vm640, %v655, %v637
      %v669 = vsel %vm640, %v639, %v645
      %vm670 = vmand %vm266, %vm290
      %vm671 = vmand %vm267, %vm291
      %vm672 = vmand %vm268, %vm292
      %vm673 = vmand %vm269, %vm293
      %vm674 = vmand %vm270, %vm294
      %vm675 = vmand %vm271, %vm295
      %vm676 = vmand %vm272, %vm296
      %vm677 = vmand %vm273, %vm297
      %vm678 = vmand %vm670, %vm298
      %vm679 = vmand %vm671, %vm299
      %vm680 = vmand %vm672, %vm300
      %vm681 = vmand %vm673, %vm301
      %vm682 = vmand %vm674, %vm302
      %vm683 = vmand %vm675, %vm303
      %vm684 = vmand %vm676, %vm304
      %vm685 = vmand %vm677, %vm305
      %v686 = vsel %vm678, %v641, 0.0
      %v687 = vsel %vm679, %v669, 0.0
      %v688 = vsel %vm680, %v656, 0.0
      %v689 = vsel %vm681, %v657, 0.0
      %v690 = vsel %vm682, %v658, 0.0
      %v691 = vsel %vm683, %v659, 0.0
      %v692 = vsel %vm684, %v660, 0.0
      %v693 = vsel %vm685, %v661, 0.0
      %694 = vst [vmem:[#allocation3 + $0x180] sm:$0xff] %v686
      %695 = vst [vmem:[#allocation3 + $0x188] sm:$0xff] %v687
      %696 = vst [vmem:[#allocation3 + $0x190] sm:$0xff] %v688
      %697 = vst [vmem:[#allocation3 + $0x198] sm:$0xff] %v689
      %698 = vst [vmem:[#allocation3 + $0x1a0] sm:$0xff] %v690
      %699 = vst [vmem:[#allocation3 + $0x1a8] sm:$0xff] %v691
      %700 = vst [vmem:[#allocation3 + $0x1b0] sm:$0xff] %v692
      %701 = vst [vmem:[#allocation3 + $0x1b8] sm:$0xff] %v693
      %702 = vrot.lane.b32.xlu0 %v320, 112
      %v703 = vpop.permute.xlu0 %702
      %704 = vrot.lane.b32.xlu0 %v321, 112
      %v705 = vpop.permute.xlu0 %704
      %vm706 = vcmask 916480
      %v707 = vsel %vm706, %v703, %v705
      %710 = vrot.lane.b32.xlu0 %v314, 112
      %v711 = vpop.permute.xlu0 %710
      %712 = vrot.lane.b32.xlu0 %v315, 112
      %v713 = vpop.permute.xlu0 %712
      %714 = vrot.lane.b32.xlu0 %v316, 112
      %v715 = vpop.permute.xlu0 %714
      %716 = vrot.lane.b32.xlu0 %v317, 112
      %v717 = vpop.permute.xlu0 %716
      %718 = vrot.lane.b32.xlu0 %v318, 112
      %v719 = vpop.permute.xlu0 %718
      %720 = vrot.lane.b32.xlu0 %v319, 112
      %v721 = vpop.permute.xlu0 %720
      %v722 = vsel %vm706, %v711, %v713
      %v723 = vsel %vm706, %v713, %v715
      %v724 = vsel %vm706, %v715, %v717
      %v725 = vsel %vm706, %v717, %v719
      %v726 = vsel %vm706, %v719, %v721
      %v727 = vsel %vm706, %v721, %v703
      %v735 = vsel %vm706, %v705, %v711
      %v736 = vsel %vm670, %v707, 0.0
      %v737 = vsel %vm671, %v735, 0.0
      %v738 = vsel %vm672, %v722, 0.0
      %v739 = vsel %vm673, %v723, 0.0
      %v740 = vsel %vm674, %v724, 0.0
      %v741 = vsel %vm675, %v725, 0.0
      %v742 = vsel %vm676, %v726, 0.0
      %v743 = vsel %vm677, %v727, 0.0
      %744 = vst [vmem:[#allocation3 + $0x1c0] sm:$0xff] %v736
      %745 = vst [vmem:[#allocation3 + $0x1c8] sm:$0xff] %v737
      %746 = vst [vmem:[#allocation3 + $0x1d0] sm:$0xff] %v738
      %747 = vst [vmem:[#allocation3 + $0x1d8] sm:$0xff] %v739
      %748 = vst [vmem:[#allocation3 + $0x1e0] sm:$0xff] %v740
      %749 = vst [vmem:[#allocation3 + $0x1e8] sm:$0xff] %v741
      %750 = vst [vmem:[#allocation3 + $0x1f0] sm:$0xff] %v742
      %751 = vst [vmem:[#allocation3 + $0x1f8] sm:$0xff] %v743
      %752 = vrot.lane.b32.xlu0 %v320, 111
      %v753 = vpop.permute.xlu0 %752
      %754 = vrot.lane.b32.xlu0 %v321, 111
      %v755 = vpop.permute.xlu0 %754
      %vm756 = vcmask 908288
      %v757 = vsel %vm756, %v753, %v755
      %760 = vrot.lane.b32.xlu0 %v314, 111
      %v761 = vpop.permute.xlu0 %760
      %762 = vrot.lane.b32.xlu0 %v315, 111
      %v763 = vpop.permute.xlu0 %762
      %764 = vrot.lane.b32.xlu0 %v316, 111
      %v765 = vpop.permute.xlu0 %764
      %766 = vrot.lane.b32.xlu0 %v317, 111
      %v767 = vpop.permute.xlu0 %766
      %768 = vrot.lane.b32.xlu0 %v318, 111
      %v769 = vpop.permute.xlu0 %768
      %770 = vrot.lane.b32.xlu0 %v319, 111
      %v771 = vpop.permute.xlu0 %770
      %v772 = vsel %vm756, %v761, %v763
      %v773 = vsel %vm756, %v763, %v765
      %v774 = vsel %vm756, %v765, %v767
      %v775 = vsel %vm756, %v767, %v769
      %v776 = vsel %vm756, %v769, %v771
      %v777 = vsel %vm756, %v771, %v753
      %v785 = vsel %vm756, %v755, %v761
      %vm786 = vmand %vm670, %vm306
      %vm787 = vmand %vm671, %vm307
      %vm788 = vmand %vm672, %vm308
      %vm789 = vmand %vm673, %vm309
      %vm790 = vmand %vm674, %vm310
      %vm791 = vmand %vm675, %vm311
      %vm792 = vmand %vm676, %vm312
      %vm793 = vmand %vm677, %vm313
      %v794 = vsel %vm786, %v757, 0.0
      %v795 = vsel %vm787, %v785, 0.0
      %v796 = vsel %vm788, %v772, 0.0
      %v797 = vsel %vm789, %v773, 0.0
      %v798 = vsel %vm790, %v774, 0.0
      %v799 = vsel %vm791, %v775, 0.0
      %v800 = vsel %vm792, %v776, 0.0
      %v801 = vsel %vm793, %v777, 0.0
      %802 = vst [vmem:[#allocation3 + $0x200] sm:$0xff] %v794
      %803 = vst [vmem:[#allocation3 + $0x208] sm:$0xff] %v795
      %804 = vst [vmem:[#allocation3 + $0x210] sm:$0xff] %v796
      %805 = vst [vmem:[#allocation3 + $0x218] sm:$0xff] %v797
      %806 = vst [vmem:[#allocation3 + $0x220] sm:$0xff] %v798
      %807 = vst [vmem:[#allocation3 + $0x228] sm:$0xff] %v799
      %808 = vst [vmem:[#allocation3 + $0x230] sm:$0xff] %v800
      %809 = vst [vmem:[#allocation3 + $0x238] sm:$0xff] %v801
      %vm810 = vmand %vm282, %vm298
      %vm811 = vmand %vm283, %vm299
      %vm812 = vmand %vm284, %vm300
      %vm813 = vmand %vm285, %vm301
      %vm814 = vmand %vm286, %vm302
      %vm815 = vmand %vm287, %vm303
      %vm816 = vmand %vm288, %vm304
      %vm817 = vmand %vm289, %vm305
      %v818 = vsel %vm810, %v363, 0.0
      %v819 = vsel %vm811, %v352, 0.0
      %v820 = vsel %vm812, %v353, 0.0
      %v821 = vsel %vm813, %v354, 0.0
      %v822 = vsel %vm814, %v355, 0.0
      %v823 = vsel %vm815, %v356, 0.0
      %v824 = vsel %vm816, %v332, 0.0
      %v825 = vsel %vm817, %v333, 0.0
      %826 = vst [vmem:[#allocation3 + $0x240] sm:$0xff] %v818
      %827 = vst [vmem:[#allocation3 + $0x248] sm:$0xff] %v819
      %828 = vst [vmem:[#allocation3 + $0x250] sm:$0xff] %v820
      %829 = vst [vmem:[#allocation3 + $0x258] sm:$0xff] %v821
      %830 = vst [vmem:[#allocation3 + $0x260] sm:$0xff] %v822
      %831 = vst [vmem:[#allocation3 + $0x268] sm:$0xff] %v823
      %832 = vst [vmem:[#allocation3 + $0x270] sm:$0xff] %v824
      %833 = vst [vmem:[#allocation3 + $0x278] sm:$0xff] %v825
      %v834 = vsel %vm282, %v429, 0.0
      %v835 = vsel %vm283, %v418, 0.0
      %v836 = vsel %vm284, %v419, 0.0
      %v837 = vsel %vm285, %v420, 0.0
      %v838 = vsel %vm286, %v421, 0.0
      %v839 = vsel %vm287, %v422, 0.0
      %v840 = vsel %vm288, %v403, 0.0
      %v841 = vsel %vm289, %v404, 0.0
      %842 = vst [vmem:[#allocation3 + $0x280] sm:$0xff] %v834
      %843 = vst [vmem:[#allocation3 + $0x288] sm:$0xff] %v835
      %844 = vst [vmem:[#allocation3 + $0x290] sm:$0xff] %v836
      %845 = vst [vmem:[#allocation3 + $0x298] sm:$0xff] %v837
      %846 = vst [vmem:[#allocation3 + $0x2a0] sm:$0xff] %v838
      %847 = vst [vmem:[#allocation3 + $0x2a8] sm:$0xff] %v839
      %848 = vst [vmem:[#allocation3 + $0x2b0] sm:$0xff] %v840
      %849 = vst [vmem:[#allocation3 + $0x2b8] sm:$0xff] %v841
      %vm850 = vmand %vm282, %vm306
      %vm851 = vmand %vm283, %vm307
      %vm852 = vmand %vm284, %vm308
      %vm853 = vmand %vm285, %vm309
      %vm854 = vmand %vm286, %vm310
      %vm855 = vmand %vm287, %vm311
      %vm856 = vmand %vm288, %vm312
      %vm857 = vmand %vm289, %vm313
      %v858 = vsel %vm850, %v479, 0.0
      %v859 = vsel %vm851, %v468, 0.0
      %v860 = vsel %vm852, %v469, 0.0
      %v861 = vsel %vm853, %v470, 0.0
      %v862 = vsel %vm854, %v471, 0.0
      %v863 = vsel %vm855, %v472, 0.0
      %v864 = vsel %vm856, %v453, 0.0
      %v865 = vsel %vm857, %v454, 0.0
      %866 = vst [vmem:[#allocation3 + $0x2c0] sm:$0xff] %v858
      %867 = vst [vmem:[#allocation3 + $0x2c8] sm:$0xff] %v859
      %868 = vst [vmem:[#allocation3 + $0x2d0] sm:$0xff] %v860
      %869 = vst [vmem:[#allocation3 + $0x2d8] sm:$0xff] %v861
      %870 = vst [vmem:[#allocation3 + $0x2e0] sm:$0xff] %v862
      %871 = vst [vmem:[#allocation3 + $0x2e8] sm:$0xff] %v863
      %872 = vst [vmem:[#allocation3 + $0x2f0] sm:$0xff] %v864
      %873 = vst [vmem:[#allocation3 + $0x2f8] sm:$0xff] %v865
      %v874 = vsel %vm298, %v537, 0.0
      %v875 = vsel %vm299, %v526, 0.0
      %v876 = vsel %vm300, %v527, 0.0
      %v877 = vsel %vm301, %v528, 0.0
      %v878 = vsel %vm302, %v529, 0.0
      %v879 = vsel %vm303, %v530, 0.0
      %v880 = vsel %vm304, %v511, 0.0
      %v881 = vsel %vm305, %v512, 0.0
      %882 = vst [vmem:[#allocation3 + $0x300] sm:$0xff] %v874
      %883 = vst [vmem:[#allocation3 + $0x308] sm:$0xff] %v875
      %884 = vst [vmem:[#allocation3 + $0x310] sm:$0xff] %v876
      %885 = vst [vmem:[#allocation3 + $0x318] sm:$0xff] %v877
      %886 = vst [vmem:[#allocation3 + $0x320] sm:$0xff] %v878
      %887 = vst [vmem:[#allocation3 + $0x328] sm:$0xff] %v879
      %888 = vst [vmem:[#allocation3 + $0x330] sm:$0xff] %v880
      %889 = vst [vmem:[#allocation3 + $0x338] sm:$0xff] %v881
      %890 = vst [vmem:[#allocation3 + $0x340] sm:$0xff] %v314
      %891 = vst [vmem:[#allocation3 + $0x348] sm:$0xff] %v315
      %892 = vst [vmem:[#allocation3 + $0x350] sm:$0xff] %v316
      %893 = vst [vmem:[#allocation3 + $0x358] sm:$0xff] %v317
      %894 = vst [vmem:[#allocation3 + $0x360] sm:$0xff] %v318
      %895 = vst [vmem:[#allocation3 + $0x368] sm:$0xff] %v319
      %896 = vst [vmem:[#allocation3 + $0x370] sm:$0xff] %v320
      %897 = vst [vmem:[#allocation3 + $0x378] sm:$0xff] %v321
      %v898 = vsel %vm306, %v598, 0.0
      %v899 = vsel %vm307, %v599, 0.0
      %v900 = vsel %vm308, %v600, 0.0
      %v901 = vsel %vm309, %v601, 0.0
      %v902 = vsel %vm310, %v602, 0.0
      %v903 = vsel %vm311, %v603, 0.0
      %v904 = vsel %vm312, %v583, 0.0
      %v905 = vsel %vm313, %v611, 0.0
      %906 = vst [vmem:[#allocation3 + $0x380] sm:$0xff] %v898
      %907 = vst [vmem:[#allocation3 + $0x388] sm:$0xff] %v899
      %908 = vst [vmem:[#allocation3 + $0x390] sm:$0xff] %v900
      %909 = vst [vmem:[#allocation3 + $0x398] sm:$0xff] %v901
      %910 = vst [vmem:[#allocation3 + $0x3a0] sm:$0xff] %v902
      %911 = vst [vmem:[#allocation3 + $0x3a8] sm:$0xff] %v903
      %912 = vst [vmem:[#allocation3 + $0x3b0] sm:$0xff] %v904
      %913 = vst [vmem:[#allocation3 + $0x3b8] sm:$0xff] %v905
      %vm914 = vmand %vm290, %vm298
      %vm915 = vmand %vm291, %vm299
      %vm916 = vmand %vm292, %vm300
      %vm917 = vmand %vm293, %vm301
      %vm918 = vmand %vm294, %vm302
      %vm919 = vmand %vm295, %vm303
      %vm920 = vmand %vm296, %vm304
      %vm921 = vmand %vm297, %vm305
      %v922 = vsel %vm914, %v656, 0.0
      %v923 = vsel %vm915, %v657, 0.0
      %v924 = vsel %vm916, %v658, 0.0
      %v925 = vsel %vm917, %v659, 0.0
      %v926 = vsel %vm918, %v660, 0.0
      %v927 = vsel %vm919, %v661, 0.0
      %v928 = vsel %vm920, %v641, 0.0
      %v929 = vsel %vm921, %v669, 0.0
      %930 = vst [vmem:[#allocation3 + $0x3c0] sm:$0xff] %v922
      %931 = vst [vmem:[#allocation3 + $0x3c8] sm:$0xff] %v923
      %932 = vst [vmem:[#allocation3 + $0x3d0] sm:$0xff] %v924
      %933 = vst [vmem:[#allocation3 + $0x3d8] sm:$0xff] %v925
      %934 = vst [vmem:[#allocation3 + $0x3e0] sm:$0xff] %v926
      %935 = vst [vmem:[#allocation3 + $0x3e8] sm:$0xff] %v927
      %936 = vst [vmem:[#allocation3 + $0x3f0] sm:$0xff] %v928
      %937 = vst [vmem:[#allocation3 + $0x3f8] sm:$0xff] %v929
      %v938 = vsel %vm290, %v722, 0.0
      %v939 = vsel %vm291, %v723, 0.0
      %v940 = vsel %vm292, %v724, 0.0
      %v941 = vsel %vm293, %v725, 0.0
      %v942 = vsel %vm294, %v726, 0.0
      %v943 = vsel %vm295, %v727, 0.0
      %v944 = vsel %vm296, %v707, 0.0
      %v945 = vsel %vm297, %v735, 0.0
      %946 = vst [vmem:[#allocation3 + $0x400] sm:$0xff] %v938
      %947 = vst [vmem:[#allocation3 + $0x408] sm:$0xff] %v939
      %948 = vst [vmem:[#allocation3 + $0x410] sm:$0xff] %v940
      %949 = vst [vmem:[#allocation3 + $0x418] sm:$0xff] %v941
      %950 = vst [vmem:[#allocation3 + $0x420] sm:$0xff] %v942
      %951 = vst [vmem:[#allocation3 + $0x428] sm:$0xff] %v943
      %952 = vst [vmem:[#allocation3 + $0x430] sm:$0xff] %v944
      %953 = vst [vmem:[#allocation3 + $0x438] sm:$0xff] %v945
      %vm954 = vmand %vm290, %vm306
      %vm955 = vmand %vm291, %vm307
      %vm956 = vmand %vm292, %vm308
      %vm957 = vmand %vm293, %vm309
      %vm958 = vmand %vm294, %vm310
      %vm959 = vmand %vm295, %vm311
      %vm960 = vmand %vm296, %vm312
      %vm961 = vmand %vm297, %vm313
      %v962 = vsel %vm954, %v772, 0.0
      %v963 = vsel %vm955, %v773, 0.0
      %v964 = vsel %vm956, %v774, 0.0
      %v965 = vsel %vm957, %v775, 0.0
      %v966 = vsel %vm958, %v776, 0.0
      %v967 = vsel %vm959, %v777, 0.0
      %v968 = vsel %vm960, %v757, 0.0
      %v969 = vsel %vm961, %v785, 0.0
      %970 = vst [vmem:[#allocation3 + $0x440] sm:$0xff] %v962
      %971 = vst [vmem:[#allocation3 + $0x448] sm:$0xff] %v963
      %972 = vst [vmem:[#allocation3 + $0x450] sm:$0xff] %v964
      %973 = vst [vmem:[#allocation3 + $0x458] sm:$0xff] %v965
      %974 = vst [vmem:[#allocation3 + $0x460] sm:$0xff] %v966
      %975 = vst [vmem:[#allocation3 + $0x468] sm:$0xff] %v967
      %976 = vst [vmem:[#allocation3 + $0x470] sm:$0xff] %v968
      %977 = vst [vmem:[#allocation3 + $0x478] sm:$0xff] %v969
      %vm978 = vmand %vm274, %vm282
      %vm979 = vmand %vm275, %vm283
      %vm980 = vmand %vm276, %vm284
      %vm981 = vmand %vm277, %vm285
      %vm982 = vmand %vm278, %vm286
      %vm983 = vmand %vm279, %vm287
      %vm984 = vmand %vm280, %vm288
      %vm985 = vmand %vm281, %vm289
      %vm986 = vmand %vm978, %vm298
      %vm987 = vmand %vm979, %vm299
      %vm988 = vmand %vm980, %vm300
      %vm989 = vmand %vm981, %vm301
      %vm990 = vmand %vm982, %vm302
      %vm991 = vmand %vm983, %vm303
      %vm992 = vmand %vm984, %vm304
      %vm993 = vmand %vm985, %vm305
      %v994 = vsel %vm986, %v353, 0.0
      %v995 = vsel %vm987, %v354, 0.0
      %v996 = vsel %vm988, %v355, 0.0
      %v997 = vsel %vm989, %v356, 0.0
      %v998 = vsel %vm990, %v332, 0.0
      %v999 = vsel %vm991, %v333, 0.0
      %v1000 = vsel %vm992, %v363, 0.0
      %v1001 = vsel %vm993, %v352, 0.0
      %1002 = vst [vmem:[#allocation3 + $0x480] sm:$0xff] %v994
      %1003 = vst [vmem:[#allocation3 + $0x488] sm:$0xff] %v995
      %1004 = vst [vmem:[#allocation3 + $0x490] sm:$0xff] %v996
      %1005 = vst [vmem:[#allocation3 + $0x498] sm:$0xff] %v997
      %1006 = vst [vmem:[#allocation3 + $0x4a0] sm:$0xff] %v998
      %1007 = vst [vmem:[#allocation3 + $0x4a8] sm:$0xff] %v999
      %1008 = vst [vmem:[#allocation3 + $0x4b0] sm:$0xff] %v1000
      %1009 = vst [vmem:[#allocation3 + $0x4b8] sm:$0xff] %v1001
      %v1010 = vsel %vm978, %v419, 0.0
      %v1011 = vsel %vm979, %v420, 0.0
      %v1012 = vsel %vm980, %v421, 0.0
      %v1013 = vsel %vm981, %v422, 0.0
      %v1014 = vsel %vm982, %v403, 0.0
      %v1015 = vsel %vm983, %v404, 0.0
      %v1016 = vsel %vm984, %v429, 0.0
      %v1017 = vsel %vm985, %v418, 0.0
      %1018 = vst [vmem:[#allocation3 + $0x4c0] sm:$0xff] %v1010
      %1019 = vst [vmem:[#allocation3 + $0x4c8] sm:$0xff] %v1011
      %1020 = vst [vmem:[#allocation3 + $0x4d0] sm:$0xff] %v1012
      %1021 = vst [vmem:[#allocation3 + $0x4d8] sm:$0xff] %v1013
      %1022 = vst [vmem:[#allocation3 + $0x4e0] sm:$0xff] %v1014
      %1023 = vst [vmem:[#allocation3 + $0x4e8] sm:$0xff] %v1015
      %1024 = vst [vmem:[#allocation3 + $0x4f0] sm:$0xff] %v1016
      %1025 = vst [vmem:[#allocation3 + $0x4f8] sm:$0xff] %v1017
      %vm1026 = vmand %vm978, %vm306
      %vm1027 = vmand %vm979, %vm307
      %vm1028 = vmand %vm980, %vm308
      %vm1029 = vmand %vm981, %vm309
      %vm1030 = vmand %vm982, %vm310
      %vm1031 = vmand %vm983, %vm311
      %vm1032 = vmand %vm984, %vm312
      %vm1033 = vmand %vm985, %vm313
      %v1034 = vsel %vm1026, %v469, 0.0
      %v1035 = vsel %vm1027, %v470, 0.0
      %v1036 = vsel %vm1028, %v471, 0.0
      %v1037 = vsel %vm1029, %v472, 0.0
      %v1038 = vsel %vm1030, %v453, 0.0
      %v1039 = vsel %vm1031, %v454, 0.0
      %v1040 = vsel %vm1032, %v479, 0.0
      %v1041 = vsel %vm1033, %v468, 0.0
      %1042 = vst [vmem:[#allocation3 + $0x500] sm:$0xff] %v1034
      %1043 = vst [vmem:[#allocation3 + $0x508] sm:$0xff] %v1035
      %1044 = vst [vmem:[#allocation3 + $0x510] sm:$0xff] %v1036
      %1045 = vst [vmem:[#allocation3 + $0x518] sm:$0xff] %v1037
      %1046 = vst [vmem:[#allocation3 + $0x520] sm:$0xff] %v1038
      %1047 = vst [vmem:[#allocation3 + $0x528] sm:$0xff] %v1039
      %1048 = vst [vmem:[#allocation3 + $0x530] sm:$0xff] %v1040
      %1049 = vst [vmem:[#allocation3 + $0x538] sm:$0xff] %v1041
      %vm1050 = vmand %vm274, %vm298
      %vm1051 = vmand %vm275, %vm299
      %vm1052 = vmand %vm276, %vm300
      %vm1053 = vmand %vm277, %vm301
      %vm1054 = vmand %vm278, %vm302
      %vm1055 = vmand %vm279, %vm303
      %vm1056 = vmand %vm280, %vm304
      %vm1057 = vmand %vm281, %vm305
      %v1058 = vsel %vm1050, %v527, 0.0
      %v1059 = vsel %vm1051, %v528, 0.0
      %v1060 = vsel %vm1052, %v529, 0.0
      %v1061 = vsel %vm1053, %v530, 0.0
      %v1062 = vsel %vm1054, %v511, 0.0
      %v1063 = vsel %vm1055, %v512, 0.0
      %v1064 = vsel %vm1056, %v537, 0.0
      %v1065 = vsel %vm1057, %v526, 0.0
      %1066 = vst [vmem:[#allocation3 + $0x540] sm:$0xff] %v1058
      %1067 = vst [vmem:[#allocation3 + $0x548] sm:$0xff] %v1059
      %1068 = vst [vmem:[#allocation3 + $0x550] sm:$0xff] %v1060
      %1069 = vst [vmem:[#allocation3 + $0x558] sm:$0xff] %v1061
      %1070 = vst [vmem:[#allocation3 + $0x560] sm:$0xff] %v1062
      %1071 = vst [vmem:[#allocation3 + $0x568] sm:$0xff] %v1063
      %1072 = vst [vmem:[#allocation3 + $0x570] sm:$0xff] %v1064
      %1073 = vst [vmem:[#allocation3 + $0x578] sm:$0xff] %v1065
      %v1074 = vsel %vm274, %v316, 0.0
      %v1075 = vsel %vm275, %v317, 0.0
      %v1076 = vsel %vm276, %v318, 0.0
      %v1077 = vsel %vm277, %v319, 0.0
      %v1078 = vsel %vm278, %v320, 0.0
      %v1079 = vsel %vm279, %v321, 0.0
      %v1080 = vsel %vm280, %v314, 0.0
      %v1081 = vsel %vm281, %v315, 0.0
      %1082 = vst [vmem:[#allocation3 + $0x580] sm:$0xff] %v1074
      %1083 = vst [vmem:[#allocation3 + $0x588] sm:$0xff] %v1075
      %1084 = vst [vmem:[#allocation3 + $0x590] sm:$0xff] %v1076
      %1085 = vst [vmem:[#allocation3 + $0x598] sm:$0xff] %v1077
      %1086 = vst [vmem:[#allocation3 + $0x5a0] sm:$0xff] %v1078
      %1087 = vst [vmem:[#allocation3 + $0x5a8] sm:$0xff] %v1079
      %1088 = vst [vmem:[#allocation3 + $0x5b0] sm:$0xff] %v1080
      %1089 = vst [vmem:[#allocation3 + $0x5b8] sm:$0xff] %v1081
      %vm1090 = vmand %vm274, %vm306
      %vm1091 = vmand %vm275, %vm307
      %vm1092 = vmand %vm276, %vm308
      %vm1093 = vmand %vm277, %vm309
      %vm1094 = vmand %vm278, %vm310
      %vm1095 = vmand %vm279, %vm311
      %vm1096 = vmand %vm280, %vm312
      %vm1097 = vmand %vm281, %vm313
      %v1098 = vsel %vm1090, %v600, 0.0
      %v1099 = vsel %vm1091, %v601, 0.0
      %v1100 = vsel %vm1092, %v602, 0.0
      %v1101 = vsel %vm1093, %v603, 0.0
      %v1102 = vsel %vm1094, %v583, 0.0
      %v1103 = vsel %vm1095, %v611, 0.0
      %v1104 = vsel %vm1096, %v598, 0.0
      %v1105 = vsel %vm1097, %v599, 0.0
      %1106 = vst [vmem:[#allocation3 + $0x5c0] sm:$0xff] %v1098
      %1107 = vst [vmem:[#allocation3 + $0x5c8] sm:$0xff] %v1099
      %1108 = vst [vmem:[#allocation3 + $0x5d0] sm:$0xff] %v1100
      %1109 = vst [vmem:[#allocation3 + $0x5d8] sm:$0xff] %v1101
      %1110 = vst [vmem:[#allocation3 + $0x5e0] sm:$0xff] %v1102
      %1111 = vst [vmem:[#allocation3 + $0x5e8] sm:$0xff] %v1103
      %1112 = vst [vmem:[#allocation3 + $0x5f0] sm:$0xff] %v1104
      %1113 = vst [vmem:[#allocation3 + $0x5f8] sm:$0xff] %v1105
      %vm1114 = vmand %vm274, %vm290
      %vm1115 = vmand %vm275, %vm291
      %vm1116 = vmand %vm276, %vm292
      %vm1117 = vmand %vm277, %vm293
      %vm1118 = vmand %vm278, %vm294
      %vm1119 = vmand %vm279, %vm295
      %vm1120 = vmand %vm280, %vm296
      %vm1121 = vmand %vm281, %vm297
      %vm1122 = vmand %vm1114, %vm298
      %vm1123 = vmand %vm1115, %vm299
      %vm1124 = vmand %vm1116, %vm300
      %vm1125 = vmand %vm1117, %vm301
      %vm1126 = vmand %vm1118, %vm302
      %vm1127 = vmand %vm1119, %vm303
      %vm1128 = vmand %vm1120, %vm304
      %vm1129 = vmand %vm1121, %vm305
      %v1130 = vsel %vm1122, %v658, 0.0
      %v1131 = vsel %vm1123, %v659, 0.0
      %v1132 = vsel %vm1124, %v660, 0.0
      %v1133 = vsel %vm1125, %v661, 0.0
      %v1134 = vsel %vm1126, %v641, 0.0
      %v1135 = vsel %vm1127, %v669, 0.0
      %v1136 = vsel %vm1128, %v656, 0.0
      %v1137 = vsel %vm1129, %v657, 0.0
      %1138 = vst [vmem:[#allocation3 + $0x600] sm:$0xff] %v1130
      %1139 = vst [vmem:[#allocation3 + $0x608] sm:$0xff] %v1131
      %1140 = vst [vmem:[#allocation3 + $0x610] sm:$0xff] %v1132
      %1141 = vst [vmem:[#allocation3 + $0x618] sm:$0xff] %v1133
      %1142 = vst [vmem:[#allocation3 + $0x620] sm:$0xff] %v1134
      %1143 = vst [vmem:[#allocation3 + $0x628] sm:$0xff] %v1135
      %1144 = vst [vmem:[#allocation3 + $0x630] sm:$0xff] %v1136
      %1145 = vst [vmem:[#allocation3 + $0x638] sm:$0xff] %v1137
      %v1146 = vsel %vm1114, %v724, 0.0
      %v1147 = vsel %vm1115, %v725, 0.0
      %v1148 = vsel %vm1116, %v726, 0.0
      %v1149 = vsel %vm1117, %v727, 0.0
      %v1150 = vsel %vm1118, %v707, 0.0
      %v1151 = vsel %vm1119, %v735, 0.0
      %v1152 = vsel %vm1120, %v722, 0.0
      %v1153 = vsel %vm1121, %v723, 0.0
      %1154 = vst [vmem:[#allocation3 + $0x640] sm:$0xff] %v1146
      %1155 = vst [vmem:[#allocation3 + $0x648] sm:$0xff] %v1147
      %1156 = vst [vmem:[#allocation3 + $0x650] sm:$0xff] %v1148
      %1157 = vst [vmem:[#allocation3 + $0x658] sm:$0xff] %v1149
      %1158 = vst [vmem:[#allocation3 + $0x660] sm:$0xff] %v1150
      %1159 = vst [vmem:[#allocation3 + $0x668] sm:$0xff] %v1151
      %1160 = vst [vmem:[#allocation3 + $0x670] sm:$0xff] %v1152
      %1161 = vst [vmem:[#allocation3 + $0x678] sm:$0xff] %v1153
      %vm1162 = vmand %vm1114, %vm306
      %vm1163 = vmand %vm1115, %vm307
      %vm1164 = vmand %vm1116, %vm308
      %vm1165 = vmand %vm1117, %vm309
      %vm1166 = vmand %vm1118, %vm310
      %vm1167 = vmand %vm1119, %vm311
      %vm1168 = vmand %vm1120, %vm312
      %vm1169 = vmand %vm1121, %vm313
      %v1170 = vsel %vm1162, %v774, 0.0
      %v1171 = vsel %vm1163, %v775, 0.0
      %v1172 = vsel %vm1164, %v776, 0.0
      %v1173 = vsel %vm1165, %v777, 0.0
      %v1174 = vsel %vm1166, %v757, 0.0
      %v1175 = vsel %vm1167, %v785, 0.0
      %v1176 = vsel %vm1168, %v772, 0.0
      %v1177 = vsel %vm1169, %v773, 0.0
      %1178 = vst [vmem:[#allocation3 + $0x680] sm:$0xff] %v1170
      %1179 = vst [vmem:[#allocation3 + $0x688] sm:$0xff] %v1171
      %1180 = vst [vmem:[#allocation3 + $0x690] sm:$0xff] %v1172
      %1181 = vst [vmem:[#allocation3 + $0x698] sm:$0xff] %v1173
      %1182 = vst [vmem:[#allocation3 + $0x6a0] sm:$0xff] %v1174
      %1183 = vst [vmem:[#allocation3 + $0x6a8] sm:$0xff] %v1175
      %1184 = vst [vmem:[#allocation3 + $0x6b0] sm:$0xff] %v1176
      %1185 = vst [vmem:[#allocation3 + $0x6b8] sm:$0xff] %v1177
      %v1186 = vld [vmem:[%s1] sm:$0xff]
      %v1187 = vld [vmem:[%s1 + $0x8] sm:$0xff]
      %v1188 = vld [vmem:[#allocation3] sm:$0xff]
      %v1189 = vld [vmem:[#allocation3 + $0x8] sm:$0xff]
      %v1190 = vld [vmem:[#allocation3 + $0x10] sm:$0xff]
      %v1191 = vld [vmem:[#allocation3 + $0x18] sm:$0xff]
      %v1192 = vld [vmem:[#allocation3 + $0x20] sm:$0xff]
      %v1193 = vld [vmem:[#allocation3 + $0x28] sm:$0xff]
      %v1194 = vld [vmem:[#allocation3 + $0x30] sm:$0xff]
      %v1195 = vld [vmem:[#allocation3 + $0x38] sm:$0xff]
      %v1196 = vld [vmem:[#allocation3 + $0x40] sm:$0xff]
      %v1197 = vld [vmem:[#allocation3 + $0x48] sm:$0xff]
      %v1198 = vld [vmem:[#allocation3 + $0x50] sm:$0xff]
      %v1199 = vld [vmem:[#allocation3 + $0x58] sm:$0xff]
      %v1200 = vld [vmem:[#allocation3 + $0x60] sm:$0xff]
      %v1201 = vld [vmem:[#allocation3 + $0x68] sm:$0xff]
      %v1202 = vld [vmem:[#allocation3 + $0x70] sm:$0xff]
      %v1203 = vld [vmem:[#allocation3 + $0x78] sm:$0xff]
      %v1204 = vld [vmem:[#allocation3 + $0x80] sm:$0xff]
      %v1205 = vld [vmem:[#allocation3 + $0x88] sm:$0xff]
      %v1206 = vld [vmem:[#allocation3 + $0x90] sm:$0xff]
      %v1207 = vld [vmem:[#allocation3 + $0x98] sm:$0xff]
      %v1208 = vld [vmem:[#allocation3 + $0xa0] sm:$0xff]
      %v1209 = vld [vmem:[#allocation3 + $0xa8] sm:$0xff]
      %v1210 = vld [vmem:[#allocation3 + $0xb0] sm:$0xff]
      %v1211 = vld [vmem:[#allocation3 + $0xb8] sm:$0xff]
      %v1212 = vld [vmem:[#allocation3 + $0xc0] sm:$0xff]
      %v1213 = vld [vmem:[#allocation3 + $0xc8] sm:$0xff]
      %v1214 = vld [vmem:[#allocation3 + $0xd0] sm:$0xff]
      %v1215 = vld [vmem:[#allocation3 + $0xd8] sm:$0xff]
      %v1216 = vld [vmem:[#allocation3 + $0xe0] sm:$0xff]
      %v1217 = vld [vmem:[#allocation3 + $0xe8] sm:$0xff]
      %v1218 = vld [vmem:[#allocation3 + $0xf0] sm:$0xff]
      %v1219 = vld [vmem:[#allocation3 + $0xf8] sm:$0xff]
      %v1220 = vld [vmem:[#allocation3 + $0x100] sm:$0xff]
      %v1221 = vld [vmem:[#allocation3 + $0x108] sm:$0xff]
      %v1222 = vld [vmem:[#allocation3 + $0x110] sm:$0xff]
      %v1223 = vld [vmem:[#allocation3 + $0x118] sm:$0xff]
      %v1224 = vld [vmem:[#allocation3 + $0x120] sm:$0xff]
      %v1225 = vld [vmem:[#allocation3 + $0x128] sm:$0xff]
      %v1226 = vld [vmem:[#allocation3 + $0x130] sm:$0xff]
      %v1227 = vld [vmem:[#allocation3 + $0x138] sm:$0xff]
      %v1228 = vld [vmem:[#allocation3 + $0x140] sm:$0xff]
      %v1229 = vld [vmem:[#allocation3 + $0x148] sm:$0xff]
      %v1230 = vld [vmem:[#allocation3 + $0x150] sm:$0xff]
      %v1231 = vld [vmem:[#allocation3 + $0x158] sm:$0xff]
      %v1232 = vld [vmem:[#allocation3 + $0x160] sm:$0xff]
      %v1233 = vld [vmem:[#allocation3 + $0x168] sm:$0xff]
      %v1234 = vld [vmem:[#allocation3 + $0x170] sm:$0xff]
      %v1235 = vld [vmem:[#allocation3 + $0x178] sm:$0xff]
      %v1236 = vld [vmem:[#allocation3 + $0x180] sm:$0xff]
      %v1237 = vld [vmem:[#allocation3 + $0x188] sm:$0xff]
      %v1238 = vld [vmem:[#allocation3 + $0x190] sm:$0xff]
      %v1239 = vld [vmem:[#allocation3 + $0x198] sm:$0xff]
      %v1240 = vld [vmem:[#allocation3 + $0x1a0] sm:$0xff]
      %v1241 = vld [vmem:[#allocation3 + $0x1a8] sm:$0xff]
      %v1242 = vld [vmem:[#allocation3 + $0x1b0] sm:$0xff]
      %v1243 = vld [vmem:[#allocation3 + $0x1b8] sm:$0xff]
      %v1244 = vld [vmem:[#allocation3 + $0x1c0] sm:$0xff]
      %v1245 = vld [vmem:[#allocation3 + $0x1c8] sm:$0xff]
      %v1246 = vld [vmem:[#allocation3 + $0x1d0] sm:$0xff]
      %v1247 = vld [vmem:[#allocation3 + $0x1d8] sm:$0xff]
      %v1248 = vld [vmem:[#allocation3 + $0x1e0] sm:$0xff]
      %v1249 = vld [vmem:[#allocation3 + $0x1e8] sm:$0xff]
      %v1250 = vld [vmem:[#allocation3 + $0x1f0] sm:$0xff]
      %v1251 = vld [vmem:[#allocation3 + $0x1f8] sm:$0xff]
      %v1252 = vld [vmem:[#allocation3 + $0x200] sm:$0xff]
      %v1253 = vld [vmem:[#allocation3 + $0x208] sm:$0xff]
      %v1254 = vld [vmem:[#allocation3 + $0x210] sm:$0xff]
      %v1255 = vld [vmem:[#allocation3 + $0x218] sm:$0xff]
      %v1256 = vld [vmem:[#allocation3 + $0x220] sm:$0xff]
      %v1257 = vld [vmem:[#allocation3 + $0x228] sm:$0xff]
      %v1258 = vld [vmem:[#allocation3 + $0x230] sm:$0xff]
      %v1259 = vld [vmem:[#allocation3 + $0x238] sm:$0xff]
      %v1260 = vld [vmem:[#allocation3 + $0x240] sm:$0xff]
      %v1261 = vld [vmem:[#allocation3 + $0x248] sm:$0xff]
      %v1262 = vld [vmem:[#allocation3 + $0x250] sm:$0xff]
      %v1263 = vld [vmem:[#allocation3 + $0x258] sm:$0xff]
      %v1264 = vld [vmem:[#allocation3 + $0x260] sm:$0xff]
      %v1265 = vld [vmem:[#allocation3 + $0x268] sm:$0xff]
      %v1266 = vld [vmem:[#allocation3 + $0x270] sm:$0xff]
      %v1267 = vld [vmem:[#allocation3 + $0x278] sm:$0xff]
      %v1268 = vld [vmem:[#allocation3 + $0x280] sm:$0xff]
      %v1269 = vld [vmem:[#allocation3 + $0x288] sm:$0xff]
      %v1270 = vld [vmem:[#allocation3 + $0x290] sm:$0xff]
      %v1271 = vld [vmem:[#allocation3 + $0x298] sm:$0xff]
      %v1272 = vld [vmem:[#allocation3 + $0x2a0] sm:$0xff]
      %v1273 = vld [vmem:[#allocation3 + $0x2a8] sm:$0xff]
      %v1274 = vld [vmem:[#allocation3 + $0x2b0] sm:$0xff]
      %v1275 = vld [vmem:[#allocation3 + $0x2b8] sm:$0xff]
      %v1276 = vld [vmem:[#allocation3 + $0x2c0] sm:$0xff]
      %v1277 = vld [vmem:[#allocation3 + $0x2c8] sm:$0xff]
      %v1278 = vld [vmem:[#allocation3 + $0x2d0] sm:$0xff]
      %v1279 = vld [vmem:[#allocation3 + $0x2d8] sm:$0xff]
      %v1280 = vld [vmem:[#allocation3 + $0x2e0] sm:$0xff]
      %v1281 = vld [vmem:[#allocation3 + $0x2e8] sm:$0xff]
      %v1282 = vld [vmem:[#allocation3 + $0x2f0] sm:$0xff]
      %v1283 = vld [vmem:[#allocation3 + $0x2f8] sm:$0xff]
      %v1284 = vld [vmem:[#allocation3 + $0x300] sm:$0xff]
      %v1285 = vld [vmem:[#allocation3 + $0x308] sm:$0xff]
      %v1286 = vld [vmem:[#allocation3 + $0x310] sm:$0xff]
      %v1287 = vld [vmem:[#allocation3 + $0x318] sm:$0xff]
      %v1288 = vld [vmem:[#allocation3 + $0x320] sm:$0xff]
      %v1289 = vld [vmem:[#allocation3 + $0x328] sm:$0xff]
      %v1290 = vld [vmem:[#allocation3 + $0x330] sm:$0xff]
      %v1291 = vld [vmem:[#allocation3 + $0x338] sm:$0xff]
      %v1292 = vld [vmem:[#allocation3 + $0x340] sm:$0xff]
      %v1293 = vld [vmem:[#allocation3 + $0x348] sm:$0xff]
      %v1294 = vld [vmem:[#allocation3 + $0x350] sm:$0xff]
      %v1295 = vld [vmem:[#allocation3 + $0x358] sm:$0xff]
      %v1296 = vld [vmem:[#allocation3 + $0x360] sm:$0xff]
      %v1297 = vld [vmem:[#allocation3 + $0x368] sm:$0xff]
      %v1298 = vld [vmem:[#allocation3 + $0x370] sm:$0xff]
      %v1299 = vld [vmem:[#allocation3 + $0x378] sm:$0xff]
      %v1300 = vld [vmem:[#allocation3 + $0x380] sm:$0xff]
      %v1301 = vld [vmem:[#allocation3 + $0x388] sm:$0xff]
      %v1302 = vld [vmem:[#allocation3 + $0x390] sm:$0xff]
      %v1303 = vld [vmem:[#allocation3 + $0x398] sm:$0xff]
      %v1304 = vld [vmem:[#allocation3 + $0x3a0] sm:$0xff]
      %v1305 = vld [vmem:[#allocation3 + $0x3a8] sm:$0xff]
      %v1306 = vld [vmem:[#allocation3 + $0x3b0] sm:$0xff]
      %v1307 = vld [vmem:[#allocation3 + $0x3b8] sm:$0xff]
      %v1308 = vld [vmem:[#allocation3 + $0x3c0] sm:$0xff]
      %v1309 = vld [vmem:[#allocation3 + $0x3c8] sm:$0xff]
      %v1310 = vld [vmem:[#allocation3 + $0x3d0] sm:$0xff]
      %v1311 = vld [vmem:[#allocation3 + $0x3d8] sm:$0xff]
      %v1312 = vld [vmem:[#allocation3 + $0x3e0] sm:$0xff]
      %v1313 = vld [vmem:[#allocation3 + $0x3e8] sm:$0xff]
      %v1314 = vld [vmem:[#allocation3 + $0x3f0] sm:$0xff]
      %v1315 = vld [vmem:[#allocation3 + $0x3f8] sm:$0xff]
      %v1316 = vld [vmem:[#allocation3 + $0x400] sm:$0xff]
      %v1317 = vld [vmem:[#allocation3 + $0x408] sm:$0xff]
      %v1318 = vld [vmem:[#allocation3 + $0x410] sm:$0xff]
      %v1319 = vld [vmem:[#allocation3 + $0x418] sm:$0xff]
      %v1320 = vld [vmem:[#allocation3 + $0x420] sm:$0xff]
      %v1321 = vld [vmem:[#allocation3 + $0x428] sm:$0xff]
      %v1322 = vld [vmem:[#allocation3 + $0x430] sm:$0xff]
      %v1323 = vld [vmem:[#allocation3 + $0x438] sm:$0xff]
      %v1324 = vld [vmem:[#allocation3 + $0x440] sm:$0xff]
      %v1325 = vld [vmem:[#allocation3 + $0x448] sm:$0xff]
      %v1326 = vld [vmem:[#allocation3 + $0x450] sm:$0xff]
      %v1327 = vld [vmem:[#allocation3 + $0x458] sm:$0xff]
      %v1328 = vld [vmem:[#allocation3 + $0x460] sm:$0xff]
      %v1329 = vld [vmem:[#allocation3 + $0x468] sm:$0xff]
      %v1330 = vld [vmem:[#allocation3 + $0x470] sm:$0xff]
      %v1331 = vld [vmem:[#allocation3 + $0x478] sm:$0xff]
      %v1332 = vld [vmem:[#allocation3 + $0x480] sm:$0xff]
      %v1333 = vld [vmem:[#allocation3 + $0x488] sm:$0xff]
      %v1334 = vld [vmem:[#allocation3 + $0x490] sm:$0xff]
      %v1335 = vld [vmem:[#allocation3 + $0x498] sm:$0xff]
      %v1336 = vld [vmem:[#allocation3 + $0x4a0] sm:$0xff]
      %v1337 = vld [vmem:[#allocation3 + $0x4a8] sm:$0xff]
      %v1338 = vld [vmem:[#allocation3 + $0x4b0] sm:$0xff]
      %v1339 = vld [vmem:[#allocation3 + $0x4b8] sm:$0xff]
      %v1340 = vld [vmem:[#allocation3 + $0x4c0] sm:$0xff]
      %v1341 = vld [vmem:[#allocation3 + $0x4c8] sm:$0xff]
      %v1342 = vld [vmem:[#allocation3 + $0x4d0] sm:$0xff]
      %v1343 = vld [vmem:[#allocation3 + $0x4d8] sm:$0xff]
      %v1344 = vld [vmem:[#allocation3 + $0x4e0] sm:$0xff]
      %v1345 = vld [vmem:[#allocation3 + $0x4e8] sm:$0xff]
      %v1346 = vld [vmem:[#allocation3 + $0x4f0] sm:$0xff]
      %v1347 = vld [vmem:[#allocation3 + $0x4f8] sm:$0xff]
      %v1348 = vld [vmem:[#allocation3 + $0x500] sm:$0xff]
      %v1349 = vld [vmem:[#allocation3 + $0x508] sm:$0xff]
      %v1350 = vld [vmem:[#allocation3 + $0x510] sm:$0xff]
      %v1351 = vld [vmem:[#allocation3 + $0x518] sm:$0xff]
      %v1352 = vld [vmem:[#allocation3 + $0x520] sm:$0xff]
      %v1353 = vld [vmem:[#allocation3 + $0x528] sm:$0xff]
      %v1354 = vld [vmem:[#allocation3 + $0x530] sm:$0xff]
      %v1355 = vld [vmem:[#allocation3 + $0x538] sm:$0xff]
      %v1356 = vld [vmem:[#allocation3 + $0x540] sm:$0xff]
      %v1357 = vld [vmem:[#allocation3 + $0x548] sm:$0xff]
      %v1358 = vld [vmem:[#allocation3 + $0x550] sm:$0xff]
      %v1359 = vld [vmem:[#allocation3 + $0x558] sm:$0xff]
      %v1360 = vld [vmem:[#allocation3 + $0x560] sm:$0xff]
      %v1361 = vld [vmem:[#allocation3 + $0x568] sm:$0xff]
      %v1362 = vld [vmem:[#allocation3 + $0x570] sm:$0xff]
      %v1363 = vld [vmem:[#allocation3 + $0x578] sm:$0xff]
      %v1364 = vld [vmem:[#allocation3 + $0x580] sm:$0xff]
      %v1365 = vld [vmem:[#allocation3 + $0x588] sm:$0xff]
      %v1366 = vld [vmem:[#allocation3 + $0x590] sm:$0xff]
      %v1367 = vld [vmem:[#allocation3 + $0x598] sm:$0xff]
      %v1368 = vld [vmem:[#allocation3 + $0x5a0] sm:$0xff]
      %v1369 = vld [vmem:[#allocation3 + $0x5a8] sm:$0xff]
      %v1370 = vld [vmem:[#allocation3 + $0x5b0] sm:$0xff]
      %v1371 = vld [vmem:[#allocation3 + $0x5b8] sm:$0xff]
      %v1372 = vld [vmem:[#allocation3 + $0x5c0] sm:$0xff]
      %v1373 = vld [vmem:[#allocation3 + $0x5c8] sm:$0xff]
      %v1374 = vld [vmem:[#allocation3 + $0x5d0] sm:$0xff]
      %v1375 = vld [vmem:[#allocation3 + $0x5d8] sm:$0xff]
      %v1376 = vld [vmem:[#allocation3 + $0x5e0] sm:$0xff]
      %v1377 = vld [vmem:[#allocation3 + $0x5e8] sm:$0xff]
      %v1378 = vld [vmem:[#allocation3 + $0x5f0] sm:$0xff]
      %v1379 = vld [vmem:[#allocation3 + $0x5f8] sm:$0xff]
      %v1380 = vld [vmem:[#allocation3 + $0x600] sm:$0xff]
      %v1381 = vld [vmem:[#allocation3 + $0x608] sm:$0xff]
      %v1382 = vld [vmem:[#allocation3 + $0x610] sm:$0xff]
      %v1383 = vld [vmem:[#allocation3 + $0x618] sm:$0xff]
      %v1384 = vld [vmem:[#allocation3 + $0x620] sm:$0xff]
      %v1385 = vld [vmem:[#allocation3 + $0x628] sm:$0xff]
      %v1386 = vld [vmem:[#allocation3 + $0x630] sm:$0xff]
      %v1387 = vld [vmem:[#allocation3 + $0x638] sm:$0xff]
      %v1388 = vld [vmem:[#allocation3 + $0x640] sm:$0xff]
      %v1389 = vld [vmem:[#allocation3 + $0x648] sm:$0xff]
      %v1390 = vld [vmem:[#allocation3 + $0x650] sm:$0xff]
      %v1391 = vld [vmem:[#allocation3 + $0x658] sm:$0xff]
      %v1392 = vld [vmem:[#allocation3 + $0x660] sm:$0xff]
      %v1393 = vld [vmem:[#allocation3 + $0x668] sm:$0xff]
      %v1394 = vld [vmem:[#allocation3 + $0x670] sm:$0xff]
      %v1395 = vld [vmem:[#allocation3 + $0x678] sm:$0xff]
      %v1396 = vld [vmem:[#allocation3 + $0x680] sm:$0xff]
      %v1397 = vld [vmem:[#allocation3 + $0x688] sm:$0xff]
      %v1398 = vld [vmem:[#allocation3 + $0x690] sm:$0xff]
      %v1399 = vld [vmem:[#allocation3 + $0x698] sm:$0xff]
      %v1400 = vld [vmem:[#allocation3 + $0x6a0] sm:$0xff]
      %v1401 = vld [vmem:[#allocation3 + $0x6a8] sm:$0xff]
      %v1402 = vld [vmem:[#allocation3 + $0x6b0] sm:$0xff]
      %v1403 = vld [vmem:[#allocation3 + $0x6b8] sm:$0xff]
      %v1404 = vld [vmem:[%s2] sm:$0xff]
      %1406 = vset.pattern.permute.xlu0 0
      %1407 = vperm.xlu0 %1406, %v1404
      %v1408 = vpop.permute.xlu0 %1407
      %vm1410 = vcmask 719872
      %v1412 = vsel %vm1410, %v1187, 0
      %1414 = vmatpush.msra.mxu0 %v1308
      %1415 = vmatpush.msra.mxu0 %v1300
      %1416 = vmatpush.msra.mxu0 %v1292
      %1417 = vmatpush.msra.mxu0 %v1284
      %1418 = vmatpush.msra.mxu0 %v1276
      %1419 = vmatpush.msra.mxu0 %v1268
      %1420 = vmatpush.msra.mxu0 %v1260
      %1421 = vmatpush.msra.mxu0 %v1252
      %1422 = vmatpush.msra.mxu0 %v1244
      %1423 = vmatpush.msra.mxu0 %v1236
      %1424 = vmatpush.msra.mxu0 %v1228
      %1425 = vmatpush.msra.mxu0 %v1220
      %1426 = vmatpush.msra.mxu0 %v1212
      %1427 = vmatpush.msra.mxu0 %v1204
      %1428 = vmatpush.msra.mxu0 %v1196
      %1429 = vmatpush.msra.mxu0 %v1188
      %1430 = vmatmul.f32.gmra.mxu0 %v1186
      %v1431 = vpop.f32.mrf.mxu0
      %v1432 = vadd.f32 %v1408, %v1431
      %1433 = vdwg.mxu0
      %1434 = vmatpush.msra.mxu0 0.0
      %1435 = vmatpush.msra.mxu0 0.0
      %1436 = vmatpush.msra.mxu0 0.0
      %1437 = vmatpush.msra.mxu0 0.0
      %1438 = vmatpush.msra.mxu0 0.0
      %1439 = vmatpush.msra.mxu0 %v1396
      %1440 = vmatpush.msra.mxu0 %v1388
      %1441 = vmatpush.msra.mxu0 %v1380
      %1442 = vmatpush.msra.mxu0 %v1372
      %1443 = vmatpush.msra.mxu0 %v1364
      %1444 = vmatpush.msra.mxu0 %v1356
      %1445 = vmatpush.msra.mxu0 %v1348
      %1446 = vmatpush.msra.mxu0 %v1340
      %1447 = vmatpush.msra.mxu0 %v1332
      %1448 = vmatpush.msra.mxu0 %v1324
      %1449 = vmatpush.msra.mxu0 %v1316
      %1450 = vmatmul.f32.gmra.mxu0 %v1412
      %v1451 = vpop.f32.mrf.mxu0
      %v1452 = vadd.f32 %v1432, %v1451
      %1453 = vdwg.mxu0
      %1454 = vmatpush.msra.mxu0 %v1309
      %1455 = vmatpush.msra.mxu0 %v1301
      %1456 = vmatpush.msra.mxu0 %v1293
      %1457 = vmatpush.msra.mxu0 %v1285
      %1458 = vmatpush.msra.mxu0 %v1277
      %1459 = vmatpush.msra.mxu0 %v1269
      %1460 = vmatpush.msra.mxu0 %v1261
      %1461 = vmatpush.msra.mxu0 %v1253
      %1462 = vmatpush.msra.mxu0 %v1245
      %1463 = vmatpush.msra.mxu0 %v1237
      %1464 = vmatpush.msra.mxu0 %v1229
      %1465 = vmatpush.msra.mxu0 %v1221
      %1466 = vmatpush.msra.mxu0 %v1213
      %1467 = vmatpush.msra.mxu0 %v1205
      %1468 = vmatpush.msra.mxu0 %v1197
      %1469 = vmatpush.msra.mxu0 %v1189
      %1470 = vmatmul.f32.gmra.mxu0 %v1186
      %v1471 = vpop.f32.mrf.mxu0
      %v1472 = vadd.f32 %v1408, %v1471
      %1473 = vdwg.mxu0
      %1474 = vmatpush.msra.mxu0 0.0
      %1475 = vmatpush.msra.mxu0 0.0
      %1476 = vmatpush.msra.mxu0 0.0
      %1477 = vmatpush.msra.mxu0 0.0
      %1478 = vmatpush.msra.mxu0 0.0
      %1479 = vmatpush.msra.mxu0 %v1397
      %1480 = vmatpush.msra.mxu0 %v1389
      %1481 = vmatpush.msra.mxu0 %v1381
      %1482 = vmatpush.msra.mxu0 %v1373
      %1483 = vmatpush.msra.mxu0 %v1365
      %1484 = vmatpush.msra.mxu0 %v1357
      %1485 = vmatpush.msra.mxu0 %v1349
      %1486 = vmatpush.msra.mxu0 %v1341
      %1487 = vmatpush.msra.mxu0 %v1333
      %1488 = vmatpush.msra.mxu0 %v1325
      %1489 = vmatpush.msra.mxu0 %v1317
      %1490 = vmatmul.f32.gmra.mxu0 %v1412
      %v1491 = vpop.f32.mrf.mxu0
      %v1492 = vadd.f32 %v1472, %v1491
      %1493 = vdwg.mxu0
      %1494 = vmatpush.msra.mxu0 %v1310
      %1495 = vmatpush.msra.mxu0 %v1302
      %1496 = vmatpush.msra.mxu0 %v1294
      %1497 = vmatpush.msra.mxu0 %v1286
      %1498 = vmatpush.msra.mxu0 %v1278
      %1499 = vmatpush.msra.mxu0 %v1270
      %1500 = vmatpush.msra.mxu0 %v1262
      %1501 = vmatpush.msra.mxu0 %v1254
      %1502 = vmatpush.msra.mxu0 %v1246
      %1503 = vmatpush.msra.mxu0 %v1238
      %1504 = vmatpush.msra.mxu0 %v1230
      %1505 = vmatpush.msra.mxu0 %v1222
      %1506 = vmatpush.msra.mxu0 %v1214
      %1507 = vmatpush.msra.mxu0 %v1206
      %1508 = vmatpush.msra.mxu0 %v1198
      %1509 = vmatpush.msra.mxu0 %v1190
      %1510 = vmatmul.f32.gmra.mxu0 %v1186
      %v1511 = vpop.f32.mrf.mxu0
      %v1512 = vadd.f32 %v1408, %v1511
      %1513 = vdwg.mxu0
      %1514 = vmatpush.msra.mxu0 0.0
      %1515 = vmatpush.msra.mxu0 0.0
      %1516 = vmatpush.msra.mxu0 0.0
      %1517 = vmatpush.msra.mxu0 0.0
      %1518 = vmatpush.msra.mxu0 0.0
      %1519 = vmatpush.msra.mxu0 %v1398
      %1520 = vmatpush.msra.mxu0 %v1390
      %1521 = vmatpush.msra.mxu0 %v1382
      %1522 = vmatpush.msra.mxu0 %v1374
      %1523 = vmatpush.msra.mxu0 %v1366
      %1524 = vmatpush.msra.mxu0 %v1358
      %1525 = vmatpush.msra.mxu0 %v1350
      %1526 = vmatpush.msra.mxu0 %v1342
      %1527 = vmatpush.msra.mxu0 %v1334
      %1528 = vmatpush.msra.mxu0 %v1326
      %1529 = vmatpush.msra.mxu0 %v1318
      %1530 = vmatmul.f32.gmra.mxu0 %v1412
      %v1531 = vpop.f32.mrf.mxu0
      %v1532 = vadd.f32 %v1512, %v1531
      %1533 = vdwg.mxu0
      %1534 = vmatpush.msra.mxu0 %v1311
      %1535 = vmatpush.msra.mxu0 %v1303
      %1536 = vmatpush.msra.mxu0 %v1295
      %1537 = vmatpush.msra.mxu0 %v1287
      %1538 = vmatpush.msra.mxu0 %v1279
      %1539 = vmatpush.msra.mxu0 %v1271
      %1540 = vmatpush.msra.mxu0 %v1263
      %1541 = vmatpush.msra.mxu0 %v1255
      %1542 = vmatpush.msra.mxu0 %v1247
      %1543 = vmatpush.msra.mxu0 %v1239
      %1544 = vmatpush.msra.mxu0 %v1231
      %1545 = vmatpush.msra.mxu0 %v1223
      %1546 = vmatpush.msra.mxu0 %v1215
      %1547 = vmatpush.msra.mxu0 %v1207
      %1548 = vmatpush.msra.mxu0 %v1199
      %1549 = vmatpush.msra.mxu0 %v1191
      %1550 = vmatmul.f32.gmra.mxu0 %v1186
      %v1551 = vpop.f32.mrf.mxu0
      %v1552 = vadd.f32 %v1408, %v1551
      %1553 = vdwg.mxu0
      %1554 = vmatpush.msra.mxu0 0.0
      %1555 = vmatpush.msra.mxu0 0.0
      %1556 = vmatpush.msra.mxu0 0.0
      %1557 = vmatpush.msra.mxu0 0.0
      %1558 = vmatpush.msra.mxu0 0.0
      %1559 = vmatpush.msra.mxu0 %v1399
      %1560 = vmatpush.msra.mxu0 %v1391
      %1561 = vmatpush.msra.mxu0 %v1383
      %1562 = vmatpush.msra.mxu0 %v1375
      %1563 = vmatpush.msra.mxu0 %v1367
      %1564 = vmatpush.msra.mxu0 %v1359
      %1565 = vmatpush.msra.mxu0 %v1351
      %1566 = vmatpush.msra.mxu0 %v1343
      %1567 = vmatpush.msra.mxu0 %v1335
      %1568 = vmatpush.msra.mxu0 %v1327
      %1569 = vmatpush.msra.mxu0 %v1319
      %1570 = vmatmul.f32.gmra.mxu0 %v1412
      %v1571 = vpop.f32.mrf.mxu0
      %v1572 = vadd.f32 %v1552, %v1571
      %1573 = vdwg.mxu0
      %1574 = vmatpush.msra.mxu0 %v1312
      %1575 = vmatpush.msra.mxu0 %v1304
      %1576 = vmatpush.msra.mxu0 %v1296
      %1577 = vmatpush.msra.mxu0 %v1288
      %1578 = vmatpush.msra.mxu0 %v1280
      %1579 = vmatpush.msra.mxu0 %v1272
      %1580 = vmatpush.msra.mxu0 %v1264
      %1581 = vmatpush.msra.mxu0 %v1256
      %1582 = vmatpush.msra.mxu0 %v1248
      %1583 = vmatpush.msra.mxu0 %v1240
      %1584 = vmatpush.msra.mxu0 %v1232
      %1585 = vmatpush.msra.mxu0 %v1224
      %1586 = vmatpush.msra.mxu0 %v1216
      %1587 = vmatpush.msra.mxu0 %v1208
      %1588 = vmatpush.msra.mxu0 %v1200
      %1589 = vmatpush.msra.mxu0 %v1192
      %1590 = vmatmul.f32.gmra.mxu0 %v1186
      %v1591 = vpop.f32.mrf.mxu0
      %v1592 = vadd.f32 %v1408, %v1591
      %1593 = vdwg.mxu0
      %1594 = vmatpush.msra.mxu0 0.0
      %1595 = vmatpush.msra.mxu0 0.0
      %1596 = vmatpush.msra.mxu0 0.0
      %1597 = vmatpush.msra.mxu0 0.0
      %1598 = vmatpush.msra.mxu0 0.0
      %1599 = vmatpush.msra.mxu0 %v1400
      %1600 = vmatpush.msra.mxu0 %v1392
      %1601 = vmatpush.msra.mxu0 %v1384
      %1602 = vmatpush.msra.mxu0 %v1376
      %1603 = vmatpush.msra.mxu0 %v1368
      %1604 = vmatpush.msra.mxu0 %v1360
      %1605 = vmatpush.msra.mxu0 %v1352
      %1606 = vmatpush.msra.mxu0 %v1344
      %1607 = vmatpush.msra.mxu0 %v1336
      %1608 = vmatpush.msra.mxu0 %v1328
      %1609 = vmatpush.msra.mxu0 %v1320
      %1610 = vmatmul.f32.gmra.mxu0 %v1412
      %v1611 = vpop.f32.mrf.mxu0
      %v1612 = vadd.f32 %v1592, %v1611
      %1613 = vdwg.mxu0
      %1614 = vmatpush.msra.mxu0 %v1313
      %1615 = vmatpush.msra.mxu0 %v1305
      %1616 = vmatpush.msra.mxu0 %v1297
      %1617 = vmatpush.msra.mxu0 %v1289
      %1618 = vmatpush.msra.mxu0 %v1281
      %1619 = vmatpush.msra.mxu0 %v1273
      %1620 = vmatpush.msra.mxu0 %v1265
      %1621 = vmatpush.msra.mxu0 %v1257
      %1622 = vmatpush.msra.mxu0 %v1249
      %1623 = vmatpush.msra.mxu0 %v1241
      %1624 = vmatpush.msra.mxu0 %v1233
      %1625 = vmatpush.msra.mxu0 %v1225
      %1626 = vmatpush.msra.mxu0 %v1217
      %1627 = vmatpush.msra.mxu0 %v1209
      %1628 = vmatpush.msra.mxu0 %v1201
      %1629 = vmatpush.msra.mxu0 %v1193
      %1630 = vmatmul.f32.gmra.mxu0 %v1186
      %v1631 = vpop.f32.mrf.mxu0
      %v1632 = vadd.f32 %v1408, %v1631
      %1633 = vdwg.mxu0
      %1634 = vmatpush.msra.mxu0 0.0
      %1635 = vmatpush.msra.mxu0 0.0
      %1636 = vmatpush.msra.mxu0 0.0
      %1637 = vmatpush.msra.mxu0 0.0
      %1638 = vmatpush.msra.mxu0 0.0
      %1639 = vmatpush.msra.mxu0 %v1401
      %1640 = vmatpush.msra.mxu0 %v1393
      %1641 = vmatpush.msra.mxu0 %v1385
      %1642 = vmatpush.msra.mxu0 %v1377
      %1643 = vmatpush.msra.mxu0 %v1369
      %1644 = vmatpush.msra.mxu0 %v1361
      %1645 = vmatpush.msra.mxu0 %v1353
      %1646 = vmatpush.msra.mxu0 %v1345
      %1647 = vmatpush.msra.mxu0 %v1337
      %1648 = vmatpush.msra.mxu0 %v1329
      %1649 = vmatpush.msra.mxu0 %v1321
      %1650 = vmatmul.f32.gmra.mxu0 %v1412
      %v1651 = vpop.f32.mrf.mxu0
      %v1652 = vadd.f32 %v1632, %v1651
      %1653 = vdwg.mxu0
      %1654 = vmatpush.msra.mxu0 %v1314
      %1655 = vmatpush.msra.mxu0 %v1306
      %1656 = vmatpush.msra.mxu0 %v1298
      %1657 = vmatpush.msra.mxu0 %v1290
      %1658 = vmatpush.msra.mxu0 %v1282
      %1659 = vmatpush.msra.mxu0 %v1274
      %1660 = vmatpush.msra.mxu0 %v1266
      %1661 = vmatpush.msra.mxu0 %v1258
      %1662 = vmatpush.msra.mxu0 %v1250
      %1663 = vmatpush.msra.mxu0 %v1242
      %1664 = vmatpush.msra.mxu0 %v1234
      %1665 = vmatpush.msra.mxu0 %v1226
      %1666 = vmatpush.msra.mxu0 %v1218
      %1667 = vmatpush.msra.mxu0 %v1210
      %1668 = vmatpush.msra.mxu0 %v1202
      %1669 = vmatpush.msra.mxu0 %v1194
      %1670 = vmatmul.f32.gmra.mxu0 %v1186
      %v1671 = vpop.f32.mrf.mxu0
      %v1672 = vadd.f32 %v1408, %v1671
      %1673 = vdwg.mxu0
      %1674 = vmatpush.msra.mxu0 0.0
      %1675 = vmatpush.msra.mxu0 0.0
      %1676 = vmatpush.msra.mxu0 0.0
      %1677 = vmatpush.msra.mxu0 0.0
      %1678 = vmatpush.msra.mxu0 0.0
      %1679 = vmatpush.msra.mxu0 %v1402
      %1680 = vmatpush.msra.mxu0 %v1394
      %1681 = vmatpush.msra.mxu0 %v1386
      %1682 = vmatpush.msra.mxu0 %v1378
      %1683 = vmatpush.msra.mxu0 %v1370
      %1684 = vmatpush.msra.mxu0 %v1362
      %1685 = vmatpush.msra.mxu0 %v1354
      %1686 = vmatpush.msra.mxu0 %v1346
      %1687 = vmatpush.msra.mxu0 %v1338
      %1688 = vmatpush.msra.mxu0 %v1330
      %1689 = vmatpush.msra.mxu0 %v1322
      %1690 = vmatmul.f32.gmra.mxu0 %v1412
      %v1691 = vpop.f32.mrf.mxu0
      %v1692 = vadd.f32 %v1672, %v1691
      %1693 = vdwg.mxu0
      %1694 = vmatpush.msra.mxu0 %v1315
      %1695 = vmatpush.msra.mxu0 %v1307
      %1696 = vmatpush.msra.mxu0 %v1299
      %1697 = vmatpush.msra.mxu0 %v1291
      %1698 = vmatpush.msra.mxu0 %v1283
      %1699 = vmatpush.msra.mxu0 %v1275
      %1700 = vmatpush.msra.mxu0 %v1267
      %1701 = vmatpush.msra.mxu0 %v1259
      %1702 = vmatpush.msra.mxu0 %v1251
      %1703 = vmatpush.msra.mxu0 %v1243
      %1704 = vmatpush.msra.mxu0 %v1235
      %1705 = vmatpush.msra.mxu0 %v1227
      %1706 = vmatpush.msra.mxu0 %v1219
      %1707 = vmatpush.msra.mxu0 %v1211
      %1708 = vmatpush.msra.mxu0 %v1203
      %1709 = vmatpush.msra.mxu0 %v1195
      %1710 = vmatmul.f32.gmra.mxu0 %v1186
      %v1711 = vpop.f32.mrf.mxu0
      %v1712 = vadd.f32 %v1408, %v1711
      %1713 = vdwg.mxu0
      %1714 = vmatpush.msra.mxu0 0.0
      %1715 = vmatpush.msra.mxu0 0.0
      %1716 = vmatpush.msra.mxu0 0.0
      %1717 = vmatpush.msra.mxu0 0.0
      %1718 = vmatpush.msra.mxu0 0.0
      %1719 = vmatpush.msra.mxu0 %v1403
      %1720 = vmatpush.msra.mxu0 %v1395
      %1721 = vmatpush.msra.mxu0 %v1387
      %1722 = vmatpush.msra.mxu0 %v1379
      %1723 = vmatpush.msra.mxu0 %v1371
      %1724 = vmatpush.msra.mxu0 %v1363
      %1725 = vmatpush.msra.mxu0 %v1355
      %1726 = vmatpush.msra.mxu0 %v1347
      %1727 = vmatpush.msra.mxu0 %v1339
      %1728 = vmatpush.msra.mxu0 %v1331
      %1729 = vmatpush.msra.mxu0 %v1323
      %1730 = vmatmul.f32.gmra.mxu0 %v1412
      %v1731 = vpop.f32.mrf.mxu0
      %v1732 = vadd.f32 %v1712, %v1731
      %1733 = vdwg.mxu0
      %v1734 = vmax.f32 %v1452, 0.0
      %v1735 = vmax.f32 %v1492, 0.0
      %v1736 = vmax.f32 %v1532, 0.0
      %v1737 = vmax.f32 %v1572, 0.0
      %v1738 = vmax.f32 %v1612, 0.0
      %v1739 = vmax.f32 %v1652, 0.0
      %v1740 = vmax.f32 %v1692, 0.0
      %v1741 = vmax.f32 %v1732, 0.0
      %1742 = vst [vmem:[#allocation2] sm:$0xff] %v1734
      %1743 = vst [vmem:[#allocation2 + $0x8] sm:$0xff] %v1735
      %1744 = vst [vmem:[#allocation2 + $0x10] sm:$0xff] %v1736
      %1745 = vst [vmem:[#allocation2 + $0x18] sm:$0xff] %v1737
      %1746 = vst [vmem:[#allocation2 + $0x20] sm:$0xff] %v1738
      %1747 = vst [vmem:[#allocation2 + $0x28] sm:$0xff] %v1739
      %1748 = vst [vmem:[#allocation2 + $0x30] sm:$0xff] %v1740
      %1749 = vst [vmem:[#allocation2 + $0x38] sm:$0xff] %v1741
      %v1750 = vld [vmem:[#allocation2] sm:$0xff]
      %v1751 = vld [vmem:[#allocation2 + $0x8] sm:$0xff]
      %v1752 = vld [vmem:[#allocation2 + $0x10] sm:$0xff]
      %v1753 = vld [vmem:[#allocation2 + $0x18] sm:$0xff]
      %v1754 = vld [vmem:[#allocation2 + $0x20] sm:$0xff]
      %v1755 = vld [vmem:[#allocation2 + $0x28] sm:$0xff]
      %v1756 = vld [vmem:[#allocation2 + $0x30] sm:$0xff]
      %v1757 = vld [vmem:[#allocation2 + $0x38] sm:$0xff]
      %1761 = vrot.lane.b32.xlu0 %v1755, 17
      %v1762 = vpop.permute.xlu0 %1761
      %1763 = vrot.lane.b32.xlu0 %v1756, 17
      %v1764 = vpop.permute.xlu0 %1763
      %1765 = vrot.lane.b32.xlu0 %v1757, 17
      %v1766 = vpop.permute.xlu0 %1765
      %v1767 = vsel %vm331, %v1762, %v1764
      %v1768 = vsel %vm331, %v1764, %v1766
      %1777 = vrot.lane.b32.xlu0 %v1750, 17
      %v1778 = vpop.permute.xlu0 %1777
      %1779 = vrot.lane.b32.xlu0 %v1751, 17
      %v1780 = vpop.permute.xlu0 %1779
      %1781 = vrot.lane.b32.xlu0 %v1752, 17
      %v1782 = vpop.permute.xlu0 %1781
      %1783 = vrot.lane.b32.xlu0 %v1753, 17
      %v1784 = vpop.permute.xlu0 %1783
      %1785 = vrot.lane.b32.xlu0 %v1754, 17
      %v1786 = vpop.permute.xlu0 %1785
      %v1787 = vsel %vm331, %v1778, %v1780
      %v1788 = vsel %vm331, %v1780, %v1782
      %v1789 = vsel %vm331, %v1782, %v1784
      %v1790 = vsel %vm331, %v1784, %v1786
      %v1791 = vsel %vm331, %v1786, %v1762
      %v1798 = vsel %vm331, %v1766, %v1778
      %v1799 = vsel %vm372, %v1767, 0.0
      %v1800 = vsel %vm373, %v1768, 0.0
      %v1801 = vsel %vm374, %v1798, 0.0
      %v1802 = vsel %vm375, %v1787, 0.0
      %v1803 = vsel %vm376, %v1788, 0.0
      %v1804 = vsel %vm377, %v1789, 0.0
      %v1805 = vsel %vm378, %v1790, 0.0
      %v1806 = vsel %vm379, %v1791, 0.0
      %1807 = vst [vmem:[#allocation3] sm:$0xff] %v1799
      %1808 = vst [vmem:[#allocation3 + $0x8] sm:$0xff] %v1800
      %1809 = vst [vmem:[#allocation3 + $0x10] sm:$0xff] %v1801
      %1810 = vst [vmem:[#allocation3 + $0x18] sm:$0xff] %v1802
      %1811 = vst [vmem:[#allocation3 + $0x20] sm:$0xff] %v1803
      %1812 = vst [vmem:[#allocation3 + $0x28] sm:$0xff] %v1804
      %1813 = vst [vmem:[#allocation3 + $0x30] sm:$0xff] %v1805
      %1814 = vst [vmem:[#allocation3 + $0x38] sm:$0xff] %v1806
      %1815 = vrot.lane.b32.xlu0 %v1755, 16
      %v1816 = vpop.permute.xlu0 %1815
      %1817 = vrot.lane.b32.xlu0 %v1756, 16
      %v1818 = vpop.permute.xlu0 %1817
      %1819 = vrot.lane.b32.xlu0 %v1757, 16
      %v1820 = vpop.permute.xlu0 %1819
      %v1821 = vsel %vm402, %v1816, %v1818
      %v1822 = vsel %vm402, %v1818, %v1820
      %1826 = vrot.lane.b32.xlu0 %v1750, 16
      %v1827 = vpop.permute.xlu0 %1826
      %1828 = vrot.lane.b32.xlu0 %v1751, 16
      %v1829 = vpop.permute.xlu0 %1828
      %1830 = vrot.lane.b32.xlu0 %v1752, 16
      %v1831 = vpop.permute.xlu0 %1830
      %1832 = vrot.lane.b32.xlu0 %v1753, 16
      %v1833 = vpop.permute.xlu0 %1832
      %1834 = vrot.lane.b32.xlu0 %v1754, 16
      %v1835 = vpop.permute.xlu0 %1834
      %v1836 = vsel %vm402, %v1827, %v1829
      %v1837 = vsel %vm402, %v1829, %v1831
      %v1838 = vsel %vm402, %v1831, %v1833
      %v1839 = vsel %vm402, %v1833, %v1835
      %v1840 = vsel %vm402, %v1835, %v1816
      %v1847 = vsel %vm402, %v1820, %v1827
      %v1848 = vsel %vm364, %v1821, 0.0
      %v1849 = vsel %vm365, %v1822, 0.0
      %v1850 = vsel %vm366, %v1847, 0.0
      %v1851 = vsel %vm367, %v1836, 0.0
      %v1852 = vsel %vm368, %v1837, 0.0
      %v1853 = vsel %vm369, %v1838, 0.0
      %v1854 = vsel %vm370, %v1839, 0.0
      %v1855 = vsel %vm371, %v1840, 0.0
      %1856 = vst [vmem:[#allocation3 + $0x40] sm:$0xff] %v1848
      %1857 = vst [vmem:[#allocation3 + $0x48] sm:$0xff] %v1849
      %1858 = vst [vmem:[#allocation3 + $0x50] sm:$0xff] %v1850
      %1859 = vst [vmem:[#allocation3 + $0x58] sm:$0xff] %v1851
      %1860 = vst [vmem:[#allocation3 + $0x60] sm:$0xff] %v1852
      %1861 = vst [vmem:[#allocation3 + $0x68] sm:$0xff] %v1853
      %1862 = vst [vmem:[#allocation3 + $0x70] sm:$0xff] %v1854
      %1863 = vst [vmem:[#allocation3 + $0x78] sm:$0xff] %v1855
      %1864 = vrot.lane.b32.xlu0 %v1755, 15
      %v1865 = vpop.permute.xlu0 %1864
      %1866 = vrot.lane.b32.xlu0 %v1756, 15
      %v1867 = vpop.permute.xlu0 %1866
      %1868 = vrot.lane.b32.xlu0 %v1757, 15
      %v1869 = vpop.permute.xlu0 %1868
      %v1870 = vsel %vm452, %v1865, %v1867
      %v1871 = vsel %vm452, %v1867, %v1869
      %1875 = vrot.lane.b32.xlu0 %v1750, 15
      %v1876 = vpop.permute.xlu0 %1875
      %1877 = vrot.lane.b32.xlu0 %v1751, 15
      %v1878 = vpop.permute.xlu0 %1877
      %1879 = vrot.lane.b32.xlu0 %v1752, 15
      %v1880 = vpop.permute.xlu0 %1879
      %1881 = vrot.lane.b32.xlu0 %v1753, 15
      %v1882 = vpop.permute.xlu0 %1881
      %1883 = vrot.lane.b32.xlu0 %v1754, 15
      %v1884 = vpop.permute.xlu0 %1883
      %v1885 = vsel %vm452, %v1876, %v1878
      %v1886 = vsel %vm452, %v1878, %v1880
      %v1887 = vsel %vm452, %v1880, %v1882
      %v1888 = vsel %vm452, %v1882, %v1884
      %v1889 = vsel %vm452, %v1884, %v1865
      %v1896 = vsel %vm452, %v1869, %v1876
      %v1897 = vsel %vm480, %v1870, 0.0
      %v1898 = vsel %vm481, %v1871, 0.0
      %v1899 = vsel %vm482, %v1896, 0.0
      %v1900 = vsel %vm483, %v1885, 0.0
      %v1901 = vsel %vm484, %v1886, 0.0
      %v1902 = vsel %vm485, %v1887, 0.0
      %v1903 = vsel %vm486, %v1888, 0.0
      %v1904 = vsel %vm487, %v1889, 0.0
      %1905 = vst [vmem:[#allocation3 + $0x80] sm:$0xff] %v1897
      %1906 = vst [vmem:[#allocation3 + $0x88] sm:$0xff] %v1898
      %1907 = vst [vmem:[#allocation3 + $0x90] sm:$0xff] %v1899
      %1908 = vst [vmem:[#allocation3 + $0x98] sm:$0xff] %v1900
      %1909 = vst [vmem:[#allocation3 + $0xa0] sm:$0xff] %v1901
      %1910 = vst [vmem:[#allocation3 + $0xa8] sm:$0xff] %v1902
      %1911 = vst [vmem:[#allocation3 + $0xb0] sm:$0xff] %v1903
      %1912 = vst [vmem:[#allocation3 + $0xb8] sm:$0xff] %v1904
      %1913 = vrot.lane.b32.xlu0 %v1755, 1
      %v1914 = vpop.permute.xlu0 %1913
      %1915 = vrot.lane.b32.xlu0 %v1756, 1
      %v1916 = vpop.permute.xlu0 %1915
      %1917 = vrot.lane.b32.xlu0 %v1757, 1
      %v1918 = vpop.permute.xlu0 %1917
      %v1919 = vsel %vm510, %v1914, %v1916
      %v1920 = vsel %vm510, %v1916, %v1918
      %1924 = vrot.lane.b32.xlu0 %v1750, 1
      %v1925 = vpop.permute.xlu0 %1924
      %1926 = vrot.lane.b32.xlu0 %v1751, 1
      %v1927 = vpop.permute.xlu0 %1926
      %1928 = vrot.lane.b32.xlu0 %v1752, 1
      %v1929 = vpop.permute.xlu0 %1928
      %1930 = vrot.lane.b32.xlu0 %v1753, 1
      %v1931 = vpop.permute.xlu0 %1930
      %1932 = vrot.lane.b32.xlu0 %v1754, 1
      %v1933 = vpop.permute.xlu0 %1932
      %v1934 = vsel %vm510, %v1925, %v1927
      %v1935 = vsel %vm510, %v1927, %v1929
      %v1936 = vsel %vm510, %v1929, %v1931
      %v1937 = vsel %vm510, %v1931, %v1933
      %v1938 = vsel %vm510, %v1933, %v1914
      %v1945 = vsel %vm510, %v1918, %v1925
      %v1946 = vsel %vm538, %v1919, 0.0
      %v1947 = vsel %vm539, %v1920, 0.0
      %v1948 = vsel %vm540, %v1945, 0.0
      %v1949 = vsel %vm541, %v1934, 0.0
      %v1950 = vsel %vm542, %v1935, 0.0
      %v1951 = vsel %vm543, %v1936, 0.0
      %v1952 = vsel %vm544, %v1937, 0.0
      %v1953 = vsel %vm545, %v1938, 0.0
      %1954 = vst [vmem:[#allocation3 + $0xc0] sm:$0xff] %v1946
      %1955 = vst [vmem:[#allocation3 + $0xc8] sm:$0xff] %v1947
      %1956 = vst [vmem:[#allocation3 + $0xd0] sm:$0xff] %v1948
      %1957 = vst [vmem:[#allocation3 + $0xd8] sm:$0xff] %v1949
      %1958 = vst [vmem:[#allocation3 + $0xe0] sm:$0xff] %v1950
      %1959 = vst [vmem:[#allocation3 + $0xe8] sm:$0xff] %v1951
      %1960 = vst [vmem:[#allocation3 + $0xf0] sm:$0xff] %v1952
      %1961 = vst [vmem:[#allocation3 + $0xf8] sm:$0xff] %v1953
      %v1962 = vsel %vm266, %v1756, 0.0
      %v1963 = vsel %vm267, %v1757, 0.0
      %v1964 = vsel %vm268, %v1750, 0.0
      %v1965 = vsel %vm269, %v1751, 0.0
      %v1966 = vsel %vm270, %v1752, 0.0
      %v1967 = vsel %vm271, %v1753, 0.0
      %v1968 = vsel %vm272, %v1754, 0.0
      %v1969 = vsel %vm273, %v1755, 0.0
      %1970 = vst [vmem:[#allocation3 + $0x100] sm:$0xff] %v1962
      %1971 = vst [vmem:[#allocation3 + $0x108] sm:$0xff] %v1963
      %1972 = vst [vmem:[#allocation3 + $0x110] sm:$0xff] %v1964
      %1973 = vst [vmem:[#allocation3 + $0x118] sm:$0xff] %v1965
      %1974 = vst [vmem:[#allocation3 + $0x120] sm:$0xff] %v1966
      %1975 = vst [vmem:[#allocation3 + $0x128] sm:$0xff] %v1967
      %1976 = vst [vmem:[#allocation3 + $0x130] sm:$0xff] %v1968
      %1977 = vst [vmem:[#allocation3 + $0x138] sm:$0xff] %v1969
      %1978 = vrot.lane.b32.xlu0 %v1756, 127
      %v1979 = vpop.permute.xlu0 %1978
      %1980 = vrot.lane.b32.xlu0 %v1757, 127
      %v1981 = vpop.permute.xlu0 %1980
      %v1982 = vsel %vm582, %v1979, %v1981
      %1985 = vrot.lane.b32.xlu0 %v1750, 127
      %v1986 = vpop.permute.xlu0 %1985
      %1987 = vrot.lane.b32.xlu0 %v1751, 127
      %v1988 = vpop.permute.xlu0 %1987
      %1989 = vrot.lane.b32.xlu0 %v1752, 127
      %v1990 = vpop.permute.xlu0 %1989
      %1991 = vrot.lane.b32.xlu0 %v1753, 127
      %v1992 = vpop.permute.xlu0 %1991
      %1993 = vrot.lane.b32.xlu0 %v1754, 127
      %v1994 = vpop.permute.xlu0 %1993
      %1995 = vrot.lane.b32.xlu0 %v1755, 127
      %v1996 = vpop.permute.xlu0 %1995
      %v1997 = vsel %vm582, %v1986, %v1988
      %v1998 = vsel %vm582, %v1988, %v1990
      %v1999 = vsel %vm582, %v1990, %v1992
      %v2000 = vsel %vm582, %v1992, %v1994
      %v2001 = vsel %vm582, %v1994, %v1996
      %v2002 = vsel %vm582, %v1996, %v1979
      %v2010 = vsel %vm582, %v1981, %v1986
      %v2011 = vsel %vm612, %v1982, 0.0
      %v2012 = vsel %vm613, %v2010, 0.0
      %v2013 = vsel %vm614, %v1997, 0.0
      %v2014 = vsel %vm615, %v1998, 0.0
      %v2015 = vsel %vm616, %v1999, 0.0
      %v2016 = vsel %vm617, %v2000, 0.0
      %v2017 = vsel %vm618, %v2001, 0.0
      %v2018 = vsel %vm619, %v2002, 0.0
      %2019 = vst [vmem:[#allocation3 + $0x140] sm:$0xff] %v2011
      %2020 = vst [vmem:[#allocation3 + $0x148] sm:$0xff] %v2012
      %2021 = vst [vmem:[#allocation3 + $0x150] sm:$0xff] %v2013
      %2022 = vst [vmem:[#allocation3 + $0x158] sm:$0xff] %v2014
      %2023 = vst [vmem:[#allocation3 + $0x160] sm:$0xff] %v2015
      %2024 = vst [vmem:[#allocation3 + $0x168] sm:$0xff] %v2016
      %2025 = vst [vmem:[#allocation3 + $0x170] sm:$0xff] %v2017
      %2026 = vst [vmem:[#allocation3 + $0x178] sm:$0xff] %v2018
      %2027 = vrot.lane.b32.xlu0 %v1756, 113
      %v2028 = vpop.permute.xlu0 %2027
      %2029 = vrot.lane.b32.xlu0 %v1757, 113
      %v2030 = vpop.permute.xlu0 %2029
      %v2031 = vsel %vm640, %v2028, %v2030
      %2034 = vrot.lane.b32.xlu0 %v1750, 113
      %v2035 = vpop.permute.xlu0 %2034
      %2036 = vrot.lane.b32.xlu0 %v1751, 113
      %v2037 = vpop.permute.xlu0 %2036
      %2038 = vrot.lane.b32.xlu0 %v1752, 113
      %v2039 = vpop.permute.xlu0 %2038
      %2040 = vrot.lane.b32.xlu0 %v1753, 113
      %v2041 = vpop.permute.xlu0 %2040
      %2042 = vrot.lane.b32.xlu0 %v1754, 113
      %v2043 = vpop.permute.xlu0 %2042
      %2044 = vrot.lane.b32.xlu0 %v1755, 113
      %v2045 = vpop.permute.xlu0 %2044
      %v2046 = vsel %vm640, %v2035, %v2037
      %v2047 = vsel %vm640, %v2037, %v2039
      %v2048 = vsel %vm640, %v2039, %v2041
      %v2049 = vsel %vm640, %v2041, %v2043
      %v2050 = vsel %vm640, %v2043, %v2045
      %v2051 = vsel %vm640, %v2045, %v2028
      %v2059 = vsel %vm640, %v2030, %v2035
      %v2060 = vsel %vm678, %v2031, 0.0
      %v2061 = vsel %vm679, %v2059, 0.0
      %v2062 = vsel %vm680, %v2046, 0.0
      %v2063 = vsel %vm681, %v2047, 0.0
      %v2064 = vsel %vm682, %v2048, 0.0
      %v2065 = vsel %vm683, %v2049, 0.0
      %v2066 = vsel %vm684, %v2050, 0.0
      %v2067 = vsel %vm685, %v2051, 0.0
      %2068 = vst [vmem:[#allocation3 + $0x180] sm:$0xff] %v2060
      %2069 = vst [vmem:[#allocation3 + $0x188] sm:$0xff] %v2061
      %2070 = vst [vmem:[#allocation3 + $0x190] sm:$0xff] %v2062
      %2071 = vst [vmem:[#allocation3 + $0x198] sm:$0xff] %v2063
      %2072 = vst [vmem:[#allocation3 + $0x1a0] sm:$0xff] %v2064
      %2073 = vst [vmem:[#allocation3 + $0x1a8] sm:$0xff] %v2065
      %2074 = vst [vmem:[#allocation3 + $0x1b0] sm:$0xff] %v2066
      %2075 = vst [vmem:[#allocation3 + $0x1b8] sm:$0xff] %v2067
      %2076 = vrot.lane.b32.xlu0 %v1756, 112
      %v2077 = vpop.permute.xlu0 %2076
      %2078 = vrot.lane.b32.xlu0 %v1757, 112
      %v2079 = vpop.permute.xlu0 %2078
      %v2080 = vsel %vm706, %v2077, %v2079
      %2083 = vrot.lane.b32.xlu0 %v1750, 112
      %v2084 = vpop.permute.xlu0 %2083
      %2085 = vrot.lane.b32.xlu0 %v1751, 112
      %v2086 = vpop.permute.xlu0 %2085
      %2087 = vrot.lane.b32.xlu0 %v1752, 112
      %v2088 = vpop.permute.xlu0 %2087
      %2089 = vrot.lane.b32.xlu0 %v1753, 112
      %v2090 = vpop.permute.xlu0 %2089
      %2091 = vrot.lane.b32.xlu0 %v1754, 112
      %v2092 = vpop.permute.xlu0 %2091
      %2093 = vrot.lane.b32.xlu0 %v1755, 112
      %v2094 = vpop.permute.xlu0 %2093
      %v2095 = vsel %vm706, %v2084, %v2086
      %v2096 = vsel %vm706, %v2086, %v2088
      %v2097 = vsel %vm706, %v2088, %v2090
      %v2098 = vsel %vm706, %v2090, %v2092
      %v2099 = vsel %vm706, %v2092, %v2094
      %v2100 = vsel %vm706, %v2094, %v2077
      %v2108 = vsel %vm706, %v2079, %v2084
      %v2109 = vsel %vm670, %v2080, 0.0
      %v2110 = vsel %vm671, %v2108, 0.0
      %v2111 = vsel %vm672, %v2095, 0.0
      %v2112 = vsel %vm673, %v2096, 0.0
      %v2113 = vsel %vm674, %v2097, 0.0
      %v2114 = vsel %vm675, %v2098, 0.0
      %v2115 = vsel %vm676, %v2099, 0.0
      %v2116 = vsel %vm677, %v2100, 0.0
      %2117 = vst [vmem:[#allocation3 + $0x1c0] sm:$0xff] %v2109
      %2118 = vst [vmem:[#allocation3 + $0x1c8] sm:$0xff] %v2110
      %2119 = vst [vmem:[#allocation3 + $0x1d0] sm:$0xff] %v2111
      %2120 = vst [vmem:[#allocation3 + $0x1d8] sm:$0xff] %v2112
      %2121 = vst [vmem:[#allocation3 + $0x1e0] sm:$0xff] %v2113
      %2122 = vst [vmem:[#allocation3 + $0x1e8] sm:$0xff] %v2114
      %2123 = vst [vmem:[#allocation3 + $0x1f0] sm:$0xff] %v2115
      %2124 = vst [vmem:[#allocation3 + $0x1f8] sm:$0xff] %v2116
      %2125 = vrot.lane.b32.xlu0 %v1756, 111
      %v2126 = vpop.permute.xlu0 %2125
      %2127 = vrot.lane.b32.xlu0 %v1757, 111
      %v2128 = vpop.permute.xlu0 %2127
      %v2129 = vsel %vm756, %v2126, %v2128
      %2132 = vrot.lane.b32.xlu0 %v1750, 111
      %v2133 = vpop.permute.xlu0 %2132
      %2134 = vrot.lane.b32.xlu0 %v1751, 111
      %v2135 = vpop.permute.xlu0 %2134
      %2136 = vrot.lane.b32.xlu0 %v1752, 111
      %v2137 = vpop.permute.xlu0 %2136
      %2138 = vrot.lane.b32.xlu0 %v1753, 111
      %v2139 = vpop.permute.xlu0 %2138
      %2140 = vrot.lane.b32.xlu0 %v1754, 111
      %v2141 = vpop.permute.xlu0 %2140
      %2142 = vrot.lane.b32.xlu0 %v1755, 111
      %v2143 = vpop.permute.xlu0 %2142
      %v2144 = vsel %vm756, %v2133, %v2135
      %v2145 = vsel %vm756, %v2135, %v2137
      %v2146 = vsel %vm756, %v2137, %v2139
      %v2147 = vsel %vm756, %v2139, %v2141
      %v2148 = vsel %vm756, %v2141, %v2143
      %v2149 = vsel %vm756, %v2143, %v2126
      %v2157 = vsel %vm756, %v2128, %v2133
      %v2158 = vsel %vm786, %v2129, 0.0
      %v2159 = vsel %vm787, %v2157, 0.0
      %v2160 = vsel %vm788, %v2144, 0.0
      %v2161 = vsel %vm789, %v2145, 0.0
      %v2162 = vsel %vm790, %v2146, 0.0
      %v2163 = vsel %vm791, %v2147, 0.0
      %v2164 = vsel %vm792, %v2148, 0.0
      %v2165 = vsel %vm793, %v2149, 0.0
      %2166 = vst [vmem:[#allocation3 + $0x200] sm:$0xff] %v2158
      %2167 = vst [vmem:[#allocation3 + $0x208] sm:$0xff] %v2159
      %2168 = vst [vmem:[#allocation3 + $0x210] sm:$0xff] %v2160
      %2169 = vst [vmem:[#allocation3 + $0x218] sm:$0xff] %v2161
      %2170 = vst [vmem:[#allocation3 + $0x220] sm:$0xff] %v2162
      %2171 = vst [vmem:[#allocation3 + $0x228] sm:$0xff] %v2163
      %2172 = vst [vmem:[#allocation3 + $0x230] sm:$0xff] %v2164
      %2173 = vst [vmem:[#allocation3 + $0x238] sm:$0xff] %v2165
      %v2174 = vsel %vm810, %v1798, 0.0
      %v2175 = vsel %vm811, %v1787, 0.0
      %v2176 = vsel %vm812, %v1788, 0.0
      %v2177 = vsel %vm813, %v1789, 0.0
      %v2178 = vsel %vm814, %v1790, 0.0
      %v2179 = vsel %vm815, %v1791, 0.0
      %v2180 = vsel %vm816, %v1767, 0.0
      %v2181 = vsel %vm817, %v1768, 0.0
      %2182 = vst [vmem:[#allocation3 + $0x240] sm:$0xff] %v2174
      %2183 = vst [vmem:[#allocation3 + $0x248] sm:$0xff] %v2175
      %2184 = vst [vmem:[#allocation3 + $0x250] sm:$0xff] %v2176
      %2185 = vst [vmem:[#allocation3 + $0x258] sm:$0xff] %v2177
      %2186 = vst [vmem:[#allocation3 + $0x260] sm:$0xff] %v2178
      %2187 = vst [vmem:[#allocation3 + $0x268] sm:$0xff] %v2179
      %2188 = vst [vmem:[#allocation3 + $0x270] sm:$0xff] %v2180
      %2189 = vst [vmem:[#allocation3 + $0x278] sm:$0xff] %v2181
      %v2190 = vsel %vm282, %v1847, 0.0
      %v2191 = vsel %vm283, %v1836, 0.0
      %v2192 = vsel %vm284, %v1837, 0.0
      %v2193 = vsel %vm285, %v1838, 0.0
      %v2194 = vsel %vm286, %v1839, 0.0
      %v2195 = vsel %vm287, %v1840, 0.0
      %v2196 = vsel %vm288, %v1821, 0.0
      %v2197 = vsel %vm289, %v1822, 0.0
      %2198 = vst [vmem:[#allocation3 + $0x280] sm:$0xff] %v2190
      %2199 = vst [vmem:[#allocation3 + $0x288] sm:$0xff] %v2191
      %2200 = vst [vmem:[#allocation3 + $0x290] sm:$0xff] %v2192
      %2201 = vst [vmem:[#allocation3 + $0x298] sm:$0xff] %v2193
      %2202 = vst [vmem:[#allocation3 + $0x2a0] sm:$0xff] %v2194
      %2203 = vst [vmem:[#allocation3 + $0x2a8] sm:$0xff] %v2195
      %2204 = vst [vmem:[#allocation3 + $0x2b0] sm:$0xff] %v2196
      %2205 = vst [vmem:[#allocation3 + $0x2b8] sm:$0xff] %v2197
      %v2206 = vsel %vm850, %v1896, 0.0
      %v2207 = vsel %vm851, %v1885, 0.0
      %v2208 = vsel %vm852, %v1886, 0.0
      %v2209 = vsel %vm853, %v1887, 0.0
      %v2210 = vsel %vm854, %v1888, 0.0
      %v2211 = vsel %vm855, %v1889, 0.0
      %v2212 = vsel %vm856, %v1870, 0.0
      %v2213 = vsel %vm857, %v1871, 0.0
      %2214 = vst [vmem:[#allocation3 + $0x2c0] sm:$0xff] %v2206
      %2215 = vst [vmem:[#allocation3 + $0x2c8] sm:$0xff] %v2207
      %2216 = vst [vmem:[#allocation3 + $0x2d0] sm:$0xff] %v2208
      %2217 = vst [vmem:[#allocation3 + $0x2d8] sm:$0xff] %v2209
      %2218 = vst [vmem:[#allocation3 + $0x2e0] sm:$0xff] %v2210
      %2219 = vst [vmem:[#allocation3 + $0x2e8] sm:$0xff] %v2211
      %2220 = vst [vmem:[#allocation3 + $0x2f0] sm:$0xff] %v2212
      %2221 = vst [vmem:[#allocation3 + $0x2f8] sm:$0xff] %v2213
      %v2222 = vsel %vm298, %v1945, 0.0
      %v2223 = vsel %vm299, %v1934, 0.0
      %v2224 = vsel %vm300, %v1935, 0.0
      %v2225 = vsel %vm301, %v1936, 0.0
      %v2226 = vsel %vm302, %v1937, 0.0
      %v2227 = vsel %vm303, %v1938, 0.0
      %v2228 = vsel %vm304, %v1919, 0.0
      %v2229 = vsel %vm305, %v1920, 0.0
      %2230 = vst [vmem:[#allocation3 + $0x300] sm:$0xff] %v2222
      %2231 = vst [vmem:[#allocation3 + $0x308] sm:$0xff] %v2223
      %2232 = vst [vmem:[#allocation3 + $0x310] sm:$0xff] %v2224
      %2233 = vst [vmem:[#allocation3 + $0x318] sm:$0xff] %v2225
      %2234 = vst [vmem:[#allocation3 + $0x320] sm:$0xff] %v2226
      %2235 = vst [vmem:[#allocation3 + $0x328] sm:$0xff] %v2227
      %2236 = vst [vmem:[#allocation3 + $0x330] sm:$0xff] %v2228
      %2237 = vst [vmem:[#allocation3 + $0x338] sm:$0xff] %v2229
      %2238 = vst [vmem:[#allocation3 + $0x340] sm:$0xff] %v1750
      %2239 = vst [vmem:[#allocation3 + $0x348] sm:$0xff] %v1751
      %2240 = vst [vmem:[#allocation3 + $0x350] sm:$0xff] %v1752
      %2241 = vst [vmem:[#allocation3 + $0x358] sm:$0xff] %v1753
      %2242 = vst [vmem:[#allocation3 + $0x360] sm:$0xff] %v1754
      %2243 = vst [vmem:[#allocation3 + $0x368] sm:$0xff] %v1755
      %2244 = vst [vmem:[#allocation3 + $0x370] sm:$0xff] %v1756
      %2245 = vst [vmem:[#allocation3 + $0x378] sm:$0xff] %v1757
      %v2246 = vsel %vm306, %v1997, 0.0
      %v2247 = vsel %vm307, %v1998, 0.0
      %v2248 = vsel %vm308, %v1999, 0.0
      %v2249 = vsel %vm309, %v2000, 0.0
      %v2250 = vsel %vm310, %v2001, 0.0
      %v2251 = vsel %vm311, %v2002, 0.0
      %v2252 = vsel %vm312, %v1982, 0.0
      %v2253 = vsel %vm313, %v2010, 0.0
      %2254 = vst [vmem:[#allocation3 + $0x380] sm:$0xff] %v2246
      %2255 = vst [vmem:[#allocation3 + $0x388] sm:$0xff] %v2247
      %2256 = vst [vmem:[#allocation3 + $0x390] sm:$0xff] %v2248
      %2257 = vst [vmem:[#allocation3 + $0x398] sm:$0xff] %v2249
      %2258 = vst [vmem:[#allocation3 + $0x3a0] sm:$0xff] %v2250
      %2259 = vst [vmem:[#allocation3 + $0x3a8] sm:$0xff] %v2251
      %2260 = vst [vmem:[#allocation3 + $0x3b0] sm:$0xff] %v2252
      %2261 = vst [vmem:[#allocation3 + $0x3b8] sm:$0xff] %v2253
      %v2262 = vsel %vm914, %v2046, 0.0
      %v2263 = vsel %vm915, %v2047, 0.0
      %v2264 = vsel %vm916, %v2048, 0.0
      %v2265 = vsel %vm917, %v2049, 0.0
      %v2266 = vsel %vm918, %v2050, 0.0
      %v2267 = vsel %vm919, %v2051, 0.0
      %v2268 = vsel %vm920, %v2031, 0.0
      %v2269 = vsel %vm921, %v2059, 0.0
      %2270 = vst [vmem:[#allocation3 + $0x3c0] sm:$0xff] %v2262
      %2271 = vst [vmem:[#allocation3 + $0x3c8] sm:$0xff] %v2263
      %2272 = vst [vmem:[#allocation3 + $0x3d0] sm:$0xff] %v2264
      %2273 = vst [vmem:[#allocation3 + $0x3d8] sm:$0xff] %v2265
      %2274 = vst [vmem:[#allocation3 + $0x3e0] sm:$0xff] %v2266
      %2275 = vst [vmem:[#allocation3 + $0x3e8] sm:$0xff] %v2267
      %2276 = vst [vmem:[#allocation3 + $0x3f0] sm:$0xff] %v2268
      %2277 = vst [vmem:[#allocation3 + $0x3f8] sm:$0xff] %v2269
      %v2278 = vsel %vm290, %v2095, 0.0
      %v2279 = vsel %vm291, %v2096, 0.0
      %v2280 = vsel %vm292, %v2097, 0.0
      %v2281 = vsel %vm293, %v2098, 0.0
      %v2282 = vsel %vm294, %v2099, 0.0
      %v2283 = vsel %vm295, %v2100, 0.0
      %v2284 = vsel %vm296, %v2080, 0.0
      %v2285 = vsel %vm297, %v2108, 0.0
      %2286 = vst [vmem:[#allocation3 + $0x400] sm:$0xff] %v2278
      %2287 = vst [vmem:[#allocation3 + $0x408] sm:$0xff] %v2279
      %2288 = vst [vmem:[#allocation3 + $0x410] sm:$0xff] %v2280
      %2289 = vst [vmem:[#allocation3 + $0x418] sm:$0xff] %v2281
      %2290 = vst [vmem:[#allocation3 + $0x420] sm:$0xff] %v2282
      %2291 = vst [vmem:[#allocation3 + $0x428] sm:$0xff] %v2283
      %2292 = vst [vmem:[#allocation3 + $0x430] sm:$0xff] %v2284
      %2293 = vst [vmem:[#allocation3 + $0x438] sm:$0xff] %v2285
      %v2294 = vsel %vm954, %v2144, 0.0
      %v2295 = vsel %vm955, %v2145, 0.0
      %v2296 = vsel %vm956, %v2146, 0.0
      %v2297 = vsel %vm957, %v2147, 0.0
      %v2298 = vsel %vm958, %v2148, 0.0
      %v2299 = vsel %vm959, %v2149, 0.0
      %v2300 = vsel %vm960, %v2129, 0.0
      %v2301 = vsel %vm961, %v2157, 0.0
      %2302 = vst [vmem:[#allocation3 + $0x440] sm:$0xff] %v2294
      %2303 = vst [vmem:[#allocation3 + $0x448] sm:$0xff] %v2295
      %2304 = vst [vmem:[#allocation3 + $0x450] sm:$0xff] %v2296
      %2305 = vst [vmem:[#allocation3 + $0x458] sm:$0xff] %v2297
      %2306 = vst [vmem:[#allocation3 + $0x460] sm:$0xff] %v2298
      %2307 = vst [vmem:[#allocation3 + $0x468] sm:$0xff] %v2299
      %2308 = vst [vmem:[#allocation3 + $0x470] sm:$0xff] %v2300
      %2309 = vst [vmem:[#allocation3 + $0x478] sm:$0xff] %v2301
      %v2310 = vsel %vm986, %v1788, 0.0
      %v2311 = vsel %vm987, %v1789, 0.0
      %v2312 = vsel %vm988, %v1790, 0.0
      %v2313 = vsel %vm989, %v1791, 0.0
      %v2314 = vsel %vm990, %v1767, 0.0
      %v2315 = vsel %vm991, %v1768, 0.0
      %v2316 = vsel %vm992, %v1798, 0.0
      %v2317 = vsel %vm993, %v1787, 0.0
      %2318 = vst [vmem:[#allocation3 + $0x480] sm:$0xff] %v2310
      %2319 = vst [vmem:[#allocation3 + $0x488] sm:$0xff] %v2311
      %2320 = vst [vmem:[#allocation3 + $0x490] sm:$0xff] %v2312
      %2321 = vst [vmem:[#allocation3 + $0x498] sm:$0xff] %v2313
      %2322 = vst [vmem:[#allocation3 + $0x4a0] sm:$0xff] %v2314
      %2323 = vst [vmem:[#allocation3 + $0x4a8] sm:$0xff] %v2315
      %2324 = vst [vmem:[#allocation3 + $0x4b0] sm:$0xff] %v2316
      %2325 = vst [vmem:[#allocation3 + $0x4b8] sm:$0xff] %v2317
      %v2326 = vsel %vm978, %v1837, 0.0
      %v2327 = vsel %vm979, %v1838, 0.0
      %v2328 = vsel %vm980, %v1839, 0.0
      %v2329 = vsel %vm981, %v1840, 0.0
      %v2330 = vsel %vm982, %v1821, 0.0
      %v2331 = vsel %vm983, %v1822, 0.0
      %v2332 = vsel %vm984, %v1847, 0.0
      %v2333 = vsel %vm985, %v1836, 0.0
      %2334 = vst [vmem:[#allocation3 + $0x4c0] sm:$0xff] %v2326
      %2335 = vst [vmem:[#allocation3 + $0x4c8] sm:$0xff] %v2327
      %2336 = vst [vmem:[#allocation3 + $0x4d0] sm:$0xff] %v2328
      %2337 = vst [vmem:[#allocation3 + $0x4d8] sm:$0xff] %v2329
      %2338 = vst [vmem:[#allocation3 + $0x4e0] sm:$0xff] %v2330
      %2339 = vst [vmem:[#allocation3 + $0x4e8] sm:$0xff] %v2331
      %2340 = vst [vmem:[#allocation3 + $0x4f0] sm:$0xff] %v2332
      %2341 = vst [vmem:[#allocation3 + $0x4f8] sm:$0xff] %v2333
      %v2342 = vsel %vm1026, %v1886, 0.0
      %v2343 = vsel %vm1027, %v1887, 0.0
      %v2344 = vsel %vm1028, %v1888, 0.0
      %v2345 = vsel %vm1029, %v1889, 0.0
      %v2346 = vsel %vm1030, %v1870, 0.0
      %v2347 = vsel %vm1031, %v1871, 0.0
      %v2348 = vsel %vm1032, %v1896, 0.0
      %v2349 = vsel %vm1033, %v1885, 0.0
      %2350 = vst [vmem:[#allocation3 + $0x500] sm:$0xff] %v2342
      %2351 = vst [vmem:[#allocation3 + $0x508] sm:$0xff] %v2343
      %2352 = vst [vmem:[#allocation3 + $0x510] sm:$0xff] %v2344
      %2353 = vst [vmem:[#allocation3 + $0x518] sm:$0xff] %v2345
      %2354 = vst [vmem:[#allocation3 + $0x520] sm:$0xff] %v2346
      %2355 = vst [vmem:[#allocation3 + $0x528] sm:$0xff] %v2347
      %2356 = vst [vmem:[#allocation3 + $0x530] sm:$0xff] %v2348
      %2357 = vst [vmem:[#allocation3 + $0x538] sm:$0xff] %v2349
      %v2358 = vsel %vm1050, %v1935, 0.0
      %v2359 = vsel %vm1051, %v1936, 0.0
      %v2360 = vsel %vm1052, %v1937, 0.0
      %v2361 = vsel %vm1053, %v1938, 0.0
      %v2362 = vsel %vm1054, %v1919, 0.0
      %v2363 = vsel %vm1055, %v1920, 0.0
      %v2364 = vsel %vm1056, %v1945, 0.0
      %v2365 = vsel %vm1057, %v1934, 0.0
      %2366 = vst [vmem:[#allocation3 + $0x540] sm:$0xff] %v2358
      %2367 = vst [vmem:[#allocation3 + $0x548] sm:$0xff] %v2359
      %2368 = vst [vmem:[#allocation3 + $0x550] sm:$0xff] %v2360
      %2369 = vst [vmem:[#allocation3 + $0x558] sm:$0xff] %v2361
      %2370 = vst [vmem:[#allocation3 + $0x560] sm:$0xff] %v2362
      %2371 = vst [vmem:[#allocation3 + $0x568] sm:$0xff] %v2363
      %2372 = vst [vmem:[#allocation3 + $0x570] sm:$0xff] %v2364
      %2373 = vst [vmem:[#allocation3 + $0x578] sm:$0xff] %v2365
      %v2374 = vsel %vm274, %v1752, 0.0
      %v2375 = vsel %vm275, %v1753, 0.0
      %v2376 = vsel %vm276, %v1754, 0.0
      %v2377 = vsel %vm277, %v1755, 0.0
      %v2378 = vsel %vm278, %v1756, 0.0
      %v2379 = vsel %vm279, %v1757, 0.0
      %v2380 = vsel %vm280, %v1750, 0.0
      %v2381 = vsel %vm281, %v1751, 0.0
      %2382 = vst [vmem:[#allocation3 + $0x580] sm:$0xff] %v2374
      %2383 = vst [vmem:[#allocation3 + $0x588] sm:$0xff] %v2375
      %2384 = vst [vmem:[#allocation3 + $0x590] sm:$0xff] %v2376
      %2385 = vst [vmem:[#allocation3 + $0x598] sm:$0xff] %v2377
      %2386 = vst [vmem:[#allocation3 + $0x5a0] sm:$0xff] %v2378
      %2387 = vst [vmem:[#allocation3 + $0x5a8] sm:$0xff] %v2379
      %2388 = vst [vmem:[#allocation3 + $0x5b0] sm:$0xff] %v2380
      %2389 = vst [vmem:[#allocation3 + $0x5b8] sm:$0xff] %v2381
      %v2390 = vsel %vm1090, %v1999, 0.0
      %v2391 = vsel %vm1091, %v2000, 0.0
      %v2392 = vsel %vm1092, %v2001, 0.0
      %v2393 = vsel %vm1093, %v2002, 0.0
      %v2394 = vsel %vm1094, %v1982, 0.0
      %v2395 = vsel %vm1095, %v2010, 0.0
      %v2396 = vsel %vm1096, %v1997, 0.0
      %v2397 = vsel %vm1097, %v1998, 0.0
      %2398 = vst [vmem:[#allocation3 + $0x5c0] sm:$0xff] %v2390
      %2399 = vst [vmem:[#allocation3 + $0x5c8] sm:$0xff] %v2391
      %2400 = vst [vmem:[#allocation3 + $0x5d0] sm:$0xff] %v2392
      %2401 = vst [vmem:[#allocation3 + $0x5d8] sm:$0xff] %v2393
      %2402 = vst [vmem:[#allocation3 + $0x5e0] sm:$0xff] %v2394
      %2403 = vst [vmem:[#allocation3 + $0x5e8] sm:$0xff] %v2395
      %2404 = vst [vmem:[#allocation3 + $0x5f0] sm:$0xff] %v2396
      %2405 = vst [vmem:[#allocation3 + $0x5f8] sm:$0xff] %v2397
      %v2406 = vsel %vm1122, %v2048, 0.0
      %v2407 = vsel %vm1123, %v2049, 0.0
      %v2408 = vsel %vm1124, %v2050, 0.0
      %v2409 = vsel %vm1125, %v2051, 0.0
      %v2410 = vsel %vm1126, %v2031, 0.0
      %v2411 = vsel %vm1127, %v2059, 0.0
      %v2412 = vsel %vm1128, %v2046, 0.0
      %v2413 = vsel %vm1129, %v2047, 0.0
      %2414 = vst [vmem:[#allocation3 + $0x600] sm:$0xff] %v2406
      %2415 = vst [vmem:[#allocation3 + $0x608] sm:$0xff] %v2407
      %2416 = vst [vmem:[#allocation3 + $0x610] sm:$0xff] %v2408
      %2417 = vst [vmem:[#allocation3 + $0x618] sm:$0xff] %v2409
      %2418 = vst [vmem:[#allocation3 + $0x620] sm:$0xff] %v2410
      %2419 = vst [vmem:[#allocation3 + $0x628] sm:$0xff] %v2411
      %2420 = vst [vmem:[#allocation3 + $0x630] sm:$0xff] %v2412
      %2421 = vst [vmem:[#allocation3 + $0x638] sm:$0xff] %v2413
      %v2422 = vsel %vm1114, %v2097, 0.0
      %v2423 = vsel %vm1115, %v2098, 0.0
      %v2424 = vsel %vm1116, %v2099, 0.0
      %v2425 = vsel %vm1117, %v2100, 0.0
      %v2426 = vsel %vm1118, %v2080, 0.0
      %v2427 = vsel %vm1119, %v2108, 0.0
      %v2428 = vsel %vm1120, %v2095, 0.0
      %v2429 = vsel %vm1121, %v2096, 0.0
      %2430 = vst [vmem:[#allocation3 + $0x640] sm:$0xff] %v2422
      %2431 = vst [vmem:[#allocation3 + $0x648] sm:$0xff] %v2423
      %2432 = vst [vmem:[#allocation3 + $0x650] sm:$0xff] %v2424
      %2433 = vst [vmem:[#allocation3 + $0x658] sm:$0xff] %v2425
      %2434 = vst [vmem:[#allocation3 + $0x660] sm:$0xff] %v2426
      %2435 = vst [vmem:[#allocation3 + $0x668] sm:$0xff] %v2427
      %2436 = vst [vmem:[#allocation3 + $0x670] sm:$0xff] %v2428
      %2437 = vst [vmem:[#allocation3 + $0x678] sm:$0xff] %v2429
      %v2438 = vsel %vm1162, %v2146, 0.0
      %v2439 = vsel %vm1163, %v2147, 0.0
      %v2440 = vsel %vm1164, %v2148, 0.0
      %v2441 = vsel %vm1165, %v2149, 0.0
      %v2442 = vsel %vm1166, %v2129, 0.0
      %v2443 = vsel %vm1167, %v2157, 0.0
      %v2444 = vsel %vm1168, %v2144, 0.0
      %v2445 = vsel %vm1169, %v2145, 0.0
      %2446 = vst [vmem:[#allocation3 + $0x680] sm:$0xff] %v2438
      %2447 = vst [vmem:[#allocation3 + $0x688] sm:$0xff] %v2439
      %2448 = vst [vmem:[#allocation3 + $0x690] sm:$0xff] %v2440
      %2449 = vst [vmem:[#allocation3 + $0x698] sm:$0xff] %v2441
      %2450 = vst [vmem:[#allocation3 + $0x6a0] sm:$0xff] %v2442
      %2451 = vst [vmem:[#allocation3 + $0x6a8] sm:$0xff] %v2443
      %2452 = vst [vmem:[#allocation3 + $0x6b0] sm:$0xff] %v2444
      %2453 = vst [vmem:[#allocation3 + $0x6b8] sm:$0xff] %v2445
      %v2454 = vld [vmem:[%s3] sm:$0xff]
      %v2455 = vld [vmem:[%s3 + $0x8] sm:$0xff]
      %v2456 = vld [vmem:[#allocation3] sm:$0xff]
      %v2457 = vld [vmem:[#allocation3 + $0x8] sm:$0xff]
      %v2458 = vld [vmem:[#allocation3 + $0x10] sm:$0xff]
      %v2459 = vld [vmem:[#allocation3 + $0x18] sm:$0xff]
      %v2460 = vld [vmem:[#allocation3 + $0x20] sm:$0xff]
      %v2461 = vld [vmem:[#allocation3 + $0x28] sm:$0xff]
      %v2462 = vld [vmem:[#allocation3 + $0x30] sm:$0xff]
      %v2463 = vld [vmem:[#allocation3 + $0x38] sm:$0xff]
      %v2464 = vld [vmem:[#allocation3 + $0x40] sm:$0xff]
      %v2465 = vld [vmem:[#allocation3 + $0x48] sm:$0xff]
      %v2466 = vld [vmem:[#allocation3 + $0x50] sm:$0xff]
      %v2467 = vld [vmem:[#allocation3 + $0x58] sm:$0xff]
      %v2468 = vld [vmem:[#allocation3 + $0x60] sm:$0xff]
      %v2469 = vld [vmem:[#allocation3 + $0x68] sm:$0xff]
      %v2470 = vld [vmem:[#allocation3 + $0x70] sm:$0xff]
      %v2471 = vld [vmem:[#allocation3 + $0x78] sm:$0xff]
      %v2472 = vld [vmem:[#allocation3 + $0x80] sm:$0xff]
      %v2473 = vld [vmem:[#allocation3 + $0x88] sm:$0xff]
      %v2474 = vld [vmem:[#allocation3 + $0x90] sm:$0xff]
      %v2475 = vld [vmem:[#allocation3 + $0x98] sm:$0xff]
      %v2476 = vld [vmem:[#allocation3 + $0xa0] sm:$0xff]
      %v2477 = vld [vmem:[#allocation3 + $0xa8] sm:$0xff]
      %v2478 = vld [vmem:[#allocation3 + $0xb0] sm:$0xff]
      %v2479 = vld [vmem:[#allocation3 + $0xb8] sm:$0xff]
      %v2480 = vld [vmem:[#allocation3 + $0xc0] sm:$0xff]
      %v2481 = vld [vmem:[#allocation3 + $0xc8] sm:$0xff]
      %v2482 = vld [vmem:[#allocation3 + $0xd0] sm:$0xff]
      %v2483 = vld [vmem:[#allocation3 + $0xd8] sm:$0xff]
      %v2484 = vld [vmem:[#allocation3 + $0xe0] sm:$0xff]
      %v2485 = vld [vmem:[#allocation3 + $0xe8] sm:$0xff]
      %v2486 = vld [vmem:[#allocation3 + $0xf0] sm:$0xff]
      %v2487 = vld [vmem:[#allocation3 + $0xf8] sm:$0xff]
      %v2488 = vld [vmem:[#allocation3 + $0x100] sm:$0xff]
      %v2489 = vld [vmem:[#allocation3 + $0x108] sm:$0xff]
      %v2490 = vld [vmem:[#allocation3 + $0x110] sm:$0xff]
      %v2491 = vld [vmem:[#allocation3 + $0x118] sm:$0xff]
      %v2492 = vld [vmem:[#allocation3 + $0x120] sm:$0xff]
      %v2493 = vld [vmem:[#allocation3 + $0x128] sm:$0xff]
      %v2494 = vld [vmem:[#allocation3 + $0x130] sm:$0xff]
      %v2495 = vld [vmem:[#allocation3 + $0x138] sm:$0xff]
      %v2496 = vld [vmem:[#allocation3 + $0x140] sm:$0xff]
      %v2497 = vld [vmem:[#allocation3 + $0x148] sm:$0xff]
      %v2498 = vld [vmem:[#allocation3 + $0x150] sm:$0xff]
      %v2499 = vld [vmem:[#allocation3 + $0x158] sm:$0xff]
      %v2500 = vld [vmem:[#allocation3 + $0x160] sm:$0xff]
      %v2501 = vld [vmem:[#allocation3 + $0x168] sm:$0xff]
      %v2502 = vld [vmem:[#allocation3 + $0x170] sm:$0xff]
      %v2503 = vld [vmem:[#allocation3 + $0x178] sm:$0xff]
      %v2504 = vld [vmem:[#allocation3 + $0x180] sm:$0xff]
      %v2505 = vld [vmem:[#allocation3 + $0x188] sm:$0xff]
      %v2506 = vld [vmem:[#allocation3 + $0x190] sm:$0xff]
      %v2507 = vld [vmem:[#allocation3 + $0x198] sm:$0xff]
      %v2508 = vld [vmem:[#allocation3 + $0x1a0] sm:$0xff]
      %v2509 = vld [vmem:[#allocation3 + $0x1a8] sm:$0xff]
      %v2510 = vld [vmem:[#allocation3 + $0x1b0] sm:$0xff]
      %v2511 = vld [vmem:[#allocation3 + $0x1b8] sm:$0xff]
      %v2512 = vld [vmem:[#allocation3 + $0x1c0] sm:$0xff]
      %v2513 = vld [vmem:[#allocation3 + $0x1c8] sm:$0xff]
      %v2514 = vld [vmem:[#allocation3 + $0x1d0] sm:$0xff]
      %v2515 = vld [vmem:[#allocation3 + $0x1d8] sm:$0xff]
      %v2516 = vld [vmem:[#allocation3 + $0x1e0] sm:$0xff]
      %v2517 = vld [vmem:[#allocation3 + $0x1e8] sm:$0xff]
      %v2518 = vld [vmem:[#allocation3 + $0x1f0] sm:$0xff]
      %v2519 = vld [vmem:[#allocation3 + $0x1f8] sm:$0xff]
      %v2520 = vld [vmem:[#allocation3 + $0x200] sm:$0xff]
      %v2521 = vld [vmem:[#allocation3 + $0x208] sm:$0xff]
      %v2522 = vld [vmem:[#allocation3 + $0x210] sm:$0xff]
      %v2523 = vld [vmem:[#allocation3 + $0x218] sm:$0xff]
      %v2524 = vld [vmem:[#allocation3 + $0x220] sm:$0xff]
      %v2525 = vld [vmem:[#allocation3 + $0x228] sm:$0xff]
      %v2526 = vld [vmem:[#allocation3 + $0x230] sm:$0xff]
      %v2527 = vld [vmem:[#allocation3 + $0x238] sm:$0xff]
      %v2528 = vld [vmem:[#allocation3 + $0x240] sm:$0xff]
      %v2529 = vld [vmem:[#allocation3 + $0x248] sm:$0xff]
      %v2530 = vld [vmem:[#allocation3 + $0x250] sm:$0xff]
      %v2531 = vld [vmem:[#allocation3 + $0x258] sm:$0xff]
      %v2532 = vld [vmem:[#allocation3 + $0x260] sm:$0xff]
      %v2533 = vld [vmem:[#allocation3 + $0x268] sm:$0xff]
      %v2534 = vld [vmem:[#allocation3 + $0x270] sm:$0xff]
      %v2535 = vld [vmem:[#allocation3 + $0x278] sm:$0xff]
      %v2536 = vld [vmem:[#allocation3 + $0x280] sm:$0xff]
      %v2537 = vld [vmem:[#allocation3 + $0x288] sm:$0xff]
      %v2538 = vld [vmem:[#allocation3 + $0x290] sm:$0xff]
      %v2539 = vld [vmem:[#allocation3 + $0x298] sm:$0xff]
      %v2540 = vld [vmem:[#allocation3 + $0x2a0] sm:$0xff]
      %v2541 = vld [vmem:[#allocation3 + $0x2a8] sm:$0xff]
      %v2542 = vld [vmem:[#allocation3 + $0x2b0] sm:$0xff]
      %v2543 = vld [vmem:[#allocation3 + $0x2b8] sm:$0xff]
      %v2544 = vld [vmem:[#allocation3 + $0x2c0] sm:$0xff]
      %v2545 = vld [vmem:[#allocation3 + $0x2c8] sm:$0xff]
      %v2546 = vld [vmem:[#allocation3 + $0x2d0] sm:$0xff]
      %v2547 = vld [vmem:[#allocation3 + $0x2d8] sm:$0xff]
      %v2548 = vld [vmem:[#allocation3 + $0x2e0] sm:$0xff]
      %v2549 = vld [vmem:[#allocation3 + $0x2e8] sm:$0xff]
      %v2550 = vld [vmem:[#allocation3 + $0x2f0] sm:$0xff]
      %v2551 = vld [vmem:[#allocation3 + $0x2f8] sm:$0xff]
      %v2552 = vld [vmem:[#allocation3 + $0x300] sm:$0xff]
      %v2553 = vld [vmem:[#allocation3 + $0x308] sm:$0xff]
      %v2554 = vld [vmem:[#allocation3 + $0x310] sm:$0xff]
      %v2555 = vld [vmem:[#allocation3 + $0x318] sm:$0xff]
      %v2556 = vld [vmem:[#allocation3 + $0x320] sm:$0xff]
      %v2557 = vld [vmem:[#allocation3 + $0x328] sm:$0xff]
      %v2558 = vld [vmem:[#allocation3 + $0x330] sm:$0xff]
      %v2559 = vld [vmem:[#allocation3 + $0x338] sm:$0xff]
      %v2560 = vld [vmem:[#allocation3 + $0x340] sm:$0xff]
      %v2561 = vld [vmem:[#allocation3 + $0x348] sm:$0xff]
      %v2562 = vld [vmem:[#allocation3 + $0x350] sm:$0xff]
      %v2563 = vld [vmem:[#allocation3 + $0x358] sm:$0xff]
      %v2564 = vld [vmem:[#allocation3 + $0x360] sm:$0xff]
      %v2565 = vld [vmem:[#allocation3 + $0x368] sm:$0xff]
      %v2566 = vld [vmem:[#allocation3 + $0x370] sm:$0xff]
      %v2567 = vld [vmem:[#allocation3 + $0x378] sm:$0xff]
      %v2568 = vld [vmem:[#allocation3 + $0x380] sm:$0xff]
      %v2569 = vld [vmem:[#allocation3 + $0x388] sm:$0xff]
      %v2570 = vld [vmem:[#allocation3 + $0x390] sm:$0xff]
      %v2571 = vld [vmem:[#allocation3 + $0x398] sm:$0xff]
      %v2572 = vld [vmem:[#allocation3 + $0x3a0] sm:$0xff]
      %v2573 = vld [vmem:[#allocation3 + $0x3a8] sm:$0xff]
      %v2574 = vld [vmem:[#allocation3 + $0x3b0] sm:$0xff]
      %v2575 = vld [vmem:[#allocation3 + $0x3b8] sm:$0xff]
      %v2576 = vld [vmem:[#allocation3 + $0x3c0] sm:$0xff]
      %v2577 = vld [vmem:[#allocation3 + $0x3c8] sm:$0xff]
      %v2578 = vld [vmem:[#allocation3 + $0x3d0] sm:$0xff]
      %v2579 = vld [vmem:[#allocation3 + $0x3d8] sm:$0xff]
      %v2580 = vld [vmem:[#allocation3 + $0x3e0] sm:$0xff]
      %v2581 = vld [vmem:[#allocation3 + $0x3e8] sm:$0xff]
      %v2582 = vld [vmem:[#allocation3 + $0x3f0] sm:$0xff]
      %v2583 = vld [vmem:[#allocation3 + $0x3f8] sm:$0xff]
      %v2584 = vld [vmem:[#allocation3 + $0x400] sm:$0xff]
      %v2585 = vld [vmem:[#allocation3 + $0x408] sm:$0xff]
      %v2586 = vld [vmem:[#allocation3 + $0x410] sm:$0xff]
      %v2587 = vld [vmem:[#allocation3 + $0x418] sm:$0xff]
      %v2588 = vld [vmem:[#allocation3 + $0x420] sm:$0xff]
      %v2589 = vld [vmem:[#allocation3 + $0x428] sm:$0xff]
      %v2590 = vld [vmem:[#allocation3 + $0x430] sm:$0xff]
      %v2591 = vld [vmem:[#allocation3 + $0x438] sm:$0xff]
      %v2592 = vld [vmem:[#allocation3 + $0x440] sm:$0xff]
      %v2593 = vld [vmem:[#allocation3 + $0x448] sm:$0xff]
      %v2594 = vld [vmem:[#allocation3 + $0x450] sm:$0xff]
      %v2595 = vld [vmem:[#allocation3 + $0x458] sm:$0xff]
      %v2596 = vld [vmem:[#allocation3 + $0x460] sm:$0xff]
      %v2597 = vld [vmem:[#allocation3 + $0x468] sm:$0xff]
      %v2598 = vld [vmem:[#allocation3 + $0x470] sm:$0xff]
      %v2599 = vld [vmem:[#allocation3 + $0x478] sm:$0xff]
      %v2600 = vld [vmem:[#allocation3 + $0x480] sm:$0xff]
      %v2601 = vld [vmem:[#allocation3 + $0x488] sm:$0xff]
      %v2602 = vld [vmem:[#allocation3 + $0x490] sm:$0xff]
      %v2603 = vld [vmem:[#allocation3 + $0x498] sm:$0xff]
      %v2604 = vld [vmem:[#allocation3 + $0x4a0] sm:$0xff]
      %v2605 = vld [vmem:[#allocation3 + $0x4a8] sm:$0xff]
      %v2606 = vld [vmem:[#allocation3 + $0x4b0] sm:$0xff]
      %v2607 = vld [vmem:[#allocation3 + $0x4b8] sm:$0xff]
      %v2608 = vld [vmem:[#allocation3 + $0x4c0] sm:$0xff]
      %v2609 = vld [vmem:[#allocation3 + $0x4c8] sm:$0xff]
      %v2610 = vld [vmem:[#allocation3 + $0x4d0] sm:$0xff]
      %v2611 = vld [vmem:[#allocation3 + $0x4d8] sm:$0xff]
      %v2612 = vld [vmem:[#allocation3 + $0x4e0] sm:$0xff]
      %v2613 = vld [vmem:[#allocation3 + $0x4e8] sm:$0xff]
      %v2614 = vld [vmem:[#allocation3 + $0x4f0] sm:$0xff]
      %v2615 = vld [vmem:[#allocation3 + $0x4f8] sm:$0xff]
      %v2616 = vld [vmem:[#allocation3 + $0x500] sm:$0xff]
      %v2617 = vld [vmem:[#allocation3 + $0x508] sm:$0xff]
      %v2618 = vld [vmem:[#allocation3 + $0x510] sm:$0xff]
      %v2619 = vld [vmem:[#allocation3 + $0x518] sm:$0xff]
      %v2620 = vld [vmem:[#allocation3 + $0x520] sm:$0xff]
      %v2621 = vld [vmem:[#allocation3 + $0x528] sm:$0xff]
      %v2622 = vld [vmem:[#allocation3 + $0x530] sm:$0xff]
      %v2623 = vld [vmem:[#allocation3 + $0x538] sm:$0xff]
      %v2624 = vld [vmem:[#allocation3 + $0x540] sm:$0xff]
      %v2625 = vld [vmem:[#allocation3 + $0x548] sm:$0xff]
      %v2626 = vld [vmem:[#allocation3 + $0x550] sm:$0xff]
      %v2627 = vld [vmem:[#allocation3 + $0x558] sm:$0xff]
      %v2628 = vld [vmem:[#allocation3 + $0x560] sm:$0xff]
      %v2629 = vld [vmem:[#allocation3 + $0x568] sm:$0xff]
      %v2630 = vld [vmem:[#allocation3 + $0x570] sm:$0xff]
      %v2631 = vld [vmem:[#allocation3 + $0x578] sm:$0xff]
      %v2632 = vld [vmem:[#allocation3 + $0x580] sm:$0xff]
      %v2633 = vld [vmem:[#allocation3 + $0x588] sm:$0xff]
      %v2634 = vld [vmem:[#allocation3 + $0x590] sm:$0xff]
      %v2635 = vld [vmem:[#allocation3 + $0x598] sm:$0xff]
      %v2636 = vld [vmem:[#allocation3 + $0x5a0] sm:$0xff]
      %v2637 = vld [vmem:[#allocation3 + $0x5a8] sm:$0xff]
      %v2638 = vld [vmem:[#allocation3 + $0x5b0] sm:$0xff]
      %v2639 = vld [vmem:[#allocation3 + $0x5b8] sm:$0xff]
      %v2640 = vld [vmem:[#allocation3 + $0x5c0] sm:$0xff]
      %v2641 = vld [vmem:[#allocation3 + $0x5c8] sm:$0xff]
      %v2642 = vld [vmem:[#allocation3 + $0x5d0] sm:$0xff]
      %v2643 = vld [vmem:[#allocation3 + $0x5d8] sm:$0xff]
      %v2644 = vld [vmem:[#allocation3 + $0x5e0] sm:$0xff]
      %v2645 = vld [vmem:[#allocation3 + $0x5e8] sm:$0xff]
      %v2646 = vld [vmem:[#allocation3 + $0x5f0] sm:$0xff]
      %v2647 = vld [vmem:[#allocation3 + $0x5f8] sm:$0xff]
      %v2648 = vld [vmem:[#allocation3 + $0x600] sm:$0xff]
      %v2649 = vld [vmem:[#allocation3 + $0x608] sm:$0xff]
      %v2650 = vld [vmem:[#allocation3 + $0x610] sm:$0xff]
      %v2651 = vld [vmem:[#allocation3 + $0x618] sm:$0xff]
      %v2652 = vld [vmem:[#allocation3 + $0x620] sm:$0xff]
      %v2653 = vld [vmem:[#allocation3 + $0x628] sm:$0xff]
      %v2654 = vld [vmem:[#allocation3 + $0x630] sm:$0xff]
      %v2655 = vld [vmem:[#allocation3 + $0x638] sm:$0xff]
      %v2656 = vld [vmem:[#allocation3 + $0x640] sm:$0xff]
      %v2657 = vld [vmem:[#allocation3 + $0x648] sm:$0xff]
      %v2658 = vld [vmem:[#allocation3 + $0x650] sm:$0xff]
      %v2659 = vld [vmem:[#allocation3 + $0x658] sm:$0xff]
      %v2660 = vld [vmem:[#allocation3 + $0x660] sm:$0xff]
      %v2661 = vld [vmem:[#allocation3 + $0x668] sm:$0xff]
      %v2662 = vld [vmem:[#allocation3 + $0x670] sm:$0xff]
      %v2663 = vld [vmem:[#allocation3 + $0x678] sm:$0xff]
      %v2664 = vld [vmem:[#allocation3 + $0x680] sm:$0xff]
      %v2665 = vld [vmem:[#allocation3 + $0x688] sm:$0xff]
      %v2666 = vld [vmem:[#allocation3 + $0x690] sm:$0xff]
      %v2667 = vld [vmem:[#allocation3 + $0x698] sm:$0xff]
      %v2668 = vld [vmem:[#allocation3 + $0x6a0] sm:$0xff]
      %v2669 = vld [vmem:[#allocation3 + $0x6a8] sm:$0xff]
      %v2670 = vld [vmem:[#allocation3 + $0x6b0] sm:$0xff]
      %v2671 = vld [vmem:[#allocation3 + $0x6b8] sm:$0xff]
      %v2672 = vld [vmem:[%s4] sm:$0xff]
      %2674 = vset.pattern.permute.xlu0 0
      %2675 = vperm.xlu0 %2674, %v2672
      %v2676 = vpop.permute.xlu0 %2675
      %v2679 = vsel %vm1410, %v2455, 0
      %2681 = vmatpush.msra.mxu0 %v2576
      %2682 = vmatpush.msra.mxu0 %v2568
      %2683 = vmatpush.msra.mxu0 %v2560
      %2684 = vmatpush.msra.mxu0 %v2552
      %2685 = vmatpush.msra.mxu0 %v2544
      %2686 = vmatpush.msra.mxu0 %v2536
      %2687 = vmatpush.msra.mxu0 %v2528
      %2688 = vmatpush.msra.mxu0 %v2520
      %2689 = vmatpush.msra.mxu0 %v2512
      %2690 = vmatpush.msra.mxu0 %v2504
      %2691 = vmatpush.msra.mxu0 %v2496
      %2692 = vmatpush.msra.mxu0 %v2488
      %2693 = vmatpush.msra.mxu0 %v2480
      %2694 = vmatpush.msra.mxu0 %v2472
      %2695 = vmatpush.msra.mxu0 %v2464
      %2696 = vmatpush.msra.mxu0 %v2456
      %2697 = vmatmul.f32.gmra.mxu0 %v2454
      %v2698 = vpop.f32.mrf.mxu0
      %v2699 = vadd.f32 %v2676, %v2698
      %2700 = vdwg.mxu0
      %2701 = vmatpush.msra.mxu0 0.0
      %2702 = vmatpush.msra.mxu0 0.0
      %2703 = vmatpush.msra.mxu0 0.0
      %2704 = vmatpush.msra.mxu0 0.0
      %2705 = vmatpush.msra.mxu0 0.0
      %2706 = vmatpush.msra.mxu0 %v2664
      %2707 = vmatpush.msra.mxu0 %v2656
      %2708 = vmatpush.msra.mxu0 %v2648
      %2709 = vmatpush.msra.mxu0 %v2640
      %2710 = vmatpush.msra.mxu0 %v2632
      %2711 = vmatpush.msra.mxu0 %v2624
      %2712 = vmatpush.msra.mxu0 %v2616
      %2713 = vmatpush.msra.mxu0 %v2608
      %2714 = vmatpush.msra.mxu0 %v2600
      %2715 = vmatpush.msra.mxu0 %v2592
      %2716 = vmatpush.msra.mxu0 %v2584
      %2717 = vmatmul.f32.gmra.mxu0 %v2679
      %v2718 = vpop.f32.mrf.mxu0
      %v2719 = vadd.f32 %v2699, %v2718
      %2720 = vdwg.mxu0
      %2721 = vmatpush.msra.mxu0 %v2577
      %2722 = vmatpush.msra.mxu0 %v2569
      %2723 = vmatpush.msra.mxu0 %v2561
      %2724 = vmatpush.msra.mxu0 %v2553
      %2725 = vmatpush.msra.mxu0 %v2545
      %2726 = vmatpush.msra.mxu0 %v2537
      %2727 = vmatpush.msra.mxu0 %v2529
      %2728 = vmatpush.msra.mxu0 %v2521
      %2729 = vmatpush.msra.mxu0 %v2513
      %2730 = vmatpush.msra.mxu0 %v2505
      %2731 = vmatpush.msra.mxu0 %v2497
      %2732 = vmatpush.msra.mxu0 %v2489
      %2733 = vmatpush.msra.mxu0 %v2481
      %2734 = vmatpush.msra.mxu0 %v2473
      %2735 = vmatpush.msra.mxu0 %v2465
      %2736 = vmatpush.msra.mxu0 %v2457
      %2737 = vmatmul.f32.gmra.mxu0 %v2454
      %v2738 = vpop.f32.mrf.mxu0
      %v2739 = vadd.f32 %v2676, %v2738
      %2740 = vdwg.mxu0
      %2741 = vmatpush.msra.mxu0 0.0
      %2742 = vmatpush.msra.mxu0 0.0
      %2743 = vmatpush.msra.mxu0 0.0
      %2744 = vmatpush.msra.mxu0 0.0
      %2745 = vmatpush.msra.mxu0 0.0
      %2746 = vmatpush.msra.mxu0 %v2665
      %2747 = vmatpush.msra.mxu0 %v2657
      %2748 = vmatpush.msra.mxu0 %v2649
      %2749 = vmatpush.msra.mxu0 %v2641
      %2750 = vmatpush.msra.mxu0 %v2633
      %2751 = vmatpush.msra.mxu0 %v2625
      %2752 = vmatpush.msra.mxu0 %v2617
      %2753 = vmatpush.msra.mxu0 %v2609
      %2754 = vmatpush.msra.mxu0 %v2601
      %2755 = vmatpush.msra.mxu0 %v2593
      %2756 = vmatpush.msra.mxu0 %v2585
      %2757 = vmatmul.f32.gmra.mxu0 %v2679
      %v2758 = vpop.f32.mrf.mxu0
      %v2759 = vadd.f32 %v2739, %v2758
      %2760 = vdwg.mxu0
      %2761 = vmatpush.msra.mxu0 %v2578
      %2762 = vmatpush.msra.mxu0 %v2570
      %2763 = vmatpush.msra.mxu0 %v2562
      %2764 = vmatpush.msra.mxu0 %v2554
      %2765 = vmatpush.msra.mxu0 %v2546
      %2766 = vmatpush.msra.mxu0 %v2538
      %2767 = vmatpush.msra.mxu0 %v2530
      %2768 = vmatpush.msra.mxu0 %v2522
      %2769 = vmatpush.msra.mxu0 %v2514
      %2770 = vmatpush.msra.mxu0 %v2506
      %2771 = vmatpush.msra.mxu0 %v2498
      %2772 = vmatpush.msra.mxu0 %v2490
      %2773 = vmatpush.msra.mxu0 %v2482
      %2774 = vmatpush.msra.mxu0 %v2474
      %2775 = vmatpush.msra.mxu0 %v2466
      %2776 = vmatpush.msra.mxu0 %v2458
      %2777 = vmatmul.f32.gmra.mxu0 %v2454
      %v2778 = vpop.f32.mrf.mxu0
      %v2779 = vadd.f32 %v2676, %v2778
      %2780 = vdwg.mxu0
      %2781 = vmatpush.msra.mxu0 0.0
      %2782 = vmatpush.msra.mxu0 0.0
      %2783 = vmatpush.msra.mxu0 0.0
      %2784 = vmatpush.msra.mxu0 0.0
      %2785 = vmatpush.msra.mxu0 0.0
      %2786 = vmatpush.msra.mxu0 %v2666
      %2787 = vmatpush.msra.mxu0 %v2658
      %2788 = vmatpush.msra.mxu0 %v2650
      %2789 = vmatpush.msra.mxu0 %v2642
      %2790 = vmatpush.msra.mxu0 %v2634
      %2791 = vmatpush.msra.mxu0 %v2626
      %2792 = vmatpush.msra.mxu0 %v2618
      %2793 = vmatpush.msra.mxu0 %v2610
      %2794 = vmatpush.msra.mxu0 %v2602
      %2795 = vmatpush.msra.mxu0 %v2594
      %2796 = vmatpush.msra.mxu0 %v2586
      %2797 = vmatmul.f32.gmra.mxu0 %v2679
      %v2798 = vpop.f32.mrf.mxu0
      %v2799 = vadd.f32 %v2779, %v2798
      %2800 = vdwg.mxu0
      %2801 = vmatpush.msra.mxu0 %v2579
      %2802 = vmatpush.msra.mxu0 %v2571
      %2803 = vmatpush.msra.mxu0 %v2563
      %2804 = vmatpush.msra.mxu0 %v2555
      %2805 = vmatpush.msra.mxu0 %v2547
      %2806 = vmatpush.msra.mxu0 %v2539
      %2807 = vmatpush.msra.mxu0 %v2531
      %2808 = vmatpush.msra.mxu0 %v2523
      %2809 = vmatpush.msra.mxu0 %v2515
      %2810 = vmatpush.msra.mxu0 %v2507
      %2811 = vmatpush.msra.mxu0 %v2499
      %2812 = vmatpush.msra.mxu0 %v2491
      %2813 = vmatpush.msra.mxu0 %v2483
      %2814 = vmatpush.msra.mxu0 %v2475
      %2815 = vmatpush.msra.mxu0 %v2467
      %2816 = vmatpush.msra.mxu0 %v2459
      %2817 = vmatmul.f32.gmra.mxu0 %v2454
      %v2818 = vpop.f32.mrf.mxu0
      %v2819 = vadd.f32 %v2676, %v2818
      %2820 = vdwg.mxu0
      %2821 = vmatpush.msra.mxu0 0.0
      %2822 = vmatpush.msra.mxu0 0.0
      %2823 = vmatpush.msra.mxu0 0.0
      %2824 = vmatpush.msra.mxu0 0.0
      %2825 = vmatpush.msra.mxu0 0.0
      %2826 = vmatpush.msra.mxu0 %v2667
      %2827 = vmatpush.msra.mxu0 %v2659
      %2828 = vmatpush.msra.mxu0 %v2651
      %2829 = vmatpush.msra.mxu0 %v2643
      %2830 = vmatpush.msra.mxu0 %v2635
      %2831 = vmatpush.msra.mxu0 %v2627
      %2832 = vmatpush.msra.mxu0 %v2619
      %2833 = vmatpush.msra.mxu0 %v2611
      %2834 = vmatpush.msra.mxu0 %v2603
      %2835 = vmatpush.msra.mxu0 %v2595
      %2836 = vmatpush.msra.mxu0 %v2587
      %2837 = vmatmul.f32.gmra.mxu0 %v2679
      %v2838 = vpop.f32.mrf.mxu0
      %v2839 = vadd.f32 %v2819, %v2838
      %2840 = vdwg.mxu0
      %2841 = vmatpush.msra.mxu0 %v2580
      %2842 = vmatpush.msra.mxu0 %v2572
      %2843 = vmatpush.msra.mxu0 %v2564
      %2844 = vmatpush.msra.mxu0 %v2556
      %2845 = vmatpush.msra.mxu0 %v2548
      %2846 = vmatpush.msra.mxu0 %v2540
      %2847 = vmatpush.msra.mxu0 %v2532
      %2848 = vmatpush.msra.mxu0 %v2524
      %2849 = vmatpush.msra.mxu0 %v2516
      %2850 = vmatpush.msra.mxu0 %v2508
      %2851 = vmatpush.msra.mxu0 %v2500
      %2852 = vmatpush.msra.mxu0 %v2492
      %2853 = vmatpush.msra.mxu0 %v2484
      %2854 = vmatpush.msra.mxu0 %v2476
      %2855 = vmatpush.msra.mxu0 %v2468
      %2856 = vmatpush.msra.mxu0 %v2460
      %2857 = vmatmul.f32.gmra.mxu0 %v2454
      %v2858 = vpop.f32.mrf.mxu0
      %v2859 = vadd.f32 %v2676, %v2858
      %2860 = vdwg.mxu0
      %2861 = vmatpush.msra.mxu0 0.0
      %2862 = vmatpush.msra.mxu0 0.0
      %2863 = vmatpush.msra.mxu0 0.0
      %2864 = vmatpush.msra.mxu0 0.0
      %2865 = vmatpush.msra.mxu0 0.0
      %2866 = vmatpush.msra.mxu0 %v2668
      %2867 = vmatpush.msra.mxu0 %v2660
      %2868 = vmatpush.msra.mxu0 %v2652
      %2869 = vmatpush.msra.mxu0 %v2644
      %2870 = vmatpush.msra.mxu0 %v2636
      %2871 = vmatpush.msra.mxu0 %v2628
      %2872 = vmatpush.msra.mxu0 %v2620
      %2873 = vmatpush.msra.mxu0 %v2612
      %2874 = vmatpush.msra.mxu0 %v2604
      %2875 = vmatpush.msra.mxu0 %v2596
      %2876 = vmatpush.msra.mxu0 %v2588
      %2877 = vmatmul.f32.gmra.mxu0 %v2679
      %v2878 = vpop.f32.mrf.mxu0
      %v2879 = vadd.f32 %v2859, %v2878
      %2880 = vdwg.mxu0
      %2881 = vmatpush.msra.mxu0 %v2581
      %2882 = vmatpush.msra.mxu0 %v2573
      %2883 = vmatpush.msra.mxu0 %v2565
      %2884 = vmatpush.msra.mxu0 %v2557
      %2885 = vmatpush.msra.mxu0 %v2549
      %2886 = vmatpush.msra.mxu0 %v2541
      %2887 = vmatpush.msra.mxu0 %v2533
      %2888 = vmatpush.msra.mxu0 %v2525
      %2889 = vmatpush.msra.mxu0 %v2517
      %2890 = vmatpush.msra.mxu0 %v2509
      %2891 = vmatpush.msra.mxu0 %v2501
      %2892 = vmatpush.msra.mxu0 %v2493
      %2893 = vmatpush.msra.mxu0 %v2485
      %2894 = vmatpush.msra.mxu0 %v2477
      %2895 = vmatpush.msra.mxu0 %v2469
      %2896 = vmatpush.msra.mxu0 %v2461
      %2897 = vmatmul.f32.gmra.mxu0 %v2454
      %v2898 = vpop.f32.mrf.mxu0
      %v2899 = vadd.f32 %v2676, %v2898
      %2900 = vdwg.mxu0
      %2901 = vmatpush.msra.mxu0 0.0
      %2902 = vmatpush.msra.mxu0 0.0
      %2903 = vmatpush.msra.mxu0 0.0
      %2904 = vmatpush.msra.mxu0 0.0
      %2905 = vmatpush.msra.mxu0 0.0
      %2906 = vmatpush.msra.mxu0 %v2669
      %2907 = vmatpush.msra.mxu0 %v2661
      %2908 = vmatpush.msra.mxu0 %v2653
      %2909 = vmatpush.msra.mxu0 %v2645
      %2910 = vmatpush.msra.mxu0 %v2637
      %2911 = vmatpush.msra.mxu0 %v2629
      %2912 = vmatpush.msra.mxu0 %v2621
      %2913 = vmatpush.msra.mxu0 %v2613
      %2914 = vmatpush.msra.mxu0 %v2605
      %2915 = vmatpush.msra.mxu0 %v2597
      %2916 = vmatpush.msra.mxu0 %v2589
      %2917 = vmatmul.f32.gmra.mxu0 %v2679
      %v2918 = vpop.f32.mrf.mxu0
      %v2919 = vadd.f32 %v2899, %v2918
      %2920 = vdwg.mxu0
      %2921 = vmatpush.msra.mxu0 %v2582
      %2922 = vmatpush.msra.mxu0 %v2574
      %2923 = vmatpush.msra.mxu0 %v2566
      %2924 = vmatpush.msra.mxu0 %v2558
      %2925 = vmatpush.msra.mxu0 %v2550
      %2926 = vmatpush.msra.mxu0 %v2542
      %2927 = vmatpush.msra.mxu0 %v2534
      %2928 = vmatpush.msra.mxu0 %v2526
      %2929 = vmatpush.msra.mxu0 %v2518
      %2930 = vmatpush.msra.mxu0 %v2510
      %2931 = vmatpush.msra.mxu0 %v2502
      %2932 = vmatpush.msra.mxu0 %v2494
      %2933 = vmatpush.msra.mxu0 %v2486
      %2934 = vmatpush.msra.mxu0 %v2478
      %2935 = vmatpush.msra.mxu0 %v2470
      %2936 = vmatpush.msra.mxu0 %v2462
      %2937 = vmatmul.f32.gmra.mxu0 %v2454
      %v2938 = vpop.f32.mrf.mxu0
      %v2939 = vadd.f32 %v2676, %v2938
      %2940 = vdwg.mxu0
      %2941 = vmatpush.msra.mxu0 0.0
      %2942 = vmatpush.msra.mxu0 0.0
      %2943 = vmatpush.msra.mxu0 0.0
      %2944 = vmatpush.msra.mxu0 0.0
      %2945 = vmatpush.msra.mxu0 0.0
      %2946 = vmatpush.msra.mxu0 %v2670
      %2947 = vmatpush.msra.mxu0 %v2662
      %2948 = vmatpush.msra.mxu0 %v2654
      %2949 = vmatpush.msra.mxu0 %v2646
      %2950 = vmatpush.msra.mxu0 %v2638
      %2951 = vmatpush.msra.mxu0 %v2630
      %2952 = vmatpush.msra.mxu0 %v2622
      %2953 = vmatpush.msra.mxu0 %v2614
      %2954 = vmatpush.msra.mxu0 %v2606
      %2955 = vmatpush.msra.mxu0 %v2598
      %2956 = vmatpush.msra.mxu0 %v2590
      %2957 = vmatmul.f32.gmra.mxu0 %v2679
      %v2958 = vpop.f32.mrf.mxu0
      %v2959 = vadd.f32 %v2939, %v2958
      %2960 = vdwg.mxu0
      %2961 = vmatpush.msra.mxu0 %v2583
      %2962 = vmatpush.msra.mxu0 %v2575
      %2963 = vmatpush.msra.mxu0 %v2567
      %2964 = vmatpush.msra.mxu0 %v2559
      %2965 = vmatpush.msra.mxu0 %v2551
      %2966 = vmatpush.msra.mxu0 %v2543
      %2967 = vmatpush.msra.mxu0 %v2535
      %2968 = vmatpush.msra.mxu0 %v2527
      %2969 = vmatpush.msra.mxu0 %v2519
      %2970 = vmatpush.msra.mxu0 %v2511
      %2971 = vmatpush.msra.mxu0 %v2503
      %2972 = vmatpush.msra.mxu0 %v2495
      %2973 = vmatpush.msra.mxu0 %v2487
      %2974 = vmatpush.msra.mxu0 %v2479
      %2975 = vmatpush.msra.mxu0 %v2471
      %2976 = vmatpush.msra.mxu0 %v2463
      %2977 = vmatmul.f32.gmra.mxu0 %v2454
      %v2978 = vpop.f32.mrf.mxu0
      %v2979 = vadd.f32 %v2676, %v2978
      %2980 = vdwg.mxu0
      %2981 = vmatpush.msra.mxu0 0.0
      %2982 = vmatpush.msra.mxu0 0.0
      %2983 = vmatpush.msra.mxu0 0.0
      %2984 = vmatpush.msra.mxu0 0.0
      %2985 = vmatpush.msra.mxu0 0.0
      %2986 = vmatpush.msra.mxu0 %v2671
      %2987 = vmatpush.msra.mxu0 %v2663
      %2988 = vmatpush.msra.mxu0 %v2655
      %2989 = vmatpush.msra.mxu0 %v2647
      %2990 = vmatpush.msra.mxu0 %v2639
      %2991 = vmatpush.msra.mxu0 %v2631
      %2992 = vmatpush.msra.mxu0 %v2623
      %2993 = vmatpush.msra.mxu0 %v2615
      %2994 = vmatpush.msra.mxu0 %v2607
      %2995 = vmatpush.msra.mxu0 %v2599
      %2996 = vmatpush.msra.mxu0 %v2591
      %2997 = vmatmul.f32.gmra.mxu0 %v2679
      %v2998 = vpop.f32.mrf.mxu0
      %v2999 = vadd.f32 %v2979, %v2998
      %3000 = vdwg.mxu0
      %v3001 = vld [vmem:[%s219] sm:$0xff]
      %v3002 = vld [vmem:[%s219 + $0x8] sm:$0xff]
      %v3003 = vld [vmem:[%s219 + $0x10] sm:$0xff]
      %v3004 = vld [vmem:[%s219 + $0x18] sm:$0xff]
      %v3005 = vld [vmem:[%s219 + $0x20] sm:$0xff]
      %v3006 = vld [vmem:[%s219 + $0x28] sm:$0xff]
      %v3007 = vld [vmem:[%s219 + $0x30] sm:$0xff]
      %v3008 = vld [vmem:[%s219 + $0x38] sm:$0xff]
      %v3009 = vadd.f32 %v2719, %v3001
      %v3010 = vadd.f32 %v2759, %v3002
      %v3011 = vadd.f32 %v2799, %v3003
      %v3012 = vadd.f32 %v2839, %v3004
      %v3013 = vadd.f32 %v2879, %v3005
      %v3014 = vadd.f32 %v2919, %v3006
      %v3015 = vadd.f32 %v2959, %v3007
      %v3016 = vadd.f32 %v2999, %v3008
      %v3017 = vmax.f32 %v3009, 0.0
      %v3018 = vmax.f32 %v3010, 0.0
      %v3019 = vmax.f32 %v3011, 0.0
      %v3020 = vmax.f32 %v3012, 0.0
      %v3021 = vmax.f32 %v3013, 0.0
      %v3022 = vmax.f32 %v3014, 0.0
      %v3023 = vmax.f32 %v3015, 0.0
      %v3024 = vmax.f32 %v3016, 0.0
      %3025 = vst [vmem:[%s224] sm:$0xff] %v3017
      %3026 = vst [vmem:[%s224 + $0x8] sm:$0xff] %v3018
      %3027 = vst [vmem:[%s224 + $0x10] sm:$0xff] %v3019
      %3028 = vst [vmem:[%s224 + $0x18] sm:$0xff] %v3020
      %3029 = vst [vmem:[%s224 + $0x20] sm:$0xff] %v3021
      %3030 = vst [vmem:[%s224 + $0x28] sm:$0xff] %v3022
      %3031 = vst [vmem:[%s224 + $0x30] sm:$0xff] %v3023
      %3032 = vst [vmem:[%s224 + $0x38] sm:$0xff] %v3024
      %p3033 = scmp.lt.s32.totalorder %s16, 1
      %s3034 = scalar_select %p3033, %s16, 1
      %s3035 = smul.addr %s3034, 8
      %s3036 = smul.addr %s3035, 8
      %s3037 = scalar_lea.vmem %s5, %s3036
      // Predicated region
      $region41: #{basic_block_3d_forward.1} parent=39 // pred_check
        %p3038 = pneg %p144
      $region42: #{basic_block_3d_forward.1} parent=39 // pred_check_branch
        %3040 = sbr.rel (%p3038) target = $region44
      $region43: #{basic_block_3d_forward.1} parent=39 // pred_region
        _
      $region44: #{basic_block_3d_forward.1} parent=39 // pred_fallthru
        _
    $region40: #{basic_block_3d_forward.1} parent=5 // pred_fallthru
      _
    %p3041 = scmp.le.s32.totalorder 2, %s11
    // Predicated region
    $region45: #{basic_block_3d_forward.1} parent=5 // pred_check
      %p3042 = pneg %p3041
    $region46: #{basic_block_3d_forward.1} parent=5 // pred_check_branch
      %3044 = sbr.rel (%p3042) target = $region48
    $region47: #{basic_block_3d_forward.1} parent=5 // pred_region
      %s3045 = ssub.s32 %s11, 2
      // Predicated region
      $region49: #{basic_block_3d_forward.1} parent=47 // pred_check
        %p3046 = pneg %p150
      $region50: #{basic_block_3d_forward.1} parent=47 // pred_check_branch
        %3048 = sbr.rel (%p3046) target = $region52
      $region51: #{basic_block_3d_forward.1} parent=47 // pred_region
        %p3049 = scmp.lt.s32.totalorder %s17, 1
        %s3050 = scalar_select %p3049, %s17, 1
        %s3051 = smul.addr %s3050, 8
        %s3052 = smul.addr %s3051, 8
        %s3053 = scalar_lea.vmem %s5, %s3052
      $region52: #{basic_block_3d_forward.1} parent=47 // pred_fallthru
        _
    $region48: #{basic_block_3d_forward.1} parent=5 // pred_fallthru
      _
  $region6: #{basic_block_3d_forward.1} parent=0 // loop_footer
    %s15 = sadd.s32 1, %s11
  $region7: #{basic_block_3d_forward.1} parent=0 // loop_footer_branch
    %10 = sbr.rel target = $region3
  $region8: #{basic_block_3d_forward.1} parent=0 // loop_exit
    _

</llo_original>
